<compile_context>
chip_gen: v7x
topology: tpu7x:2x2x1
jax: 0.10.0
libtpu: 0.0.40
codegen_flags: <defaults>
</compile_context>

<pallas_src>
import functools

import jax
import jax.numpy as jnp
from jax.experimental import pallas as pl
from jax.experimental.pallas import tpu as pltpu


# Tiling targets (MXU/(8,128)-friendly).  Tiles fall back to full extents when the
# dimension is small or has no aligned divisor, which keeps boundary blocks exact.
TM_TARGET = 512    # rows per tile          (align 8,   sublane)
TN_TARGET = 256    # output cols per tile   (align 128, lane)
TK_TARGET = 512    # contraction per tile   (align 128, lane)
TQ_TARGET = 256    # attention query tile
MATMUL_DTYPE = jnp.bfloat16   # MXU-input / activation-stream dtype; accumulation f32


def _tile(dim, target, align):
    """Largest `align`-multiple divisor of `dim` that is <= target, else full dim."""
    if dim <= target:
        return dim
    t = (target // align) * align
    while t >= align:
        if dim % t == 0:
            return t
        t -= align
    return dim


def _round_up(x, m):
    return ((x + m - 1) // m) * m


# ---------------------------------------------------------------------------
# Fused linear kernel:  [optional LN(x)] @ W + b  [-> GELU]  [+ residual]
# ---------------------------------------------------------------------------

def _make_linear_kernel(has_ln, has_res, activation, nk, eps):
    def kernel(*refs):
        pos = 0
        x_ref = refs[pos]; pos += 1
        w_ref = refs[pos]; pos += 1
        b_ref = refs[pos]; pos += 1
        if has_ln:
            g_ref, beta_ref = refs[pos], refs[pos + 1]; pos += 2
        if has_res:
            r_ref = refs[pos]; pos += 1
        o_ref = refs[pos]; pos += 1
        if has_ln:
            xln_ref = refs[pos]; pos += 1        # (tm, K) bf16 scratch
        if nk > 1:
            acc_ref = refs[pos]; pos += 1        # (tm, tn) f32 scratch

        def epilogue(y):                         # y: f32 (tm, tn), bias included
            if activation == "gelu":
                # TODO(synk): PyTorch nn.GELU default is erf-exact; tanh approximation
                # used for guaranteed Mosaic lowering (~1e-3 numerical difference).
                y = 0.5 * y * (1.0 + jnp.tanh(0.7978845608028654 *
                                              (y + 0.044715 * y * y * y)))
            if has_res:
                y = y + r_ref[...].astype(jnp.float32)   # residual add in f32
            o_ref[...] = y.astype(o_ref.dtype)

        if has_ln:
            # nk == 1 enforced by wrapper (LN needs the full row).  The LN'd tile is
            # computed once per row block (j == 0) and cached for all output tiles.
            @pl.when(pl.program_id(1) == 0)
            def _():
                x = x_ref[...].astype(jnp.float32)
                mu = jnp.mean(x, axis=-1, keepdims=True)
                var = jnp.mean(jnp.square(x - mu), axis=-1, keepdims=True)
                xn = (x - mu) * jax.lax.rsqrt(var + eps) * g_ref[...] + beta_ref[...]
                xln_ref[...] = xn.astype(xln_ref.dtype)
            y = jnp.dot(xln_ref[...], w_ref[...],
                        preferred_element_type=jnp.float32) + b_ref[...]
            epilogue(y)
        elif nk == 1:
            # No K-reduction loop: skip the VMEM accumulator round trip entirely.
            y = jnp.dot(x_ref[...].astype(MATMUL_DTYPE), w_ref[...],
                        preferred_element_type=jnp.float32) + b_ref[...]
            epilogue(y)
        else:
            k = pl.program_id(2)

            @pl.when(k == 0)
            def _():
                acc_ref[...] = jnp.zeros_like(acc_ref)

            acc_ref[...] += jnp.dot(x_ref[...].astype(MATMUL_DTYPE), w_ref[...],
                                    preferred_element_type=jnp.float32)

            @pl.when(k == nk - 1)
            def _():
                epilogue(acc_ref[...] + b_ref[...])

    return kernel


def fused_linear(x, w, b, *, gamma=None, beta=None, residual=None,
                 activation=None, eps=1e-6, out_dtype=MATMUL_DTYPE):
    """x:(M,K) @ w:(K,N) + b, with optional fused LN prologue / GELU / residual."""
    M, K = x.shape
    N = w.shape[1]
    has_ln = gamma is not None
    has_res = residual is not None

    tm = _tile(M, TM_TARGET, 8)
    tn = _tile(N, TN_TARGET, 128)
    tk = K if has_ln else _tile(K, TK_TARGET, 128)   # LN needs the whole row
    nm, nn_, nk = M // tm, N // tn, K // tk

    kernel = _make_linear_kernel(has_ln, has_res, activation, nk, eps)

    in_specs = [
        pl.BlockSpec((tm, tk), lambda i, j, k: (i, k)),
        pl.BlockSpec((tk, tn), lambda i, j, k: (k, j)),
        pl.BlockSpec((1, tn), lambda i, j, k: (0, j)),
    ]
    inputs = [x, w, b.reshape(1, N)]
    if has_ln:
        in_specs += [pl.BlockSpec((1, tk), lambda i, j, k: (0, k)),
                     pl.BlockSpec((1, tk), lambda i, j, k: (0, k))]
        inputs += [gamma.reshape(1, K), beta.reshape(1, K)]
    if has_res:
        in_specs.append(pl.BlockSpec((tm, tn), lambda i, j, k: (i, j)))
        inputs.append(residual)

    scratch = []
    if has_ln:
        scratch.append(pltpu.VMEM((tm, tk), MATMUL_DTYPE))   # cached LN'd row tile
    if nk > 1:
        scratch.append(pltpu.VMEM((tm, tn), jnp.float32))    # f32 accumulator

    # With the LN cache the j axis must run sequentially from 0 on each core, so it
    # is marked "arbitrary" in that case; the row axis stays parallel for megacore.
    dims = (("parallel", "arbitrary", "arbitrary") if has_ln
            else ("parallel", "parallel", "arbitrary"))

    return pl.pallas_call(
        kernel,
        out_shape=jax.ShapeDtypeStruct((M, N), out_dtype),
        grid=(nm, nn_, nk),
        in_specs=in_specs,
        out_specs=pl.BlockSpec((tm, tn), lambda i, j, k: (i, j)),
        scratch_shapes=scratch,
        compiler_params=pltpu.CompilerParams(dimension_semantics=dims),
    )(*inputs)


# ---------------------------------------------------------------------------
# Attention: grid over (batch, head group, query tile), lane-aligned head groups
# ---------------------------------------------------------------------------

def _attention_kernel(q_ref, k_ref, v_ref, o_ref, *, heads_per_group, head_dim,
                      scale, s_real, compute_dtype):
    q_all = q_ref[0]          # (tq, gw)     bf16
    k_all = k_ref[0]          # (S_pad, gw)  bf16
    v_all = v_ref[0]
    s_pad = k_all.shape[0]

    kmask = None
    if s_real < s_pad:
        kmask = jax.lax.broadcasted_iota(jnp.int32, (1, s_pad), 1) < s_real

    outs = []
    for h in range(heads_per_group):
        lo, hi = h * head_dim, (h + 1) * head_dim
        q = q_all[:, lo:hi].astype(compute_dtype)
        k = k_all[:, lo:hi].astype(compute_dtype)
        v = v_all[:, lo:hi].astype(compute_dtype)
        s = jax.lax.dot_general(q, k, (((1,), (1,)), ((), ())),
                                preferred_element_type=jnp.float32) * scale
        if kmask is not None:
            s = jnp.where(kmask, s, -1e30)
        s = s - jnp.max(s, axis=-1, keepdims=True)
        p = jnp.exp(s)
        p = p * pl.reciprocal(jnp.sum(p, axis=-1, keepdims=True), approx=True)
        outs.append(jnp.dot(p.astype(compute_dtype), v,
                            preferred_element_type=jnp.float32))
    out = outs[0] if len(outs) == 1 else jnp.concatenate(outs, axis=-1)
    o_ref[0] = out.astype(o_ref.dtype)          # lane-dense (tq, gw) store


def fused_attention(qkv, num_heads, scale, s_real):
    """qkv: (B, S_pad, 3D) bf16 -> attention output (B, S_pad, D) bf16."""
    B, S_pad, threeD = qkv.shape
    D = threeD // 3
    head_dim = D // num_heads

    # Group heads so the group width is a 128-lane multiple when possible.
    gh = num_heads
    if D % 128 == 0:
        for cand in range(1, num_heads + 1):
            if num_heads % cand == 0 and (cand * head_dim) % 128 == 0:
                gh = cand
                break
    gw = gh * head_dim
    G = num_heads // gh

    tq = _tile(S_pad, TQ_TARGET, 8)
    nq = S_pad // tq

    kern = functools.partial(_attention_kernel, heads_per_group=gh,
                             head_dim=head_dim, scale=scale, s_real=s_real,
                             compute_dtype=MATMUL_DTYPE)

    if D % 128 == 0:
        # Slice Q/K/V head-group blocks straight out of the fused qkv activation
        # (three BlockSpecs on the same array -> no copies, all 128-lane aligned).
        col_blocks = D // gw
        in_specs = [
            pl.BlockSpec((1, tq, gw), lambda b, g, qi: (b, qi, g)),
            pl.BlockSpec((1, S_pad, gw), lambda b, g, qi: (b, 0, col_blocks + g)),
            pl.BlockSpec((1, S_pad, gw), lambda b, g, qi: (b, 0, 2 * col_blocks + g)),
        ]
        inputs = (qkv, qkv, qkv)
    else:
        # Small / unaligned model dims: split once in XLA so blocks equal full dims.
        q, k, v = qkv[:, :, :D], qkv[:, :, D:2 * D], qkv[:, :, 2 * D:]
        in_specs = [
            pl.BlockSpec((1, tq, gw), lambda b, g, qi: (b, qi, g)),
            pl.BlockSpec((1, S_pad, gw), lambda b, g, qi: (b, 0, g)),
            pl.BlockSpec((1, S_pad, gw), lambda b, g, qi: (b, 0, g)),
        ]
        inputs = (q, k, v)

    return pl.pallas_call(
        kern,
        out_shape=jax.ShapeDtypeStruct((B, S_pad, D), MATMUL_DTYPE),
        grid=(B, G, nq),
        in_specs=in_specs,
        out_specs=pl.BlockSpec((1, tq, gw), lambda b, g, qi: (b, qi, g)),
        compiler_params=pltpu.CompilerParams(
            dimension_semantics=("parallel", "parallel", "parallel")),
    )(*inputs)


# ---------------------------------------------------------------------------
# Fused head: final LN (on CLS rows) + feature linear + classifier linear
# ---------------------------------------------------------------------------

def _head_kernel(cls_ref, g_ref, bt_ref, fw_ref, fb_ref, cw_ref, cb_ref,
                 feat_ref, logit_ref, *, eps, compute_dtype):
    x = cls_ref[...].astype(jnp.float32)
    mu = jnp.mean(x, axis=-1, keepdims=True)
    var = jnp.mean(jnp.square(x - mu), axis=-1, keepdims=True)
    n = (x - mu) * jax.lax.rsqrt(var + eps) * g_ref[...] + bt_ref[...]
    f = jnp.dot(n.astype(compute_dtype), fw_ref[...],
                preferred_element_type=jnp.float32) + fb_ref[...]
    feat_ref[...] = f
    # TODO(synk): nn.Dropout(p=0.1) between head linears is an eval-mode identity here.
    logit_ref[...] = jnp.dot(f.astype(compute_dtype), cw_ref[...],
                             preferred_element_type=jnp.float32) + cb_ref[...]


def fused_head(cls_rows, g, bt, fw, fb, cw, cb, eps=1e-6):
    B, D = cls_rows.shape
    F = fw.shape[1]
    NCp = cw.shape[1]                      # classifier padded to a 128-multiple
    kern = functools.partial(_head_kernel, eps=eps, compute_dtype=MATMUL_DTYPE)
    feats, logits = pl.pallas_call(
        kern,
        out_shape=(jax.ShapeDtypeStruct((B, F), jnp.float32),
                   jax.ShapeDtypeStruct((B, NCp), jnp.float32)),
        grid=(1,),
        in_specs=[
            pl.BlockSpec((B, D), lambda i: (0, 0)),
            pl.BlockSpec((1, D), lambda i: (0, 0)),
            pl.BlockSpec((1, D), lambda i: (0, 0)),
            pl.BlockSpec((D, F), lambda i: (0, 0)),
            pl.BlockSpec((1, F), lambda i: (0, 0)),
            pl.BlockSpec((F, NCp), lambda i: (0, 0)),
            pl.BlockSpec((1, NCp), lambda i: (0, 0)),
        ],
        out_specs=(pl.BlockSpec((B, F), lambda i: (0, 0)),
                   pl.BlockSpec((B, NCp), lambda i: (0, 0))),
    )(cls_rows, g.reshape(1, D), bt.reshape(1, D),
      fw, fb.reshape(1, F), cw, cb.reshape(1, NCp))
    return feats, logits


# ---------------------------------------------------------------------------
# Model: parameter init + forward (glue in plain JAX, compute in Pallas)
# ---------------------------------------------------------------------------

def init_params(key, cfg):
    C, p = cfg["channels"], cfg["patch"]
    D, M = cfg["hidden"], cfg["mlp"]
    S = cfg["num_patches"] + 1
    F, NC = cfg["feature_dim"], cfg["num_classes"]
    NCp = _round_up(NC, 128)                 # lane-dense classifier output

    keys = iter(jax.random.split(key, 8 + 8 * cfg["depth"]))

    def w(shape):                            # matmul weights stored in bf16
        return (0.02 * jax.random.normal(next(keys), shape)).astype(MATMUL_DTYPE)

    cls_w = jnp.zeros((F, NCp), MATMUL_DTYPE).at[:, :NC].set(w((F, NC)))

    params = {
        "patch_w": w((C * p * p, D)),        # Conv2d(C, D, p, stride=p) as matmul
        "patch_b": jnp.zeros((D,), jnp.float32),
        "cls_token": (0.02 * jax.random.normal(next(keys), (1, 1, D))).astype(jnp.float32),
        "pos_embed": (0.02 * jax.random.normal(next(keys), (1, S, D))).astype(jnp.float32),
        "blocks": [],
        "ln_f_g": jnp.ones((D,), jnp.float32),
        "ln_f_b": jnp.zeros((D,), jnp.float32),
        "feat_w": w((D, F)),
        "feat_b": jnp.zeros((F,), jnp.float32),
        "cls_w": cls_w,
        "cls_b": jnp.zeros((NCp,), jnp.float32),
    }
    for _ in range(cfg["depth"]):
        params["blocks"].append({
            "ln1_g": jnp.ones((D,), jnp.float32),
            "ln1_b": jnp.zeros((D,), jnp.float32),
            "qkv_w": w((D, 3 * D)),
            "qkv_b": jnp.zeros((3 * D,), jnp.float32),
            "proj_w": w((D, D)),
            "proj_b": jnp.zeros((D,), jnp.float32),
            "ln2_g": jnp.ones((D,), jnp.float32),
            "ln2_b": jnp.zeros((D,), jnp.float32),
            "fc1_w": w((D, M)),
            "fc1_b": jnp.zeros((M,), jnp.float32),
            "fc2_w": w((M, D)),
            "fc2_b": jnp.zeros((D,), jnp.float32),
        })
    return params


def forward(params, x, cfg, return_features=False):
    """x: (B, C, H, W) float32 (NCHW, PyTorch convention)."""
    B, C, Himg, Wimg = x.shape
    p = cfg["patch"]
    D, Hh = cfg["hidden"], cfg["heads"]
    NC = cfg["num_classes"]
    Dh = D // Hh
    Hp, Wp = Himg // p, Wimg // p
    Np = Hp * Wp
    S = Np + 1
    S_pad = _round_up(S, 8)                  # (8,128)-aligned sequence downstream

    # Patch embedding: Conv2d(C, D, kernel=p, stride=p) == patchify + matmul.
    # TODO(synk): the patchify rearrangement is one strided XLA copy; it could be
    # folded into the patch-embed kernel with an (b, hp, wp) index_map gather.
    patches = x.reshape(B, C, Hp, p, Wp, p).transpose(0, 2, 4, 1, 3, 5)
    patches = patches.reshape(B * Np, C * p * p).astype(MATMUL_DTYPE)
    tok = fused_linear(patches, params["patch_w"], params["patch_b"]).reshape(B, Np, D)

    cls_tok = jnp.broadcast_to(params["cls_token"], (B, 1, D))
    h = jnp.concatenate([cls_tok, tok], axis=1) + params["pos_embed"]   # f32 (B,S,D)
    if S_pad > S:
        h = jnp.pad(h, ((0, 0), (0, S_pad - S), (0, 0)))                # zero rows
    h2 = h.reshape(B * S_pad, D).astype(MATMUL_DTYPE)                   # bf16 stream

    scale = 1.0 / (Dh ** 0.5)
    for blk in params["blocks"]:
        # Attention: LN1 fused into QKV matmul; heads split per 128-lane group.
        qkv = fused_linear(h2, blk["qkv_w"], blk["qkv_b"],
                           gamma=blk["ln1_g"], beta=blk["ln1_b"])
        attn = fused_attention(qkv.reshape(B, S_pad, 3 * D), Hh, scale, S)
        # Residual add fused into the output projection matmul (f32 add in-kernel).
        h2 = fused_linear(attn.reshape(B * S_pad, D), blk["proj_w"], blk["proj_b"],
                          residual=h2)

        # MLP: LN2 + bias + GELU fused into fc1, residual fused into fc2.
        m = fused_linear(h2, blk["fc1_w"], blk["fc1_b"],
                         gamma=blk["ln2_g"], beta=blk["ln2_b"], activation="gelu")
        h2 = fused_linear(m, blk["fc2_w"], blk["fc2_b"], residual=h2)

    # Head: final LayerNorm is row-wise, so slicing CLS rows first is equivalent.
    cls_rows = h2.reshape(B, S_pad, D)[:, 0]                 # (B, D) bf16
    features, logits_p = fused_head(cls_rows, params["ln_f_g"], params["ln_f_b"],
                                    params["feat_w"], params["feat_b"],
                                    params["cls_w"], params["cls_b"])
    logits = logits_p[:, :NC]                                # drop lane padding

    if return_features:
        return logits, features
    return logits


def get_features(params, x, cfg):
    """Equivalent of DinoV2Model.get_features."""
    _, feats = forward(params, x, cfg, return_features=True)
    return feats


# ---------------------------------------------------------------------------
# Main
# ---------------------------------------------------------------------------

if __name__ == "__main__":
    cfg = dict(
        channels=3,
        img=28,
        patch=14,                      # dinov2 patch size 14
        num_patches=(28 // 14) ** 2,   # 4 patches -> S = 5, padded to 8
        hidden=128,                    # head_dim = 64 (matches real DinoV2 heads)
        heads=2,
        mlp=1024,                      # exercises the nk>1 accumulator path
        depth=2,
        feature_dim=128,
        num_classes=16,                # padded to 128 lanes inside the head
    )

    root = jax.random.PRNGKey(0)
    pkey, xkey = jax.random.split(root)
    params = init_params(pkey, cfg)
    x = jax.random.normal(xkey, (2, cfg["channels"], cfg["img"], cfg["img"]),
                          dtype=jnp.float32)

    fwd = jax.jit(functools.partial(forward, cfg=cfg, return_features=True))
    logits, feats = fwd(params, x)
    jax.block_until_ready((logits, feats))

    assert logits.shape == (2, cfg["num_classes"])
    assert feats.shape == (2, cfg["feature_dim"])
    assert bool(jnp.all(jnp.isfinite(logits))) and bool(jnp.all(jnp.isfinite(feats)))
    print("KERNEL_OK")
</pallas_src>

<mosaic_0001>
module attributes {stable_mosaic.version = 11 : i64} {
  func.func @kernel(%arg0: i32, %arg1: i32, %arg2: i32, %arg3: memref<8x588xbf16, #tpu.memory_space<vmem>>, %arg4: memref<588x128xbf16, #tpu.memory_space<vmem>>, %arg5: memref<1x128xf32, #tpu.memory_space<vmem>>, %arg6: memref<8x128xbf16, #tpu.memory_space<vmem>>) attributes {dimension_semantics = [#tpu.dimension_semantics<parallel>, #tpu.dimension_semantics<parallel>, #tpu.dimension_semantics<arbitrary>], iteration_bounds = array<i64: 1, 1, 1>, scalar_prefetch = 0 : i64, scratch_operands = 0 : i64, tpu.core_type = #tpu.core_type<tc>, window_params = [{transform_indices = @transform_0, window_bounds = array<i64: 8, 588>}, {transform_indices = @transform_1, window_bounds = array<i64: 588, 128>}, {transform_indices = @transform_2, window_bounds = array<i64: 1, 128>}, {transform_indices = @transform_3, window_bounds = array<i64: 8, 128>}]} {
    %c0 = arith.constant 0 : index
    %c0_0 = arith.constant 0 : index
    %0 = vector.load %arg3[%c0, %c0_0] : memref<8x588xbf16, #tpu.memory_space<vmem>>, vector<8x588xbf16>
    %c0_1 = arith.constant 0 : index
    %c0_2 = arith.constant 0 : index
    %1 = vector.load %arg4[%c0_1, %c0_2] : memref<588x128xbf16, #tpu.memory_space<vmem>>, vector<588x128xbf16>
    %cst = arith.constant dense<0.000000e+00> : vector<8x128xf32>
    %2 = tpu.matmul %0, %1, %cst {dimension_numbers = #tpu.dot_dimension_numbers<[1], [0], [0], [1], [0, 0, 1, 1], [], []>} : vector<8x588xbf16>, vector<588x128xbf16>, vector<8x128xf32> -> vector<8x128xf32>
    %c0_3 = arith.constant 0 : index
    %c0_4 = arith.constant 0 : index
    %3 = vector.load %arg5[%c0_3, %c0_4] : memref<1x128xf32, #tpu.memory_space<vmem>>, vector<1x128xf32>
    %4 = vector.broadcast %3 : vector<1x128xf32> to vector<8x128xf32>
    %5 = arith.addf %2, %4 : vector<8x128xf32>
    %6 = arith.truncf %5 : vector<8x128xf32> to vector<8x128xbf16>
    %c0_5 = arith.constant 0 : index
    %c0_6 = arith.constant 0 : index
    %7 = vector.load %arg6[%c0_5, %c0_6] : memref<8x128xbf16, #tpu.memory_space<vmem>>, vector<8x128xbf16>
    tpu.vector_store %arg6[%c0_5, %c0_6], %6 {strides = array<i32>} : memref<8x128xbf16, #tpu.memory_space<vmem>>, vector<8x128xbf16>,
    return
  }
  func.func @transform_0(%arg0: i32, %arg1: i32, %arg2: i32) -> (i32, i32) {
    %c0_i32 = arith.constant 0 : i32
    return %arg0, %arg2 : i32, i32
  }
  func.func @transform_1(%arg0: i32, %arg1: i32, %arg2: i32) -> (i32, i32) {
    %c0_i32 = arith.constant 0 : i32
    return %arg2, %arg1 : i32, i32
  }
  func.func @transform_2(%arg0: i32, %arg1: i32, %arg2: i32) -> (i32, i32) {
    %c0_i32 = arith.constant 0 : i32
    %c0_i32_0 = arith.constant 0 : i32
    return %c0_i32, %arg1 : i32, i32
  }
  func.func @transform_3(%arg0: i32, %arg1: i32, %arg2: i32) -> (i32, i32) {
    %c0_i32 = arith.constant 0 : i32
    return %arg0, %arg1 : i32, i32
  }
}

module attributes {stable_mosaic.version = 11 : i64} {
  func.func @kernel(%arg0: i32, %arg1: i32, %arg2: i32, %arg3: memref<16x128xbf16, #tpu.memory_space<vmem>>, %arg4: memref<128x128xbf16, #tpu.memory_space<vmem>>, %arg5: memref<1x128xf32, #tpu.memory_space<vmem>>, %arg6: memref<1x128xf32, #tpu.memory_space<vmem>>, %arg7: memref<1x128xf32, #tpu.memory_space<vmem>>, %arg8: memref<16x128xbf16, #tpu.memory_space<vmem>>, %arg9: memref<16x128xbf16, #tpu.memory_space<vmem>>) attributes {dimension_semantics = [#tpu.dimension_semantics<parallel>, #tpu.dimension_semantics<arbitrary>, #tpu.dimension_semantics<arbitrary>], iteration_bounds = array<i64: 1, 3, 1>, scalar_prefetch = 0 : i64, scratch_operands = 1 : i64, tpu.core_type = #tpu.core_type<tc>, window_params = [{transform_indices = @transform_0, window_bounds = array<i64: 16, 128>}, {transform_indices = @transform_1, window_bounds = array<i64: 128, 128>}, {transform_indices = @transform_2, window_bounds = array<i64: 1, 128>}, {transform_indices = @transform_3, window_bounds = array<i64: 1, 128>}, {transform_indices = @transform_4, window_bounds = array<i64: 1, 128>}, {transform_indices = @transform_5, window_bounds = array<i64: 16, 128>}]} {
    %c0_i32 = arith.constant 0 : i32
    %0 = arith.cmpi eq, %arg1, %c0_i32 : i32
    %1 = arith.extui %0 : i1 to i32
    %c0_i32_0 = arith.constant 0 : i32
    %2 = arith.cmpi ne, %1, %c0_i32_0 : i32
    scf.if %2 {
      %c0_8 = arith.constant 0 : index
      %c0_9 = arith.constant 0 : index
      %11 = vector.load %arg3[%c0_8, %c0_9] : memref<16x128xbf16, #tpu.memory_space<vmem>>, vector<16x128xbf16>
      %12 = arith.extf %11 : vector<16x128xbf16> to vector<16x128xf32>
      %cst_10 = arith.constant dense<0.000000e+00> : vector<16xf32>
      %13 = vector.multi_reduction <add>, %12, %cst_10 [1] : vector<16x128xf32> to vector<16xf32>
      %14 = vector.shape_cast %13 : vector<16xf32> to vector<16x1xf32>
      %cst_11 = arith.constant 1.280000e+02 : f32
      %15 = vector.broadcast %cst_11 : f32 to vector<16x1xf32>
      %16 = arith.divf %14, %15 : vector<16x1xf32>
      %17 = vector.broadcast %16 : vector<16x1xf32> to vector<16x128xf32>
      %18 = arith.subf %12, %17 : vector<16x128xf32>
      %19 = arith.mulf %18, %18 : vector<16x128xf32>
      %cst_12 = arith.constant dense<0.000000e+00> : vector<16xf32>
      %20 = vector.multi_reduction <add>, %19, %cst_12 [1] : vector<16x128xf32> to vector<16xf32>
      %21 = vector.shape_cast %20 : vector<16xf32> to vector<16x1xf32>
      %cst_13 = arith.constant 1.280000e+02 : f32
      %22 = vector.broadcast %cst_13 : f32 to vector<16x1xf32>
      %23 = arith.divf %21, %22 : vector<16x1xf32>
      %24 = vector.broadcast %16 : vector<16x1xf32> to vector<16x128xf32>
      %25 = arith.subf %12, %24 : vector<16x128xf32>
      %cst_14 = arith.constant 9.99999997E-7 : f32
      %26 = vector.broadcast %cst_14 : f32 to vector<16x1xf32>
      %27 = arith.addf %23, %26 : vector<16x1xf32>
      %28 = math.rsqrt %27 : vector<16x1xf32>
      %29 = vector.broadcast %28 : vector<16x1xf32> to vector<16x128xf32>
      %30 = arith.mulf %25, %29 : vector<16x128xf32>
      %c0_15 = arith.constant 0 : index
      %c0_16 = arith.constant 0 : index
      %31 = vector.load %arg6[%c0_15, %c0_16] : memref<1x128xf32, #tpu.memory_space<vmem>>, vector<1x128xf32>
      %32 = vector.broadcast %31 : vector<1x128xf32> to vector<16x128xf32>
      %33 = arith.mulf %30, %32 : vector<16x128xf32>
      %c0_17 = arith.constant 0 : index
      %c0_18 = arith.constant 0 : index
      %34 = vector.load %arg7[%c0_17, %c0_18] : memref<1x128xf32, #tpu.memory_space<vmem>>, vector<1x128xf32>
      %35 = vector.broadcast %34 : vector<1x128xf32> to vector<16x128xf32>
      %36 = arith.addf %33, %35 : vector<16x128xf32>
      %37 = arith.truncf %36 : vector<16x128xf32> to vector<16x128xbf16>
      %c0_19 = arith.constant 0 : index
      %c0_20 = arith.constant 0 : index
      %38 = vector.load %arg9[%c0_19, %c0_20] : memref<16x128xbf16, #tpu.memory_space<vmem>>, vector<16x128xbf16>
      tpu.vector_store %arg9[%c0_19, %c0_20], %37 {strides = array<i32>} : memref<16x128xbf16, #tpu.memory_space<vmem>>, vector<16x128xbf16>,
    } else {
    }
    %c0 = arith.constant 0 : index
    %c0_1 = arith.constant 0 : index
    %3 = vector.load %arg9[%c0, %c0_1] : memref<16x128xbf16, #tpu.memory_space<vmem>>, vector<16x128xbf16>
    %c0_2 = arith.constant 0 : index
    %c0_3 = arith.constant 0 : index
    %4 = vector.load %arg4[%c0_2, %c0_3] : memref<128x128xbf16, #tpu.memory_space<vmem>>, vector<128x128xbf16>
    %cst = arith.constant dense<0.000000e+00> : vector<16x128xf32>
    %5 = tpu.matmul %3, %4, %cst {dimension_numbers = #tpu.dot_dimension_numbers<[1], [0], [0], [1], [0, 0, 1, 1], [], []>} : vector<16x128xbf16>, vector<128x128xbf16>, vector<16x128xf32> -> vector<16x128xf32>
    %c0_4 = arith.constant 0 : index
    %c0_5 = arith.constant 0 : index
    %6 = vector.load %arg5[%c0_4, %c0_5] : memref<1x128xf32, #tpu.memory_space<vmem>>, vector<1x128xf32>
    %7 = vector.broadcast %6 : vector<1x128xf32> to vector<16x128xf32>
    %8 = arith.addf %5, %7 : vector<16x128xf32>
    %9 = arith.truncf %8 : vector<16x128xf32> to vector<16x128xbf16>
    %c0_6 = arith.constant 0 : index
    %c0_7 = arith.constant 0 : index
    %10 = vector.load %arg8[%c0_6, %c0_7] : memref<16x128xbf16, #tpu.memory_space<vmem>>, vector<16x128xbf16>
    tpu.vector_store %arg8[%c0_6, %c0_7], %9 {strides = array<i32>} : memref<16x128xbf16, #tpu.memory_space<vmem>>, vector<16x128xbf16>,
    return
  }
  func.func @transform_0(%arg0: i32, %arg1: i32, %arg2: i32) -> (i32, i32) {
    %c0_i32 = arith.constant 0 : i32
    return %arg0, %arg2 : i32, i32
  }
  func.func @transform_1(%arg0: i32, %arg1: i32, %arg2: i32) -> (i32, i32) {
    %c0_i32 = arith.constant 0 : i32
    return %arg2, %arg1 : i32, i32
  }
  func.func @transform_2(%arg0: i32, %arg1: i32, %arg2: i32) -> (i32, i32) {
    %c0_i32 = arith.constant 0 : i32
    %c0_i32_0 = arith.constant 0 : i32
    return %c0_i32, %arg1 : i32, i32
  }
  func.func @transform_3(%arg0: i32, %arg1: i32, %arg2: i32) -> (i32, i32) {
    %c0_i32 = arith.constant 0 : i32
    %c0_i32_0 = arith.constant 0 : i32
    return %c0_i32, %arg2 : i32, i32
  }
  func.func @transform_4(%arg0: i32, %arg1: i32, %arg2: i32) -> (i32, i32) {
    %c0_i32 = arith.constant 0 : i32
    %c0_i32_0 = arith.constant 0 : i32
    return %c0_i32, %arg2 : i32, i32
  }
  func.func @transform_5(%arg0: i32, %arg1: i32, %arg2: i32) -> (i32, i32) {
    %c0_i32 = arith.constant 0 : i32
    return %arg0, %arg1 : i32, i32
  }
}

module attributes {stable_mosaic.version = 11 : i64} {
  func.func @_attention_kernel(%arg0: i32, %arg1: i32, %arg2: i32, %arg3: memref<1x8x128xbf16, #tpu.memory_space<vmem>>, %arg4: memref<1x8x128xbf16, #tpu.memory_space<vmem>>, %arg5: memref<1x8x128xbf16, #tpu.memory_space<vmem>>, %arg6: memref<1x8x128xbf16, #tpu.memory_space<vmem>>) attributes {dimension_semantics = [#tpu.dimension_semantics<parallel>, #tpu.dimension_semantics<parallel>, #tpu.dimension_semantics<parallel>], iteration_bounds = array<i64: 2, 1, 1>, scalar_prefetch = 0 : i64, scratch_operands = 0 : i64, tpu.core_type = #tpu.core_type<tc>, window_params = [{transform_indices = @transform_0, window_bounds = array<i64: 1, 8, 128>}, {transform_indices = @transform_1, window_bounds = array<i64: 1, 8, 128>}, {transform_indices = @transform_2, window_bounds = array<i64: 1, 8, 128>}, {transform_indices = @transform_3, window_bounds = array<i64: 1, 8, 128>}]} {
    %c0 = arith.constant 0 : index
    %c0_0 = arith.constant 0 : index
    %c0_1 = arith.constant 0 : index
    %0 = vector.load %arg3[%c0, %c0_0, %c0_1] : memref<1x8x128xbf16, #tpu.memory_space<vmem>>, vector<1x8x128xbf16>
    %1 = vector.shape_cast %0 : vector<1x8x128xbf16> to vector<8x128xbf16>
    %c0_2 = arith.constant 0 : index
    %c0_3 = arith.constant 0 : index
    %c0_4 = arith.constant 0 : index
    %2 = vector.load %arg4[%c0_2, %c0_3, %c0_4] : memref<1x8x128xbf16, #tpu.memory_space<vmem>>, vector<1x8x128xbf16>
    %3 = vector.shape_cast %2 : vector<1x8x128xbf16> to vector<8x128xbf16>
    %c0_5 = arith.constant 0 : index
    %c0_6 = arith.constant 0 : index
    %c0_7 = arith.constant 0 : index
    %4 = vector.load %arg5[%c0_5, %c0_6, %c0_7] : memref<1x8x128xbf16, #tpu.memory_space<vmem>>, vector<1x8x128xbf16>
    %5 = vector.shape_cast %4 : vector<1x8x128xbf16> to vector<8x128xbf16>
    %6 = tpu.iota {dimensions = array<i32: 1>} : vector<1x8xi32>
    %c5_i32 = arith.constant 5 : i32
    %7 = vector.broadcast %c5_i32 : i32 to vector<1x8xi32>
    %8 = arith.cmpi slt, %6, %7 : vector<1x8xi32>
    %9 = vector.extract_strided_slice %1 {offsets = [0, 0], sizes = [8, 64], strides = [1, 1]} : vector<8x128xbf16> to vector<8x64xbf16>
    %10 = vector.extract_strided_slice %3 {offsets = [0, 0], sizes = [8, 64], strides = [1, 1]} : vector<8x128xbf16> to vector<8x64xbf16>
    %11 = vector.extract_strided_slice %5 {offsets = [0, 0], sizes = [8, 64], strides = [1, 1]} : vector<8x128xbf16> to vector<8x64xbf16>
    %cst = arith.constant dense<0.000000e+00> : vector<8x8xf32>
    %12 = tpu.matmul %9, %10, %cst {dimension_numbers = #tpu.dot_dimension_numbers<[1], [1], [0], [0], [0, 0, 1, 0], [], []>} : vector<8x64xbf16>, vector<8x64xbf16>, vector<8x8xf32> -> vector<8x8xf32>
    %cst_8 = arith.constant 1.250000e-01 : f32
    %13 = vector.broadcast %cst_8 : f32 to vector<8x8xf32>
    %14 = arith.mulf %12, %13 : vector<8x8xf32>
    %cst_9 = arith.constant -1.000000e+30 : f32
    %15 = vector.shape_cast %8 : vector<1x8xi1> to vector<1x8xi1>
    %16 = vector.broadcast %15 : vector<1x8xi1> to vector<8x8xi1>
    %17 = vector.broadcast %cst_9 : f32 to vector<8x8xf32>
    %18 = arith.select %16, %14, %17 : vector<8x8xi1>, vector<8x8xf32>
    %cst_10 = arith.constant dense<0xFF800000> : vector<8xf32>
    %19 = vector.multi_reduction <maximumf>, %18, %cst_10 [1] : vector<8x8xf32> to vector<8xf32>
    %20 = vector.shape_cast %19 : vector<8xf32> to vector<8x1xf32>
    %21 = vector.broadcast %20 : vector<8x1xf32> to vector<8x8xf32>
    %22 = arith.subf %18, %21 : vector<8x8xf32>
    %23 = math.exp %22 : vector<8x8xf32>
    %cst_11 = arith.constant dense<0.000000e+00> : vector<8xf32>
    %24 = vector.multi_reduction <add>, %23, %cst_11 [1] : vector<8x8xf32> to vector<8xf32>
    %25 = vector.shape_cast %24 : vector<8xf32> to vector<8x1xf32>
    %26 = tpu.reciprocal %25 {approx = true} : vector<8x1xf32> -> vector<8x1xf32>
    %27 = vector.broadcast %26 : vector<8x1xf32> to vector<8x8xf32>
    %28 = arith.mulf %23, %27 : vector<8x8xf32>
    %29 = arith.truncf %28 : vector<8x8xf32> to vector<8x8xbf16>
    %cst_12 = arith.constant dense<0.000000e+00> : vector<8x64xf32>
    %30 = tpu.matmul %29, %11, %cst_12 {dimension_numbers = #tpu.dot_dimension_numbers<[1], [0], [0], [1], [0, 0, 1, 1], [], []>} : vector<8x8xbf16>, vector<8x64xbf16>, vector<8x64xf32> -> vector<8x64xf32>
    %31 = vector.extract_strided_slice %1 {offsets = [0, 64], sizes = [8, 64], strides = [1, 1]} : vector<8x128xbf16> to vector<8x64xbf16>
    %32 = vector.extract_strided_slice %3 {offsets = [0, 64], sizes = [8, 64], strides = [1, 1]} : vector<8x128xbf16> to vector<8x64xbf16>
    %33 = vector.extract_strided_slice %5 {offsets = [0, 64], sizes = [8, 64], strides = [1, 1]} : vector<8x128xbf16> to vector<8x64xbf16>
    %cst_13 = arith.constant dense<0.000000e+00> : vector<8x8xf32>
    %34 = tpu.matmul %31, %32, %cst_13 {dimension_numbers = #tpu.dot_dimension_numbers<[1], [1], [0], [0], [0, 0, 1, 0], [], []>} : vector<8x64xbf16>, vector<8x64xbf16>, vector<8x8xf32> -> vector<8x8xf32>
    %cst_14 = arith.constant 1.250000e-01 : f32
    %35 = vector.broadcast %cst_14 : f32 to vector<8x8xf32>
    %36 = arith.mulf %34, %35 : vector<8x8xf32>
    %cst_15 = arith.constant -1.000000e+30 : f32
    %37 = vector.shape_cast %8 : vector<1x8xi1> to vector<1x8xi1>
    %38 = vector.broadcast %37 : vector<1x8xi1> to vector<8x8xi1>
    %39 = vector.broadcast %cst_15 : f32 to vector<8x8xf32>
    %40 = arith.select %38, %36, %39 : vector<8x8xi1>, vector<8x8xf32>
    %cst_16 = arith.constant dense<0xFF800000> : vector<8xf32>
    %41 = vector.multi_reduction <maximumf>, %40, %cst_16 [1] : vector<8x8xf32> to vector<8xf32>
    %42 = vector.shape_cast %41 : vector<8xf32> to vector<8x1xf32>
    %43 = vector.broadcast %42 : vector<8x1xf32> to vector<8x8xf32>
    %44 = arith.subf %40, %43 : vector<8x8xf32>
    %45 = math.exp %44 : vector<8x8xf32>
    %cst_17 = arith.constant dense<0.000000e+00> : vector<8xf32>
    %46 = vector.multi_reduction <add>, %45, %cst_17 [1] : vector<8x8xf32> to vector<8xf32>
    %47 = vector.shape_cast %46 : vector<8xf32> to vector<8x1xf32>
    %48 = tpu.reciprocal %47 {approx = true} : vector<8x1xf32> -> vector<8x1xf32>
    %49 = vector.broadcast %48 : vector<8x1xf32> to vector<8x8xf32>
    %50 = arith.mulf %45, %49 : vector<8x8xf32>
    %51 = arith.truncf %50 : vector<8x8xf32> to vector<8x8xbf16>
    %cst_18 = arith.constant dense<0.000000e+00> : vector<8x64xf32>
    %52 = tpu.matmul %51, %33, %cst_18 {dimension_numbers = #tpu.dot_dimension_numbers<[1], [0], [0], [1], [0, 0, 1, 1], [], []>} : vector<8x8xbf16>, vector<8x64xbf16>, vector<8x64xf32> -> vector<8x64xf32>
    %53 = tpu.concatenate %30, %52 in 1 : vector<8x64xf32>, vector<8x64xf32> -> vector<8x128xf32>
    %54 = arith.truncf %53 : vector<8x128xf32> to vector<8x128xbf16>
    %c0_19 = arith.constant 0 : index
    %c0_20 = arith.constant 0 : index
    %c0_21 = arith.constant 0 : index
    %55 = vector.load %arg6[%c0_19, %c0_20, %c0_21] : memref<1x8x128xbf16, #tpu.memory_space<vmem>>, vector<1x8x128xbf16>
    %56 = vector.shape_cast %55 : vector<1x8x128xbf16> to vector<8x128xbf16>
    %57 = vector.shape_cast %54 : vector<8x128xbf16> to vector<1x8x128xbf16>
    tpu.vector_store %arg6[%c0_19, %c0_20, %c0_21], %57 {strides = array<i32>} : memref<1x8x128xbf16, #tpu.memory_space<vmem>>, vector<1x8x128xbf16>,
    return
  }
  func.func @transform_0(%arg0: i32, %arg1: i32, %arg2: i32) -> (i32, i32, i32) {
    %c0_i32 = arith.constant 0 : i32
    return %arg0, %arg2, %arg1 : i32, i32, i32
  }
  func.func @transform_1(%arg0: i32, %arg1: i32, %arg2: i32) -> (i32, i32, i32) {
    %c1_i32 = arith.constant 1 : i32
    %0 = arith.addi %c1_i32, %arg1 : i32
    %c0_i32 = arith.constant 0 : i32
    %c0_i32_0 = arith.constant 0 : i32
    return %arg0, %c0_i32, %0 : i32, i32, i32
  }
  func.func @transform_2(%arg0: i32, %arg1: i32, %arg2: i32) -> (i32, i32, i32) {
    %c2_i32 = arith.constant 2 : i32
    %0 = arith.addi %c2_i32, %arg1 : i32
    %c0_i32 = arith.constant 0 : i32
    %c0_i32_0 = arith.constant 0 : i32
    return %arg0, %c0_i32, %0 : i32, i32, i32
  }
  func.func @transform_3(%arg0: i32, %arg1: i32, %arg2: i32) -> (i32, i32, i32) {
    %c0_i32 = arith.constant 0 : i32
    return %arg0, %arg2, %arg1 : i32, i32, i32
  }
}

module attributes {stable_mosaic.version = 11 : i64} {
  func.func @kernel(%arg0: i32, %arg1: i32, %arg2: i32, %arg3: memref<16x128xbf16, #tpu.memory_space<vmem>>, %arg4: memref<128x128xbf16, #tpu.memory_space<vmem>>, %arg5: memref<1x128xf32, #tpu.memory_space<vmem>>, %arg6: memref<16x128xbf16, #tpu.memory_space<vmem>>, %arg7: memref<16x128xbf16, #tpu.memory_space<vmem>>) attributes {dimension_semantics = [#tpu.dimension_semantics<parallel>, #tpu.dimension_semantics<parallel>, #tpu.dimension_semantics<arbitrary>], iteration_bounds = array<i64: 1, 1, 1>, scalar_prefetch = 0 : i64, scratch_operands = 0 : i64, tpu.core_type = #tpu.core_type<tc>, window_params = [{transform_indices = @transform_0, window_bounds = array<i64: 16, 128>}, {transform_indices = @transform_1, window_bounds = array<i64: 128, 128>}, {transform_indices = @transform_2, window_bounds = array<i64: 1, 128>}, {transform_indices = @transform_3, window_bounds = array<i64: 16, 128>}, {transform_indices = @transform_4, window_bounds = array<i64: 16, 128>}]} {
    %c0 = arith.constant 0 : index
    %c0_0 = arith.constant 0 : index
    %0 = vector.load %arg3[%c0, %c0_0] : memref<16x128xbf16, #tpu.memory_space<vmem>>, vector<16x128xbf16>
    %c0_1 = arith.constant 0 : index
    %c0_2 = arith.constant 0 : index
    %1 = vector.load %arg4[%c0_1, %c0_2] : memref<128x128xbf16, #tpu.memory_space<vmem>>, vector<128x128xbf16>
    %cst = arith.constant dense<0.000000e+00> : vector<16x128xf32>
    %2 = tpu.matmul %0, %1, %cst {dimension_numbers = #tpu.dot_dimension_numbers<[1], [0], [0], [1], [0, 0, 1, 1], [], []>} : vector<16x128xbf16>, vector<128x128xbf16>, vector<16x128xf32> -> vector<16x128xf32>
    %c0_3 = arith.constant 0 : index
    %c0_4 = arith.constant 0 : index
    %3 = vector.load %arg5[%c0_3, %c0_4] : memref<1x128xf32, #tpu.memory_space<vmem>>, vector<1x128xf32>
    %4 = vector.broadcast %3 : vector<1x128xf32> to vector<16x128xf32>
    %5 = arith.addf %2, %4 : vector<16x128xf32>
    %c0_5 = arith.constant 0 : index
    %c0_6 = arith.constant 0 : index
    %6 = vector.load %arg6[%c0_5, %c0_6] : memref<16x128xbf16, #tpu.memory_space<vmem>>, vector<16x128xbf16>
    %7 = arith.extf %6 : vector<16x128xbf16> to vector<16x128xf32>
    %8 = arith.addf %5, %7 : vector<16x128xf32>
    %9 = arith.truncf %8 : vector<16x128xf32> to vector<16x128xbf16>
    %c0_7 = arith.constant 0 : index
    %c0_8 = arith.constant 0 : index
    %10 = vector.load %arg7[%c0_7, %c0_8] : memref<16x128xbf16, #tpu.memory_space<vmem>>, vector<16x128xbf16>
    tpu.vector_store %arg7[%c0_7, %c0_8], %9 {strides = array<i32>} : memref<16x128xbf16, #tpu.memory_space<vmem>>, vector<16x128xbf16>,
    return
  }
  func.func @transform_0(%arg0: i32, %arg1: i32, %arg2: i32) -> (i32, i32) {
    %c0_i32 = arith.constant 0 : i32
    return %arg0, %arg2 : i32, i32
  }
  func.func @transform_1(%arg0: i32, %arg1: i32, %arg2: i32) -> (i32, i32) {
    %c0_i32 = arith.constant 0 : i32
    return %arg2, %arg1 : i32, i32
  }
  func.func @transform_2(%arg0: i32, %arg1: i32, %arg2: i32) -> (i32, i32) {
    %c0_i32 = arith.constant 0 : i32
    %c0_i32_0 = arith.constant 0 : i32
    return %c0_i32, %arg1 : i32, i32
  }
  func.func @transform_3(%arg0: i32, %arg1: i32, %arg2: i32) -> (i32, i32) {
    %c0_i32 = arith.constant 0 : i32
    return %arg0, %arg1 : i32, i32
  }
  func.func @transform_4(%arg0: i32, %arg1: i32, %arg2: i32) -> (i32, i32) {
    %c0_i32 = arith.constant 0 : i32
    return %arg0, %arg1 : i32, i32
  }
}

module attributes {stable_mosaic.version = 11 : i64} {
  func.func @kernel(%arg0: i32, %arg1: i32, %arg2: i32, %arg3: memref<16x512xbf16, #tpu.memory_space<vmem>>, %arg4: memref<512x128xbf16, #tpu.memory_space<vmem>>, %arg5: memref<1x128xf32, #tpu.memory_space<vmem>>, %arg6: memref<16x128xbf16, #tpu.memory_space<vmem>>, %arg7: memref<16x128xbf16, #tpu.memory_space<vmem>>, %arg8: memref<16x128xf32, #tpu.memory_space<vmem>>) attributes {dimension_semantics = [#tpu.dimension_semantics<parallel>, #tpu.dimension_semantics<parallel>, #tpu.dimension_semantics<arbitrary>], iteration_bounds = array<i64: 1, 1, 2>, scalar_prefetch = 0 : i64, scratch_operands = 1 : i64, tpu.core_type = #tpu.core_type<tc>, window_params = [{transform_indices = @transform_0, window_bounds = array<i64: 16, 512>}, {transform_indices = @transform_1, window_bounds = array<i64: 512, 128>}, {transform_indices = @transform_2, window_bounds = array<i64: 1, 128>}, {transform_indices = @transform_3, window_bounds = array<i64: 16, 128>}, {transform_indices = @transform_4, window_bounds = array<i64: 16, 128>}]} {
    %c0_i32 = arith.constant 0 : i32
    %0 = arith.cmpi eq, %arg2, %c0_i32 : i32
    %1 = arith.extui %0 : i1 to i32
    %c0_i32_0 = arith.constant 0 : i32
    %2 = arith.cmpi ne, %1, %c0_i32_0 : i32
    scf.if %2 {
      %cst_9 = arith.constant 0.000000e+00 : f32
      %12 = vector.broadcast %cst_9 : f32 to vector<16x128xf32>
      %c0_10 = arith.constant 0 : index
      %c0_11 = arith.constant 0 : index
      %13 = vector.load %arg8[%c0_10, %c0_11] : memref<16x128xf32, #tpu.memory_space<vmem>>, vector<16x128xf32>
      tpu.vector_store %arg8[%c0_10, %c0_11], %12 {strides = array<i32>} : memref<16x128xf32, #tpu.memory_space<vmem>>, vector<16x128xf32>,
    } else {
    }
    %c0 = arith.constant 0 : index
    %c0_1 = arith.constant 0 : index
    %3 = vector.load %arg8[%c0, %c0_1] : memref<16x128xf32, #tpu.memory_space<vmem>>, vector<16x128xf32>
    %c0_2 = arith.constant 0 : index
    %c0_3 = arith.constant 0 : index
    %4 = vector.load %arg3[%c0_2, %c0_3] : memref<16x512xbf16, #tpu.memory_space<vmem>>, vector<16x512xbf16>
    %c0_4 = arith.constant 0 : index
    %c0_5 = arith.constant 0 : index
    %5 = vector.load %arg4[%c0_4, %c0_5] : memref<512x128xbf16, #tpu.memory_space<vmem>>, vector<512x128xbf16>
    %cst = arith.constant dense<0.000000e+00> : vector<16x128xf32>
    %6 = tpu.matmul %4, %5, %cst {dimension_numbers = #tpu.dot_dimension_numbers<[1], [0], [0], [1], [0, 0, 1, 1], [], []>} : vector<16x512xbf16>, vector<512x128xbf16>, vector<16x128xf32> -> vector<16x128xf32>
    %7 = arith.addf %3, %6 : vector<16x128xf32>
    %c0_6 = arith.constant 0 : index
    %c0_7 = arith.constant 0 : index
    %8 = vector.load %arg8[%c0_6, %c0_7] : memref<16x128xf32, #tpu.memory_space<vmem>>, vector<16x128xf32>
    tpu.vector_store %arg8[%c0_6, %c0_7], %7 {strides = array<i32>} : memref<16x128xf32, #tpu.memory_space<vmem>>, vector<16x128xf32>,
    %c1_i32 = arith.constant 1 : i32
    %9 = arith.cmpi eq, %arg2, %c1_i32 : i32
    %10 = arith.extui %9 : i1 to i32
    %c0_i32_8 = arith.constant 0 : i32
    %11 = arith.cmpi ne, %10, %c0_i32_8 : i32
    scf.if %11 {
      %c0_9 = arith.constant 0 : index
      %c0_10 = arith.constant 0 : index
      %12 = vector.load %arg8[%c0_9, %c0_10] : memref<16x128xf32, #tpu.memory_space<vmem>>, vector<16x128xf32>
      %c0_11 = arith.constant 0 : index
      %c0_12 = arith.constant 0 : index
      %13 = vector.load %arg5[%c0_11, %c0_12] : memref<1x128xf32, #tpu.memory_space<vmem>>, vector<1x128xf32>
      %14 = vector.broadcast %13 : vector<1x128xf32> to vector<16x128xf32>
      %15 = arith.addf %12, %14 : vector<16x128xf32>
      %c0_13 = arith.constant 0 : index
      %c0_14 = arith.constant 0 : index
      %16 = vector.load %arg6[%c0_13, %c0_14] : memref<16x128xbf16, #tpu.memory_space<vmem>>, vector<16x128xbf16>
      %17 = arith.extf %16 : vector<16x128xbf16> to vector<16x128xf32>
      %18 = arith.addf %15, %17 : vector<16x128xf32>
      %19 = arith.truncf %18 : vector<16x128xf32> to vector<16x128xbf16>
      %c0_15 = arith.constant 0 : index
      %c0_16 = arith.constant 0 : index
      %20 = vector.load %arg7[%c0_15, %c0_16] : memref<16x128xbf16, #tpu.memory_space<vmem>>, vector<16x128xbf16>
      tpu.vector_store %arg7[%c0_15, %c0_16], %19 {strides = array<i32>} : memref<16x128xbf16, #tpu.memory_space<vmem>>, vector<16x128xbf16>,
    } else {
    }
    return
  }
  func.func @transform_0(%arg0: i32, %arg1: i32, %arg2: i32) -> (i32, i32) {
    %c0_i32 = arith.constant 0 : i32
    return %arg0, %arg2 : i32, i32
  }
  func.func @transform_1(%arg0: i32, %arg1: i32, %arg2: i32) -> (i32, i32) {
    %c0_i32 = arith.constant 0 : i32
    return %arg2, %arg1 : i32, i32
  }
  func.func @transform_2(%arg0: i32, %arg1: i32, %arg2: i32) -> (i32, i32) {
    %c0_i32 = arith.constant 0 : i32
    %c0_i32_0 = arith.constant 0 : i32
    return %c0_i32, %arg1 : i32, i32
  }
  func.func @transform_3(%arg0: i32, %arg1: i32, %arg2: i32) -> (i32, i32) {
    %c0_i32 = arith.constant 0 : i32
    return %arg0, %arg1 : i32, i32
  }
  func.func @transform_4(%arg0: i32, %arg1: i32, %arg2: i32) -> (i32, i32) {
    %c0_i32 = arith.constant 0 : i32
    return %arg0, %arg1 : i32, i32
  }
}

module attributes {stable_mosaic.version = 11 : i64} {
  func.func @kernel(%arg0: i32, %arg1: i32, %arg2: i32, %arg3: memref<16x128xbf16, #tpu.memory_space<vmem>>, %arg4: memref<128x256xbf16, #tpu.memory_space<vmem>>, %arg5: memref<1x256xf32, #tpu.memory_space<vmem>>, %arg6: memref<1x128xf32, #tpu.memory_space<vmem>>, %arg7: memref<1x128xf32, #tpu.memory_space<vmem>>, %arg8: memref<16x256xbf16, #tpu.memory_space<vmem>>, %arg9: memref<16x128xbf16, #tpu.memory_space<vmem>>) attributes {dimension_semantics = [#tpu.dimension_semantics<parallel>, #tpu.dimension_semantics<arbitrary>, #tpu.dimension_semantics<arbitrary>], iteration_bounds = array<i64: 1, 4, 1>, scalar_prefetch = 0 : i64, scratch_operands = 1 : i64, tpu.core_type = #tpu.core_type<tc>, window_params = [{transform_indices = @transform_0, window_bounds = array<i64: 16, 128>}, {transform_indices = @transform_1, window_bounds = array<i64: 128, 256>}, {transform_indices = @transform_2, window_bounds = array<i64: 1, 256>}, {transform_indices = @transform_3, window_bounds = array<i64: 1, 128>}, {transform_indices = @transform_4, window_bounds = array<i64: 1, 128>}, {transform_indices = @transform_5, window_bounds = array<i64: 16, 256>}]} {
    %c0_i32 = arith.constant 0 : i32
    %0 = arith.cmpi eq, %arg1, %c0_i32 : i32
    %1 = arith.extui %0 : i1 to i32
    %c0_i32_0 = arith.constant 0 : i32
    %2 = arith.cmpi ne, %1, %c0_i32_0 : i32
    scf.if %2 {
      %c0_12 = arith.constant 0 : index
      %c0_13 = arith.constant 0 : index
      %24 = vector.load %arg3[%c0_12, %c0_13] : memref<16x128xbf16, #tpu.memory_space<vmem>>, vector<16x128xbf16>
      %25 = arith.extf %24 : vector<16x128xbf16> to vector<16x128xf32>
      %cst_14 = arith.constant dense<0.000000e+00> : vector<16xf32>
      %26 = vector.multi_reduction <add>, %25, %cst_14 [1] : vector<16x128xf32> to vector<16xf32>
      %27 = vector.shape_cast %26 : vector<16xf32> to vector<16x1xf32>
      %cst_15 = arith.constant 1.280000e+02 : f32
      %28 = vector.broadcast %cst_15 : f32 to vector<16x1xf32>
      %29 = arith.divf %27, %28 : vector<16x1xf32>
      %30 = vector.broadcast %29 : vector<16x1xf32> to vector<16x128xf32>
      %31 = arith.subf %25, %30 : vector<16x128xf32>
      %32 = arith.mulf %31, %31 : vector<16x128xf32>
      %cst_16 = arith.constant dense<0.000000e+00> : vector<16xf32>
      %33 = vector.multi_reduction <add>, %32, %cst_16 [1] : vector<16x128xf32> to vector<16xf32>
      %34 = vector.shape_cast %33 : vector<16xf32> to vector<16x1xf32>
      %cst_17 = arith.constant 1.280000e+02 : f32
      %35 = vector.broadcast %cst_17 : f32 to vector<16x1xf32>
      %36 = arith.divf %34, %35 : vector<16x1xf32>
      %37 = vector.broadcast %29 : vector<16x1xf32> to vector<16x128xf32>
      %38 = arith.subf %25, %37 : vector<16x128xf32>
      %cst_18 = arith.constant 9.99999997E-7 : f32
      %39 = vector.broadcast %cst_18 : f32 to vector<16x1xf32>
      %40 = arith.addf %36, %39 : vector<16x1xf32>
      %41 = math.rsqrt %40 : vector<16x1xf32>
      %42 = vector.broadcast %41 : vector<16x1xf32> to vector<16x128xf32>
      %43 = arith.mulf %38, %42 : vector<16x128xf32>
      %c0_19 = arith.constant 0 : index
      %c0_20 = arith.constant 0 : index
      %44 = vector.load %arg6[%c0_19, %c0_20] : memref<1x128xf32, #tpu.memory_space<vmem>>, vector<1x128xf32>
      %45 = vector.broadcast %44 : vector<1x128xf32> to vector<16x128xf32>
      %46 = arith.mulf %43, %45 : vector<16x128xf32>
      %c0_21 = arith.constant 0 : index
      %c0_22 = arith.constant 0 : index
      %47 = vector.load %arg7[%c0_21, %c0_22] : memref<1x128xf32, #tpu.memory_space<vmem>>, vector<1x128xf32>
      %48 = vector.broadcast %47 : vector<1x128xf32> to vector<16x128xf32>
      %49 = arith.addf %46, %48 : vector<16x128xf32>
      %50 = arith.truncf %49 : vector<16x128xf32> to vector<16x128xbf16>
      %c0_23 = arith.constant 0 : index
      %c0_24 = arith.constant 0 : index
      %51 = vector.load %arg9[%c0_23, %c0_24] : memref<16x128xbf16, #tpu.memory_space<vmem>>, vector<16x128xbf16>
      tpu.vector_store %arg9[%c0_23, %c0_24], %50 {strides = array<i32>} : memref<16x128xbf16, #tpu.memory_space<vmem>>, vector<16x128xbf16>,
    } else {
    }
    %c0 = arith.constant 0 : index
    %c0_1 = arith.constant 0 : index
    %3 = vector.load %arg9[%c0, %c0_1] : memref<16x128xbf16, #tpu.memory_space<vmem>>, vector<16x128xbf16>
    %c0_2 = arith.constant 0 : index
    %c0_3 = arith.constant 0 : index
    %4 = vector.load %arg4[%c0_2, %c0_3] : memref<128x256xbf16, #tpu.memory_space<vmem>>, vector<128x256xbf16>
    %cst = arith.constant dense<0.000000e+00> : vector<16x256xf32>
    %5 = tpu.matmul %3, %4, %cst {dimension_numbers = #tpu.dot_dimension_numbers<[1], [0], [0], [1], [0, 0, 1, 1], [], []>} : vector<16x128xbf16>, vector<128x256xbf16>, vector<16x256xf32> -> vector<16x256xf32>
    %c0_4 = arith.constant 0 : index
    %c0_5 = arith.constant 0 : index
    %6 = vector.load %arg5[%c0_4, %c0_5] : memref<1x256xf32, #tpu.memory_space<vmem>>, vector<1x256xf32>
    %7 = vector.broadcast %6 : vector<1x256xf32> to vector<16x256xf32>
    %8 = arith.addf %5, %7 : vector<16x256xf32>
    %cst_6 = arith.constant 5.000000e-01 : f32
    %9 = vector.broadcast %cst_6 : f32 to vector<16x256xf32>
    %10 = arith.mulf %9, %8 : vector<16x256xf32>
    %cst_7 = arith.constant 4.471500e-02 : f32
    %11 = vector.broadcast %cst_7 : f32 to vector<16x256xf32>
    %12 = arith.mulf %11, %8 : vector<16x256xf32>
    %13 = arith.mulf %12, %8 : vector<16x256xf32>
    %14 = arith.mulf %13, %8 : vector<16x256xf32>
    %15 = arith.addf %8, %14 : vector<16x256xf32>
    %cst_8 = arith.constant 0.797884583 : f32
    %16 = vector.broadcast %cst_8 : f32 to vector<16x256xf32>
    %17 = arith.mulf %16, %15 : vector<16x256xf32>
    %18 = math.tanh %17 : vector<16x256xf32>
    %cst_9 = arith.constant 1.000000e+00 : f32
    %19 = vector.broadcast %cst_9 : f32 to vector<16x256xf32>
    %20 = arith.addf %19, %18 : vector<16x256xf32>
    %21 = arith.mulf %10, %20 : vector<16x256xf32>
    %22 = arith.truncf %21 : vector<16x256xf32> to vector<16x256xbf16>
    %c0_10 = arith.constant 0 : index
    %c0_11 = arith.constant 0 : index
    %23 = vector.load %arg8[%c0_10, %c0_11] : memref<16x256xbf16, #tpu.memory_space<vmem>>, vector<16x256xbf16>
    tpu.vector_store %arg8[%c0_10, %c0_11], %22 {strides = array<i32>} : memref<16x256xbf16, #tpu.memory_space<vmem>>, vector<16x256xbf16>,
    return
  }
  func.func @transform_0(%arg0: i32, %arg1: i32, %arg2: i32) -> (i32, i32) {
    %c0_i32 = arith.constant 0 : i32
    return %arg0, %arg2 : i32, i32
  }
  func.func @transform_1(%arg0: i32, %arg1: i32, %arg2: i32) -> (i32, i32) {
    %c0_i32 = arith.constant 0 : i32
    return %arg2, %arg1 : i32, i32
  }
  func.func @transform_2(%arg0: i32, %arg1: i32, %arg2: i32) -> (i32, i32) {
    %c0_i32 = arith.constant 0 : i32
    %c0_i32_0 = arith.constant 0 : i32
    return %c0_i32, %arg1 : i32, i32
  }
  func.func @transform_3(%arg0: i32, %arg1: i32, %arg2: i32) -> (i32, i32) {
    %c0_i32 = arith.constant 0 : i32
    %c0_i32_0 = arith.constant 0 : i32
    return %c0_i32, %arg2 : i32, i32
  }
  func.func @transform_4(%arg0: i32, %arg1: i32, %arg2: i32) -> (i32, i32) {
    %c0_i32 = arith.constant 0 : i32
    %c0_i32_0 = arith.constant 0 : i32
    return %c0_i32, %arg2 : i32, i32
  }
  func.func @transform_5(%arg0: i32, %arg1: i32, %arg2: i32) -> (i32, i32) {
    %c0_i32 = arith.constant 0 : i32
    return %arg0, %arg1 : i32, i32
  }
}

module attributes {stable_mosaic.version = 11 : i64} {
  func.func @_head_kernel(%arg0: i32, %arg1: memref<2x128xbf16, #tpu.memory_space<vmem>>, %arg2: memref<1x128xf32, #tpu.memory_space<vmem>>, %arg3: memref<1x128xf32, #tpu.memory_space<vmem>>, %arg4: memref<128x128xbf16, #tpu.memory_space<vmem>>, %arg5: memref<1x128xf32, #tpu.memory_space<vmem>>, %arg6: memref<128x128xbf16, #tpu.memory_space<vmem>>, %arg7: memref<1x128xf32, #tpu.memory_space<vmem>>, %arg8: memref<2x128xf32, #tpu.memory_space<vmem>>, %arg9: memref<2x128xf32, #tpu.memory_space<vmem>>) attributes {dimension_semantics = [#tpu.dimension_semantics<arbitrary>], iteration_bounds = array<i64: 1>, scalar_prefetch = 0 : i64, scratch_operands = 0 : i64, tpu.core_type = #tpu.core_type<tc>, window_params = [{pipeline_mode = #tpu.pipeline_mode<synchronous>, transform_indices = @transform_0, window_bounds = array<i64: 2, 128>}, {pipeline_mode = #tpu.pipeline_mode<synchronous>, transform_indices = @transform_1, window_bounds = array<i64: 1, 128>}, {pipeline_mode = #tpu.pipeline_mode<synchronous>, transform_indices = @transform_2, window_bounds = array<i64: 1, 128>}, {pipeline_mode = #tpu.pipeline_mode<synchronous>, transform_indices = @transform_3, window_bounds = array<i64: 128, 128>}, {pipeline_mode = #tpu.pipeline_mode<synchronous>, transform_indices = @transform_4, window_bounds = array<i64: 1, 128>}, {pipeline_mode = #tpu.pipeline_mode<synchronous>, transform_indices = @transform_5, window_bounds = array<i64: 128, 128>}, {pipeline_mode = #tpu.pipeline_mode<synchronous>, transform_indices = @transform_6, window_bounds = array<i64: 1, 128>}, {pipeline_mode = #tpu.pipeline_mode<synchronous>, transform_indices = @transform_7, window_bounds = array<i64: 2, 128>}, {pipeline_mode = #tpu.pipeline_mode<synchronous>, transform_indices = @transform_8, window_bounds = array<i64: 2, 128>}]} {
    %c0 = arith.constant 0 : index
    %c0_0 = arith.constant 0 : index
    %0 = vector.load %arg1[%c0, %c0_0] : memref<2x128xbf16, #tpu.memory_space<vmem>>, vector<2x128xbf16>
    %1 = arith.extf %0 : vector<2x128xbf16> to vector<2x128xf32>
    %cst = arith.constant dense<0.000000e+00> : vector<2xf32>
    %2 = vector.multi_reduction <add>, %1, %cst [1] : vector<2x128xf32> to vector<2xf32>
    %3 = vector.shape_cast %2 : vector<2xf32> to vector<2x1xf32>
    %cst_1 = arith.constant 1.280000e+02 : f32
    %4 = vector.broadcast %cst_1 : f32 to vector<2x1xf32>
    %5 = arith.divf %3, %4 : vector<2x1xf32>
    %6 = vector.broadcast %5 : vector<2x1xf32> to vector<2x128xf32>
    %7 = arith.subf %1, %6 : vector<2x128xf32>
    %8 = arith.mulf %7, %7 : vector<2x128xf32>
    %cst_2 = arith.constant dense<0.000000e+00> : vector<2xf32>
    %9 = vector.multi_reduction <add>, %8, %cst_2 [1] : vector<2x128xf32> to vector<2xf32>
    %10 = vector.shape_cast %9 : vector<2xf32> to vector<2x1xf32>
    %cst_3 = arith.constant 1.280000e+02 : f32
    %11 = vector.broadcast %cst_3 : f32 to vector<2x1xf32>
    %12 = arith.divf %10, %11 : vector<2x1xf32>
    %13 = vector.broadcast %5 : vector<2x1xf32> to vector<2x128xf32>
    %14 = arith.subf %1, %13 : vector<2x128xf32>
    %cst_4 = arith.constant 9.99999997E-7 : f32
    %15 = vector.broadcast %cst_4 : f32 to vector<2x1xf32>
    %16 = arith.addf %12, %15 : vector<2x1xf32>
    %17 = math.rsqrt %16 : vector<2x1xf32>
    %18 = vector.broadcast %17 : vector<2x1xf32> to vector<2x128xf32>
    %19 = arith.mulf %14, %18 : vector<2x128xf32>
    %c0_5 = arith.constant 0 : index
    %c0_6 = arith.constant 0 : index
    %20 = vector.load %arg2[%c0_5, %c0_6] : memref<1x128xf32, #tpu.memory_space<vmem>>, vector<1x128xf32>
    %21 = vector.broadcast %20 : vector<1x128xf32> to vector<2x128xf32>
    %22 = arith.mulf %19, %21 : vector<2x128xf32>
    %c0_7 = arith.constant 0 : index
    %c0_8 = arith.constant 0 : index
    %23 = vector.load %arg3[%c0_7, %c0_8] : memref<1x128xf32, #tpu.memory_space<vmem>>, vector<1x128xf32>
    %24 = vector.broadcast %23 : vector<1x128xf32> to vector<2x128xf32>
    %25 = arith.addf %22, %24 : vector<2x128xf32>
    %26 = arith.truncf %25 : vector<2x128xf32> to vector<2x128xbf16>
    %c0_9 = arith.constant 0 : index
    %c0_10 = arith.constant 0 : index
    %27 = vector.load %arg4[%c0_9, %c0_10] : memref<128x128xbf16, #tpu.memory_space<vmem>>, vector<128x128xbf16>
    %cst_11 = arith.constant dense<0.000000e+00> : vector<2x128xf32>
    %28 = tpu.matmul %26, %27, %cst_11 {dimension_numbers = #tpu.dot_dimension_numbers<[1], [0], [0], [1], [0, 0, 1, 1], [], []>} : vector<2x128xbf16>, vector<128x128xbf16>, vector<2x128xf32> -> vector<2x128xf32>
    %c0_12 = arith.constant 0 : index
    %c0_13 = arith.constant 0 : index
    %29 = vector.load %arg5[%c0_12, %c0_13] : memref<1x128xf32, #tpu.memory_space<vmem>>, vector<1x128xf32>
    %30 = vector.broadcast %29 : vector<1x128xf32> to vector<2x128xf32>
    %31 = arith.addf %28, %30 : vector<2x128xf32>
    %c0_14 = arith.constant 0 : index
    %c0_15 = arith.constant 0 : index
    %32 = vector.load %arg8[%c0_14, %c0_15] : memref<2x128xf32, #tpu.memory_space<vmem>>, vector<2x128xf32>
    tpu.vector_store %arg8[%c0_14, %c0_15], %31 {strides = array<i32>} : memref<2x128xf32, #tpu.memory_space<vmem>>, vector<2x128xf32>,
    %33 = arith.truncf %31 : vector<2x128xf32> to vector<2x128xbf16>
    %c0_16 = arith.constant 0 : index
    %c0_17 = arith.constant 0 : index
    %34 = vector.load %arg6[%c0_16, %c0_17] : memref<128x128xbf16, #tpu.memory_space<vmem>>, vector<128x128xbf16>
    %cst_18 = arith.constant dense<0.000000e+00> : vector<2x128xf32>
    %35 = tpu.matmul %33, %34, %cst_18 {dimension_numbers = #tpu.dot_dimension_numbers<[1], [0], [0], [1], [0, 0, 1, 1], [], []>} : vector<2x128xbf16>, vector<128x128xbf16>, vector<2x128xf32> -> vector<2x128xf32>
    %c0_19 = arith.constant 0 : index
    %c0_20 = arith.constant 0 : index
    %36 = vector.load %arg7[%c0_19, %c0_20] : memref<1x128xf32, #tpu.memory_space<vmem>>, vector<1x128xf32>
    %37 = vector.broadcast %36 : vector<1x128xf32> to vector<2x128xf32>
    %38 = arith.addf %35, %37 : vector<2x128xf32>
    %c0_21 = arith.constant 0 : index
    %c0_22 = arith.constant 0 : index
    %39 = vector.load %arg9[%c0_21, %c0_22] : memref<2x128xf32, #tpu.memory_space<vmem>>, vector<2x128xf32>
    tpu.vector_store %arg9[%c0_21, %c0_22], %38 {strides = array<i32>} : memref<2x128xf32, #tpu.memory_space<vmem>>, vector<2x128xf32>,
    return
  }
  func.func @transform_0(%arg0: i32) -> (i32, i32) {
    %c0_i32 = arith.constant 0 : i32
    %c0_i32_0 = arith.constant 0 : i32
    %c0_i32_1 = arith.constant 0 : i32
    return %c0_i32, %c0_i32_0 : i32, i32
  }
  func.func @transform_1(%arg0: i32) -> (i32, i32) {
    %c0_i32 = arith.constant 0 : i32
    %c0_i32_0 = arith.constant 0 : i32
    %c0_i32_1 = arith.constant 0 : i32
    return %c0_i32, %c0_i32_0 : i32, i32
  }
  func.func @transform_2(%arg0: i32) -> (i32, i32) {
    %c0_i32 = arith.constant 0 : i32
    %c0_i32_0 = arith.constant 0 : i32
    %c0_i32_1 = arith.constant 0 : i32
    return %c0_i32, %c0_i32_0 : i32, i32
  }
  func.func @transform_3(%arg0: i32) -> (i32, i32) {
    %c0_i32 = arith.constant 0 : i32
    %c0_i32_0 = arith.constant 0 : i32
    %c0_i32_1 = arith.constant 0 : i32
    return %c0_i32, %c0_i32_0 : i32, i32
  }
  func.func @transform_4(%arg0: i32) -> (i32, i32) {
    %c0_i32 = arith.constant 0 : i32
    %c0_i32_0 = arith.constant 0 : i32
    %c0_i32_1 = arith.constant 0 : i32
    return %c0_i32, %c0_i32_0 : i32, i32
  }
  func.func @transform_5(%arg0: i32) -> (i32, i32) {
    %c0_i32 = arith.constant 0 : i32
    %c0_i32_0 = arith.constant 0 : i32
    %c0_i32_1 = arith.constant 0 : i32
    return %c0_i32, %c0_i32_0 : i32, i32
  }
  func.func @transform_6(%arg0: i32) -> (i32, i32) {
    %c0_i32 = arith.constant 0 : i32
    %c0_i32_0 = arith.constant 0 : i32
    %c0_i32_1 = arith.constant 0 : i32
    return %c0_i32, %c0_i32_0 : i32, i32
  }
  func.func @transform_7(%arg0: i32) -> (i32, i32) {
    %c0_i32 = arith.constant 0 : i32
    %c0_i32_0 = arith.constant 0 : i32
    %c0_i32_1 = arith.constant 0 : i32
    return %c0_i32, %c0_i32_0 : i32, i32
  }
  func.func @transform_8(%arg0: i32) -> (i32, i32) {
    %c0_i32 = arith.constant 0 : i32
    %c0_i32_0 = arith.constant 0 : i32
    %c0_i32_1 = arith.constant 0 : i32
    return %c0_i32, %c0_i32_0 : i32, i32
  }
}

</mosaic_0001>

<llo_original>
// kernel: forward.13
$region0: #{forward.13}
  #allocation0 [shape = 'u32[]', space=smem, size = 0x4, offset = 0x4, fixed_abs, tag = 'smem constant byte address 0x4 - core index']
  #allocation1 [shape = 'u32[144,128]{1,0:T(1,128)}', space=vmem, size = 0x12000, scoped, tag = 'internal scratch']
  #allocation2 [shape = 'bf16[16,128]{1,0:T(16,128)(2,1)}', space=vmem, size = 0x1000, scoped, tag = 'scratch operand']
  %s0 = inlined_call_operand.vmem [shape: bf16[16,128], index: 0, kind: input, shape index: {}]
  %s1 = inlined_call_operand.vmem [shape: bf16[128,384], index: 1, kind: input, shape index: {}]
  %s2 = inlined_call_operand.vmem [shape: f32[1,384], index: 2, kind: input, shape index: {}]
  %s3 = inlined_call_operand.vmem [shape: f32[1,128], index: 3, kind: input, shape index: {}]
  %s4 = inlined_call_operand.vmem [shape: f32[1,128], index: 4, kind: input, shape index: {}]
  %s5 = inlined_call_operand.vmem [shape: bf16[16,384], index: 5, kind: output, shape index: {}]
  %s6 = sld [smem:[#allocation0]]
  $region135: #{forward.13} parent=0
    _
  %s8 = ssub.s32 1, %s6
  %s9 = scalar_select 0, %s8, %s6
  $region1: #{forward.13} parent=0
    #allocation3 [shape = 'u8[65536]{0}', space=vmem, size = 0x10000, scoped, tag = 'input window, operand 1']
    #allocation4 [shape = 'u8[8192]{0}', space=vmem, size = 0x2000, scoped, tag = 'output window, operand 0']
    loop: start=0, step=1, limit=5
    $region2: #{forward.13} parent=1 // loop_pre_header
      _
    $region3: #{forward.13} parent=1 // loop_header
      %s11 = sphi 0, %s15
      %p12 = scmp.ge.s32.totalorder %s11, 5
      %s18 = sphi 0, %s37
      %s19 = sphi 0, %s33
      %s20 = sphi 0, %s29
      %s21 = sphi 0, %s18
      %s22 = sphi 0, %s19
      %s23 = sphi 0, %s20
      %s24 = sphi 0, %s21
      %s25 = sphi 0, %s22
      %s26 = sphi 0, %s23
      %s42 = sphi 0, %s44
      %s45 = sphi 0, %s42
      %s46 = sphi 0, %s45
      %s62 = sphi 0, %s46
      %s70 = sphi 0, %s72
      %s73 = sphi 0, %s70
      %s74 = sphi 0, %s73
      %s90 = sphi 0, %s74
      %s96 = sphi 0, %s98
      %s99 = sphi 0, %s96
      %s100 = sphi 0, %s99
      %s116 = sphi 0, %s100
      %s122 = sphi 0, %s124
      %s125 = sphi 0, %s122
      %s126 = sphi 0, %s125
      %s142 = sphi 0, %s126
      %s148 = sphi 0, %s150
      %s151 = sphi 0, %s148
      %s152 = sphi 0, %s151
      %s168 = sphi 0, %s152
      %s176 = sphi 0, %s178
      %s179 = sphi 0, %s176
      %s180 = sphi 0, %s179
      %s196 = sphi 0, %s180
    $region4: #{forward.13} parent=1 // loop_header_branch
      %14 = sbr.rel (%p12) target = $region8
    $region5: #{forward.13} parent=1 // loop_body
      %s16 = ssub.s32 %s11, 1
      %s17 = ssub.s32 %s11, 2
      %s27 = sadd.s32 1, %s20
      %p28 = scmp.ge.s32.totalorder %s27, 1
      %s29 = scalar_select %p28, 0, %s27
      %s30 = sadd.s32 1, %s19
      %s31 = scalar_select %p28, %s30, %s19
      %p32 = scmp.ge.s32.totalorder %s31, 3
      %s33 = scalar_select %p32, 0, %s31
      %s34 = sadd.s32 1, %s18
      %s35 = scalar_select %p32, %s34, %s18
      %p36 = scmp.ge.s32.totalorder %s35, 1
      %s37 = scalar_select %p36, 0, %s35
      %s38 = ssub.s32 %s18, %s37
      %s39 = ssub.s32 %s20, %s29
      %s40 = sor.u32 %s38, %s39
      %p41 = scmp.eq.s32.totalorder %s40, 0
      %s43 = sadd.s32 %s42, 1
      %s44 = scalar_select %p41, %s42, %s43
      %p47 = pneg %p41
      %p48 = scmp.eq.s32.totalorder %s11, 2
      %p49 = por %p47, %p48
      %p50 = scmp.ne.s32.totalorder %s42, %s45
      %p51 = scmp.eq.s32.totalorder %s11, 0
      %p52 = por %p50, %p51
      %p53 = scmp.ne.s32.totalorder %s42, %s45
      %p54 = scmp.eq.s32.totalorder %s16, 2
      %p55 = por %p53, %p54
      %p56 = scmp.ne.s32.totalorder %s45, %s46
      %p57 = scmp.eq.s32.totalorder %s16, 0
      %p58 = por %p56, %p57
      %p59 = scmp.ne.s32.totalorder %s45, %s46
      %p60 = scmp.eq.s32.totalorder %s17, 2
      %p61 = por %p59, %p60
      %p63 = scmp.ne.s32.totalorder %s46, %s62
      %p64 = scmp.eq.s32.totalorder %s17, 0
      %p65 = por %p63, %p64
      %s66 = ssub.s32 %s20, %s29
      %s67 = ssub.s32 %s19, %s33
      %s68 = sor.u32 %s66, %s67
      %p69 = scmp.eq.s32.totalorder %s68, 0
      %s71 = sadd.s32 %s70, 1
      %s72 = scalar_select %p69, %s70, %s71
      %p75 = pneg %p69
      %p76 = scmp.eq.s32.totalorder %s11, 2
      %p77 = por %p75, %p76
      %p78 = scmp.ne.s32.totalorder %s70, %s73
      %p79 = scmp.eq.s32.totalorder %s11, 0
      %p80 = por %p78, %p79
      %p81 = scmp.ne.s32.totalorder %s70, %s73
      %p82 = scmp.eq.s32.totalorder %s16, 2
      %p83 = por %p81, %p82
      %p84 = scmp.ne.s32.totalorder %s73, %s74
      %p85 = scmp.eq.s32.totalorder %s16, 0
      %p86 = por %p84, %p85
      %p87 = scmp.ne.s32.totalorder %s73, %s74
      %p88 = scmp.eq.s32.totalorder %s17, 2
      %p89 = por %p87, %p88
      %p91 = scmp.ne.s32.totalorder %s74, %s90
      %p92 = scmp.eq.s32.totalorder %s17, 0
      %p93 = por %p91, %p92
      %s94 = ssub.s32 %s19, %s33
      %p95 = scmp.eq.s32.totalorder %s94, 0
      %s97 = sadd.s32 %s96, 1
      %s98 = scalar_select %p95, %s96, %s97
      %p101 = pneg %p95
      %p102 = scmp.eq.s32.totalorder %s11, 2
      %p103 = por %p101, %p102
      %p104 = scmp.ne.s32.totalorder %s96, %s99
      %p105 = scmp.eq.s32.totalorder %s11, 0
      %p106 = por %p104, %p105
      %p107 = scmp.ne.s32.totalorder %s96, %s99
      %p108 = scmp.eq.s32.totalorder %s16, 2
      %p109 = por %p107, %p108
      %p110 = scmp.ne.s32.totalorder %s99, %s100
      %p111 = scmp.eq.s32.totalorder %s16, 0
      %p112 = por %p110, %p111
      %p113 = scmp.ne.s32.totalorder %s99, %s100
      %p114 = scmp.eq.s32.totalorder %s17, 2
      %p115 = por %p113, %p114
      %p117 = scmp.ne.s32.totalorder %s100, %s116
      %p118 = scmp.eq.s32.totalorder %s17, 0
      %p119 = por %p117, %p118
      %s120 = ssub.s32 %s20, %s29
      %p121 = scmp.eq.s32.totalorder %s120, 0
      %s123 = sadd.s32 %s122, 1
      %s124 = scalar_select %p121, %s122, %s123
      %p127 = pneg %p121
      %p128 = scmp.eq.s32.totalorder %s11, 2
      %p129 = por %p127, %p128
      %p130 = scmp.ne.s32.totalorder %s122, %s125
      %p131 = scmp.eq.s32.totalorder %s11, 0
      %p132 = por %p130, %p131
      %p133 = scmp.ne.s32.totalorder %s122, %s125
      %p134 = scmp.eq.s32.totalorder %s16, 2
      %p135 = por %p133, %p134
      %p136 = scmp.ne.s32.totalorder %s125, %s126
      %p137 = scmp.eq.s32.totalorder %s16, 0
      %p138 = por %p136, %p137
      %p139 = scmp.ne.s32.totalorder %s125, %s126
      %p140 = scmp.eq.s32.totalorder %s17, 2
      %p141 = por %p139, %p140
      %p143 = scmp.ne.s32.totalorder %s126, %s142
      %p144 = scmp.eq.s32.totalorder %s17, 0
      %p145 = por %p143, %p144
      %s146 = ssub.s32 %s20, %s29
      %p147 = scmp.eq.s32.totalorder %s146, 0
      %s149 = sadd.s32 %s148, 1
      %s150 = scalar_select %p147, %s148, %s149
      %p153 = pneg %p147
      %p154 = scmp.eq.s32.totalorder %s11, 2
      %p155 = por %p153, %p154
      %p156 = scmp.ne.s32.totalorder %s148, %s151
      %p157 = scmp.eq.s32.totalorder %s11, 0
      %p158 = por %p156, %p157
      %p159 = scmp.ne.s32.totalorder %s148, %s151
      %p160 = scmp.eq.s32.totalorder %s16, 2
      %p161 = por %p159, %p160
      %p162 = scmp.ne.s32.totalorder %s151, %s152
      %p163 = scmp.eq.s32.totalorder %s16, 0
      %p164 = por %p162, %p163
      %p165 = scmp.ne.s32.totalorder %s151, %s152
      %p166 = scmp.eq.s32.totalorder %s17, 2
      %p167 = por %p165, %p166
      %p169 = scmp.ne.s32.totalorder %s152, %s168
      %p170 = scmp.eq.s32.totalorder %s17, 0
      %p171 = por %p169, %p170
      %s172 = ssub.s32 %s18, %s37
      %s173 = ssub.s32 %s19, %s33
      %s174 = sor.u32 %s172, %s173
      %p175 = scmp.eq.s32.totalorder %s174, 0
      %s177 = sadd.s32 %s176, 1
      %s178 = scalar_select %p175, %s176, %s177
      %p181 = pneg %p175
      %p182 = scmp.eq.s32.totalorder %s11, 2
      %p183 = por %p181, %p182
      %p184 = scmp.ne.s32.totalorder %s176, %s179
      %p185 = scmp.eq.s32.totalorder %s11, 0
      %p186 = por %p184, %p185
      %p187 = scmp.ne.s32.totalorder %s176, %s179
      %p188 = scmp.eq.s32.totalorder %s16, 2
      %p189 = por %p187, %p188
      %p190 = scmp.ne.s32.totalorder %s179, %s180
      %p191 = scmp.eq.s32.totalorder %s16, 0
      %p192 = por %p190, %p191
      %p193 = scmp.ne.s32.totalorder %s179, %s180
      %p194 = scmp.eq.s32.totalorder %s17, 2
      %p195 = por %p193, %p194
      %p197 = scmp.ne.s32.totalorder %s180, %s196
      %p198 = scmp.eq.s32.totalorder %s17, 0
      %p199 = por %p197, %p198
      %p200 = scmp.le.s32.totalorder 1, %s11
      %p201 = scmp.lt.s32.totalorder %s11, 4
      %p202 = pnand %p200, %p201
      %p203 = pneg %p202
      // Predicated region
      $region9: #{forward.13} parent=5 // pred_check
        _
      $region10: #{forward.13} parent=5 // pred_check_branch
        %205 = sbr.rel (%p202) target = $region12
      $region11: #{forward.13} parent=5 // pred_region
        %s206 = ssub.s32 %s11, 1
        // Predicated region
        $region13: #{forward.13} parent=11 // pred_check
          %p207 = pneg %p58
        $region14: #{forward.13} parent=11 // pred_check_branch
          %209 = sbr.rel (%p207) target = $region16
        $region15: #{forward.13} parent=11 // pred_region
          %s210 = smul.u32 2, %s21
          %p211 = scmp.lt.s32.totalorder %s210, 1
          %s212 = scalar_select %p211, %s210, 1
          %p213 = scmp.lt.s32.totalorder %s23, 0
          %s214 = scalar_select %p213, %s23, 0
          %s215 = sadd.s32 %s214, %s212
          %s216 = smul.addr %s215, 4
          %s217 = scalar_lea.vmem %s0, %s216
          %s218 = smul.u32 2, %s21
        $region16: #{forward.13} parent=11 // pred_fallthru
          _
        // Predicated region
        $region17: #{forward.13} parent=11 // pred_check
          %p219 = pneg %p138
        $region18: #{forward.13} parent=11 // pred_check_branch
          %221 = sbr.rel (%p219) target = $region20
        $region19: #{forward.13} parent=11 // pred_region
          %p222 = scmp.lt.s32.totalorder %s23, 0
          %s223 = scalar_select %p222, %s23, 0
          %s224 = scalar_lea.vmem %s3, %s223
        $region20: #{forward.13} parent=11 // pred_fallthru
          _
        // Predicated region
        $region21: #{forward.13} parent=11 // pred_check
          %p225 = pneg %p164
        $region22: #{forward.13} parent=11 // pred_check_branch
          %227 = sbr.rel (%p225) target = $region24
        $region23: #{forward.13} parent=11 // pred_region
          %p228 = scmp.lt.s32.totalorder %s23, 0
          %s229 = scalar_select %p228, %s23, 0
          %s230 = scalar_lea.vmem %s4, %s229
        $region24: #{forward.13} parent=11 // pred_fallthru
          _
      $region12: #{forward.13} parent=5 // pred_fallthru
        _
      %p231 = scmp.lt.s32.totalorder %s11, 3
      // Predicated region
      $region25: #{forward.13} parent=5 // pred_check
        %p232 = pneg %p231
      $region26: #{forward.13} parent=5 // pred_check_branch
        %234 = sbr.rel (%p232) target = $region28
      $region27: #{forward.13} parent=5 // pred_region
        // Predicated region
        $region29: #{forward.13} parent=27 // pred_check
          %p235 = pneg %p80
        $region30: #{forward.13} parent=27 // pred_check_branch
          %237 = sbr.rel (%p235) target = $region32
        $region31: #{forward.13} parent=27 // pred_region
          %s238 = sand.u32 %s70, 1
          %s239 = sand.u32 %s70, 1
          %s240 = smul.addr %s239, 64
          %s241 = scalar_lea.vmem [#allocation3], %s240
          %s242 = smul.u32 16, %s20
          %s243 = smul.addr %s242, 3
          %s244 = sadd.s32 %s19, %s243
          %s245 = smul.addr %s244, 4
          %s246 = scalar_lea.vmem %s1, %s245
          // Predicated region
          $region33: #{forward.13} parent=31 // pred_check
            _
          $region34: #{forward.13} parent=31 // pred_check_branch
            %248 = sbr.rel (0) target = $region36
          $region35: #{forward.13} parent=31 // pred_region
            // Predicated region
            $region37: #{forward.13} parent=35 // pred_check
              _
            $region38: #{forward.13} parent=35 // pred_check_branch
              %250 = sbr.rel target = $region40
            $region39: #{forward.13} parent=35 // pred_region
              // Predicated region
              $region52: #{forward.13} parent=39 // pred_check
                _
              $region53: #{forward.13} parent=39 // pred_check_branch
                %295 = sbr.rel (0) target = $region55
              $region54: #{forward.13} parent=39 // pred_region
                loop: start=0, step=1, limit=1
                $region56: #{forward.13} parent=54 // loop_pre_header
                  _
                $region57: #{forward.13} parent=54 // loop_header
                  %s297 = sphi 0, %s301
                  %p298 = scmp.ge.s32.totalorder %s297, 1
                  %s302 = sphi %s246, %s246
                  %s303 = sphi %s241, %s241
                $region58: #{forward.13} parent=54 // loop_header_branch
                  %300 = sbr.rel (%p298) target = $region62
                $region59: #{forward.13} parent=54 // loop_body
                  _
                $region60: #{forward.13} parent=54 // loop_footer
                  %s301 = sadd.s32 1, %s297
                $region61: #{forward.13} parent=54 // loop_footer_branch
                  %296 = sbr.rel target = $region57
                $region62: #{forward.13} parent=54 // loop_exit
                  _
                loop: start=0, step=1, limit=1
                $region63: #{forward.13} parent=54 // loop_pre_header
                  _
                $region64: #{forward.13} parent=54 // loop_header
                  %s306 = sphi 0, %s310
                  %p307 = scmp.ge.s32.totalorder %s306, 1
                  %s311 = sphi %s246, %s246
                  %s312 = sphi %s241, %s241
                $region65: #{forward.13} parent=54 // loop_header_branch
                  %309 = sbr.rel (%p307) target = $region69
                $region66: #{forward.13} parent=54 // loop_body
                  %v313 = vld [vmem:[%s311] sm:$0xf]
                  %314 = vst [vmem:[%s312] sm:$0xf] %v313
                  %v315 = vld [vmem:[%s311 + $0xc] sm:$0xf]
                  %316 = vst [vmem:[%s312 + $0x4] sm:$0xf] %v315
                  %v317 = vld [vmem:[%s311 + $0x18] sm:$0xf]
                  %318 = vst [vmem:[%s312 + $0x8] sm:$0xf] %v317
                  %v319 = vld [vmem:[%s311 + $0x24] sm:$0xf]
                  %320 = vst [vmem:[%s312 + $0xc] sm:$0xf] %v319
                  %v321 = vld [vmem:[%s311 + $0x30] sm:$0xf]
                  %322 = vst [vmem:[%s312 + $0x10] sm:$0xf] %v321
                  %v323 = vld [vmem:[%s311 + $0x3c] sm:$0xf]
                  %324 = vst [vmem:[%s312 + $0x14] sm:$0xf] %v323
                  %v325 = vld [vmem:[%s311 + $0x48] sm:$0xf]
                  %326 = vst [vmem:[%s312 + $0x18] sm:$0xf] %v325
                  %v327 = vld [vmem:[%s311 + $0x54] sm:$0xf]
                  %328 = vst [vmem:[%s312 + $0x1c] sm:$0xf] %v327
                  %v329 = vld [vmem:[%s311 + $0x60] sm:$0xf]
                  %330 = vst [vmem:[%s312 + $0x20] sm:$0xf] %v329
                  %v331 = vld [vmem:[%s311 + $0x6c] sm:$0xf]
                  %332 = vst [vmem:[%s312 + $0x24] sm:$0xf] %v331
                  %v333 = vld [vmem:[%s311 + $0x78] sm:$0xf]
                  %334 = vst [vmem:[%s312 + $0x28] sm:$0xf] %v333
                  %v335 = vld [vmem:[%s311 + $0x84] sm:$0xf]
                  %336 = vst [vmem:[%s312 + $0x2c] sm:$0xf] %v335
                  %v337 = vld [vmem:[%s311 + $0x90] sm:$0xf]
                  %338 = vst [vmem:[%s312 + $0x30] sm:$0xf] %v337
                  %v339 = vld [vmem:[%s311 + $0x9c] sm:$0xf]
                  %340 = vst [vmem:[%s312 + $0x34] sm:$0xf] %v339
                  %v341 = vld [vmem:[%s311 + $0xa8] sm:$0xf]
                  %342 = vst [vmem:[%s312 + $0x38] sm:$0xf] %v341
                  %v343 = vld [vmem:[%s311 + $0xb4] sm:$0xf]
                  %344 = vst [vmem:[%s312 + $0x3c] sm:$0xf] %v343
                $region67: #{forward.13} parent=54 // loop_footer
                  %s310 = sadd.s32 1, %s306
                $region68: #{forward.13} parent=54 // loop_footer_branch
                  %305 = sbr.rel target = $region64
                $region69: #{forward.13} parent=54 // loop_exit
                  _
              $region55: #{forward.13} parent=39 // pred_fallthru
                _
            $region40: #{forward.13} parent=35 // pred_fallthru
              _
            // Predicated region
            $region41: #{forward.13} parent=35 // pred_check
              _
            $region42: #{forward.13} parent=35 // pred_check_branch
              %252 = sbr.rel (0) target = $region44
            $region43: #{forward.13} parent=35 // pred_region
              loop: start=0, step=1, limit=1
              $region45: #{forward.13} parent=43 // loop_pre_header
                _
              $region46: #{forward.13} parent=43 // loop_header
                %s255 = sphi 0, %s259
                %p256 = scmp.ge.s32.totalorder %s255, 1
                %s260 = sphi %s246, %s246
                %s261 = sphi %s241, %s241
              $region47: #{forward.13} parent=43 // loop_header_branch
                %258 = sbr.rel (%p256) target = $region51
              $region48: #{forward.13} parent=43 // loop_body
                %v262 = vld [vmem:[%s260] sm:$0xf]
                %263 = vst [vmem:[%s261] sm:$0xf] %v262
                %v264 = vld [vmem:[%s260 + $0xc] sm:$0xf]
                %265 = vst [vmem:[%s261 + $0x4] sm:$0xf] %v264
                %v266 = vld [vmem:[%s260 + $0x18] sm:$0xf]
                %267 = vst [vmem:[%s261 + $0x8] sm:$0xf] %v266
                %v268 = vld [vmem:[%s260 + $0x24] sm:$0xf]
                %269 = vst [vmem:[%s261 + $0xc] sm:$0xf] %v268
                %v270 = vld [vmem:[%s260 + $0x30] sm:$0xf]
                %271 = vst [vmem:[%s261 + $0x10] sm:$0xf] %v270
                %v272 = vld [vmem:[%s260 + $0x3c] sm:$0xf]
                %273 = vst [vmem:[%s261 + $0x14] sm:$0xf] %v272
                %v274 = vld [vmem:[%s260 + $0x48] sm:$0xf]
                %275 = vst [vmem:[%s261 + $0x18] sm:$0xf] %v274
                %v276 = vld [vmem:[%s260 + $0x54] sm:$0xf]
                %277 = vst [vmem:[%s261 + $0x1c] sm:$0xf] %v276
                %v278 = vld [vmem:[%s260 + $0x60] sm:$0xf]
                %279 = vst [vmem:[%s261 + $0x20] sm:$0xf] %v278
                %v280 = vld [vmem:[%s260 + $0x6c] sm:$0xf]
                %281 = vst [vmem:[%s261 + $0x24] sm:$0xf] %v280
                %v282 = vld [vmem:[%s260 + $0x78] sm:$0xf]
                %283 = vst [vmem:[%s261 + $0x28] sm:$0xf] %v282
                %v284 = vld [vmem:[%s260 + $0x84] sm:$0xf]
                %285 = vst [vmem:[%s261 + $0x2c] sm:$0xf] %v284
                %v286 = vld [vmem:[%s260 + $0x90] sm:$0xf]
                %287 = vst [vmem:[%s261 + $0x30] sm:$0xf] %v286
                %v288 = vld [vmem:[%s260 + $0x9c] sm:$0xf]
                %289 = vst [vmem:[%s261 + $0x34] sm:$0xf] %v288
                %v290 = vld [vmem:[%s260 + $0xa8] sm:$0xf]
                %291 = vst [vmem:[%s261 + $0x38] sm:$0xf] %v290
                %v292 = vld [vmem:[%s260 + $0xb4] sm:$0xf]
                %293 = vst [vmem:[%s261 + $0x3c] sm:$0xf] %v292
              $region49: #{forward.13} parent=43 // loop_footer
                %s259 = sadd.s32 1, %s255
              $region50: #{forward.13} parent=43 // loop_footer_branch
                %254 = sbr.rel target = $region46
              $region51: #{forward.13} parent=43 // loop_exit
                _
            $region44: #{forward.13} parent=35 // pred_fallthru
              _
          $region36: #{forward.13} parent=31 // pred_fallthru
            _
          %345 = vnop
        $region32: #{forward.13} parent=27 // pred_fallthru
          _
        // Predicated region
        $region70: #{forward.13} parent=27 // pred_check
          %p346 = pneg %p106
        $region71: #{forward.13} parent=27 // pred_check_branch
          %348 = sbr.rel (%p346) target = $region73
        $region72: #{forward.13} parent=27 // pred_region
          %p349 = scmp.lt.s32.totalorder %s19, 2
          %s350 = scalar_select %p349, %s19, 2
          %s351 = scalar_lea.vmem %s2, %s350
        $region73: #{forward.13} parent=27 // pred_fallthru
          _
      $region28: #{forward.13} parent=5 // pred_fallthru
        _
      %p352 = scmp.le.s32.totalorder 1, %s11
      %p353 = scmp.lt.s32.totalorder %s11, 4
      %p354 = pnand %p352, %p353
      %p355 = pneg %p354
      // Predicated region
      $region74: #{forward.13} parent=5 // pred_check
        _
      $region75: #{forward.13} parent=5 // pred_check_branch
        %357 = sbr.rel (%p354) target = $region77
      $region76: #{forward.13} parent=5 // pred_region
        %s358 = ssub.s32 %s11, 1
        %s359 = sand.u32 %s73, 1
        %s360 = sand.u32 %s73, 1
        %s361 = smul.addr %s360, 64
        %s362 = scalar_lea.vmem [#allocation3], %s361
        // Predicated region
        $region78: #{forward.13} parent=76 // pred_check
          %p363 = pneg %p86
        $region79: #{forward.13} parent=76 // pred_check_branch
          %365 = sbr.rel (%p363) target = $region81
        $region80: #{forward.13} parent=76 // pred_region
          _
        $region81: #{forward.13} parent=76 // pred_fallthru
          _
        %s366 = smul.u32 2, %s21
        %p367 = scmp.lt.s32.totalorder %s366, 1
        %s368 = scalar_select %p367, %s366, 1
        %p369 = scmp.lt.s32.totalorder %s23, 0
        %s370 = scalar_select %p369, %s23, 0
        %s371 = sadd.s32 %s370, %s368
        %s372 = smul.addr %s371, 4
        %s373 = scalar_lea.vmem %s0, %s372
        %p374 = pneg %p58
        %p375 = pneg %p55
        %s376 = sand.u32 %s73, 1
        %s377 = sand.u32 %s73, 1
        %s378 = smul.addr %s377, 64
        %s379 = scalar_lea.vmem [#allocation3], %s378
        %p380 = pneg %p86
        %p381 = pneg %p83
        %p382 = scmp.lt.s32.totalorder %s22, 2
        %s383 = scalar_select %p382, %s22, 2
        %s384 = scalar_lea.vmem %s2, %s383
        %p385 = pneg %p112
        %p386 = pneg %p109
        %p387 = scmp.lt.s32.totalorder %s23, 0
        %s388 = scalar_select %p387, %s23, 0
        %s389 = scalar_lea.vmem %s3, %s388
        %p390 = pneg %p138
        %p391 = pneg %p135
        %p392 = scmp.lt.s32.totalorder %s23, 0
        %s393 = scalar_select %p392, %s23, 0
        %s394 = scalar_lea.vmem %s4, %s393
        %p395 = pneg %p164
        %p396 = pneg %p161
        %p397 = pneg %p192
        %p398 = pneg %p189
        %s399 = sand.u32 %s179, 1
        %s400 = sand.u32 %s179, 1
        %s401 = smul.addr %s400, 8
        %s402 = scalar_lea.vmem [#allocation4], %s401
        %s403 = smul.u32 2, %s21
        %p404 = scmp.lt.s32.totalorder %s403, 1
        %s405 = scalar_select %p404, %s403, 1
        %p406 = scmp.lt.s32.totalorder %s23, 0
        %s407 = scalar_select %p406, %s23, 0
        %s408 = sadd.s32 %s407, %s405
        %s409 = smul.addr %s408, 4
        %s410 = scalar_lea.vmem %s0, %s409
        %s411 = smul.u32 2, %s21
        %s412 = smul.u32 16, %s23
        %p413 = scmp.lt.s32.totalorder %s22, 2
        %s414 = scalar_select %p413, %s22, 2
        %s415 = scalar_lea.vmem %s2, %s414
        %p416 = scmp.lt.s32.totalorder %s23, 0
        %s417 = scalar_select %p416, %s23, 0
        %s418 = scalar_lea.vmem %s3, %s417
        %p419 = scmp.lt.s32.totalorder %s23, 0
        %s420 = scalar_select %p419, %s23, 0
        %s421 = scalar_lea.vmem %s4, %s420
        %s422 = smul.u32 2, %s21
        %p424 = scmp.eq.s32.totalorder %s22, 0
        // Predicated region
        $region82: #{forward.13} parent=76 // pred_check
          %p425 = pneg %p424
        $region83: #{forward.13} parent=76 // pred_check_branch
          %427 = sbr.rel (%p425) target = $region85
        $region84: #{forward.13} parent=76 // pred_region
          %v428 = vld [vmem:[%s410] sm:$0xf]
          %v429 = vld [vmem:[%s410 + $0x4] sm:$0xf]
          %v430 = vunpack.c.l.bf16 %v428
          %v431 = vunpack.c.l.bf16 %v429
          %432 = vadd.xlane.f32.xlu0 %v430
          %v433 = vpop.xlane.xlu0 %432
          %434 = vadd.xlane.f32.xlu0 %v431
          %v435 = vpop.xlane.xlu0 %434
          %v436 = vrcp.pop 128.0
          %v437 = vmul.f32 %v433, %v436
          %v438 = vmul.f32 %v435, %v436
          %v439 = vsub.f32 %v430, %v437
          %v440 = vsub.f32 %v431, %v438
          %v441 = vmul.f32 %v439, %v439
          %v442 = vmul.f32 %v440, %v440
          %443 = vadd.xlane.f32.xlu0 %v441
          %v444 = vpop.xlane.xlu0 %443
          %445 = vadd.xlane.f32.xlu0 %v442
          %v446 = vpop.xlane.xlu0 %445
          %v447 = vmul.f32 %v444, %v436
          %v448 = vmul.f32 %v446, %v436
          %v449 = vadd.f32 %v447, 1e-06
          %v450 = vadd.f32 %v448, 1e-06
          %v451 = vrsqrt.pop %v449
          %v452 = vrsqrt.pop %v450
          %v453 = vmul.f32 %v439, %v451
          %v454 = vmul.f32 %v440, %v452
          %v455 = vld [vmem:[%s418] sm:$0x1]
          %v457 = vlaneseq
          %v458 = vshrl.u32 %v457, 7
          %v459 = vsub.s32 0, %v458
          %v460 = vrot.slane %v455, %v459
          %v462 = vmul.f32 %v453, %v460
          %v463 = vmul.f32 %v454, %v460
          %v464 = vld [vmem:[%s421] sm:$0x1]
          %v466 = vlaneseq
          %v467 = vshrl.u32 %v466, 7
          %v468 = vsub.s32 0, %v467
          %v469 = vrot.slane %v464, %v468
          %v471 = vadd.f32 %v462, %v469
          %v472 = vadd.f32 %v463, %v469
          %v473 = vpack.c.bf16 %v472, %v471
          %474 = vst [vmem:[#allocation2] sm:$0xff] %v473
        $region85: #{forward.13} parent=76 // pred_fallthru
          _
        %v475 = vld [vmem:[#allocation2] sm:$0xff]
        %v476 = vld [vmem:[%s362] sm:$0xf]
        %v477 = vld [vmem:[%s362 + $0x4] sm:$0xf]
        %v478 = vld [vmem:[%s362 + $0x8] sm:$0xf]
        %v479 = vld [vmem:[%s362 + $0xc] sm:$0xf]
        %v480 = vld [vmem:[%s362 + $0x10] sm:$0xf]
        %v481 = vld [vmem:[%s362 + $0x14] sm:$0xf]
        %v482 = vld [vmem:[%s362 + $0x18] sm:$0xf]
        %v483 = vld [vmem:[%s362 + $0x1c] sm:$0xf]
        %v484 = vld [vmem:[%s362 + $0x20] sm:$0xf]
        %v485 = vld [vmem:[%s362 + $0x24] sm:$0xf]
        %v486 = vld [vmem:[%s362 + $0x28] sm:$0xf]
        %v487 = vld [vmem:[%s362 + $0x2c] sm:$0xf]
        %v488 = vld [vmem:[%s362 + $0x30] sm:$0xf]
        %v489 = vld [vmem:[%s362 + $0x34] sm:$0xf]
        %v490 = vld [vmem:[%s362 + $0x38] sm:$0xf]
        %v491 = vld [vmem:[%s362 + $0x3c] sm:$0xf]
        %v492 = vld [vmem:[%s415] sm:$0x1]
        %v494 = vlaneseq
        %v495 = vshrl.u32 %v494, 7
        %v496 = vsub.s32 0, %v495
        %v497 = vrot.slane %v492, %v496
        %v515 = vunpack.c.l.b16 %v476
        %v516 = vunpack.c.l.b16 %v477
        %v517 = vunpack.c.l.b16 %v478
        %v518 = vunpack.c.l.b16 %v479
        %v519 = vunpack.c.l.b16 %v480
        %v520 = vunpack.c.l.b16 %v481
        %v521 = vunpack.c.l.b16 %v482
        %v522 = vunpack.c.l.b16 %v483
        %v523 = vunpack.c.l.b16 %v484
        %v524 = vunpack.c.l.b16 %v485
        %v525 = vunpack.c.l.b16 %v486
        %v526 = vunpack.c.l.b16 %v487
        %v527 = vunpack.c.l.b16 %v488
        %v528 = vunpack.c.l.b16 %v489
        %v529 = vunpack.c.l.b16 %v490
        %v530 = vunpack.c.l.b16 %v491
        %v531 = vpack.c.b16 %v516, %v515
        %v532 = vpack.c.b16 %v518, %v517
        %v533 = vpack.c.b16 %v520, %v519
        %v534 = vpack.c.b16 %v522, %v521
        %v535 = vpack.c.b16 %v524, %v523
        %v536 = vpack.c.b16 %v526, %v525
        %v537 = vpack.c.b16 %v528, %v527
        %v538 = vpack.c.b16 %v530, %v529
        %547 = vmatprep.subr.bf16.mxu0 0
        %548 = vmatpush1.bf16.msra.mxu0 %v531
        %549 = vmatprep.subr.bf16.mxu0 0
        %550 = vmatpush1.bf16.msra.mxu0 %v532
        %551 = vmatprep.subr.bf16.mxu0 0
        %552 = vmatpush1.bf16.msra.mxu0 %v533
        %553 = vmatprep.subr.bf16.mxu0 0
        %554 = vmatpush1.bf16.msra.mxu0 %v534
        %555 = vmatprep.subr.bf16.mxu0 0
        %556 = vmatpush1.bf16.msra.mxu0 %v535
        %557 = vmatprep.subr.bf16.mxu0 0
        %558 = vmatpush1.bf16.msra.mxu0 %v536
        %559 = vmatprep.subr.bf16.mxu0 0
        %560 = vmatpush1.bf16.msra.mxu0 %v537
        %561 = vmatprep.subr.bf16.mxu0 0
        %562 = vmatpush1.bf16.msra.mxu0 %v538
        %563 = vmatprep.subr.bf16.mxu0 0
        %564 = vmatpush1.bf16.msra.mxu0 0
        %565 = vmatprep.subr.bf16.mxu0 0
        %566 = vmatpush1.bf16.msra.mxu0 0
        %567 = vmatprep.subr.bf16.mxu0 0
        %568 = vmatpush1.bf16.msra.mxu0 0
        %569 = vmatprep.subr.bf16.mxu0 0
        %570 = vmatpush1.bf16.msra.mxu0 0
        %571 = vmatprep.subr.bf16.mxu0 0
        %572 = vmatpush1.bf16.msra.mxu0 0
        %573 = vmatprep.subr.bf16.mxu0 0
        %574 = vmatpush1.bf16.msra.mxu0 0
        %575 = vmatprep.subr.bf16.mxu0 0
        %576 = vmatpush1.bf16.msra.mxu0 0
        %577 = vmatprep.subr.bf16.mxu0 0
        %578 = vmatpush1.bf16.msra.mxu0 0
        %579 = vmatprep.mubr.bf16.mxu0 0
        %580 = vmatmul.mubr.bf16.gmra.mrb[0].mxu0 %v475
        %v581 = vpop.f32.mrb[0].mxu0
        %v582 = vadd.f32 %v497, %v581
        %v583 = vpop.f32.mrb[0].mxu0
        %v584 = vpop.f32.mrb[0].mxu0
        %v585 = vadd.f32 %v497, %v584
        %v586 = vpop.f32.mrb[0].mxu0
        %587 = vdwg.mxu0
        %v588 = vpack.c.bf16 %v585, %v582
        %v590 = vunpack.c.l.b16 %v588
        %v591 = vunpack.c.h.b16 %v588
        %v592 = vpack.c.b16 %v590, %v590
        %v593 = vpack.c.b16 %v591, %v591
        %596 = vst [vmem:[%s402] sm:$0xf] %v592
        %597 = vst [vmem:[%s402 + $0x4] sm:$0xf] %v593
        %s598 = sand.u32 %s179, 1
        %s599 = sand.u32 %s179, 1
        %s600 = smul.addr %s599, 8
        %s601 = scalar_lea.vmem [#allocation4], %s600
        // Predicated region
        $region86: #{forward.13} parent=76 // pred_check
          %p602 = pneg %p189
        $region87: #{forward.13} parent=76 // pred_check_branch
          %604 = sbr.rel (%p602) target = $region89
        $region88: #{forward.13} parent=76 // pred_region
          %s605 = smul.u32 2, %s21
          %s606 = smul.addr %s605, 3
          %s607 = sadd.s32 %s22, %s606
          %s608 = smul.addr %s607, 4
          %s609 = scalar_lea.vmem %s5, %s608
          // Predicated region
          $region90: #{forward.13} parent=88 // pred_check
            _
          $region91: #{forward.13} parent=88 // pred_check_branch
            %611 = sbr.rel (0) target = $region93
          $region92: #{forward.13} parent=88 // pred_region
            // Predicated region
            $region94: #{forward.13} parent=92 // pred_check
              _
            $region95: #{forward.13} parent=92 // pred_check_branch
              %613 = sbr.rel target = $region97
            $region96: #{forward.13} parent=92 // pred_region
              // Predicated region
              $region109: #{forward.13} parent=96 // pred_check
                _
              $region110: #{forward.13} parent=96 // pred_check_branch
                %630 = sbr.rel (0) target = $region112
              $region111: #{forward.13} parent=96 // pred_region
                loop: start=0, step=1, limit=1
                $region113: #{forward.13} parent=111 // loop_pre_header
                  _
                $region114: #{forward.13} parent=111 // loop_header
                  %s632 = sphi 0, %s636
                  %p633 = scmp.ge.s32.totalorder %s632, 1
                  %s637 = sphi %s601, %s601
                  %s638 = sphi %s609, %s609
                $region115: #{forward.13} parent=111 // loop_header_branch
                  %635 = sbr.rel (%p633) target = $region119
                $region116: #{forward.13} parent=111 // loop_body
                  _
                $region117: #{forward.13} parent=111 // loop_footer
                  %s636 = sadd.s32 1, %s632
                $region118: #{forward.13} parent=111 // loop_footer_branch
                  %631 = sbr.rel target = $region114
                $region119: #{forward.13} parent=111 // loop_exit
                  _
                loop: start=0, step=1, limit=1
                $region120: #{forward.13} parent=111 // loop_pre_header
                  _
                $region121: #{forward.13} parent=111 // loop_header
                  %s641 = sphi 0, %s645
                  %p642 = scmp.ge.s32.totalorder %s641, 1
                  %s646 = sphi %s601, %s601
                  %s647 = sphi %s609, %s609
                $region122: #{forward.13} parent=111 // loop_header_branch
                  %644 = sbr.rel (%p642) target = $region126
                $region123: #{forward.13} parent=111 // loop_body
                  %v648 = vld [vmem:[%s646] sm:$0xf]
                  %649 = vst [vmem:[%s647] sm:$0xf] %v648
                  %v650 = vld [vmem:[%s646 + $0x4] sm:$0xf]
                  %651 = vst [vmem:[%s647 + $0xc] sm:$0xf] %v650
                $region124: #{forward.13} parent=111 // loop_footer
                  %s645 = sadd.s32 1, %s641
                $region125: #{forward.13} parent=111 // loop_footer_branch
                  %640 = sbr.rel target = $region121
                $region126: #{forward.13} parent=111 // loop_exit
                  _
              $region112: #{forward.13} parent=96 // pred_fallthru
                _
            $region97: #{forward.13} parent=92 // pred_fallthru
              _
            // Predicated region
            $region98: #{forward.13} parent=92 // pred_check
              _
            $region99: #{forward.13} parent=92 // pred_check_branch
              %615 = sbr.rel (0) target = $region101
            $region100: #{forward.13} parent=92 // pred_region
              loop: start=0, step=1, limit=1
              $region102: #{forward.13} parent=100 // loop_pre_header
                _
              $region103: #{forward.13} parent=100 // loop_header
                %s618 = sphi 0, %s622
                %p619 = scmp.ge.s32.totalorder %s618, 1
                %s623 = sphi %s601, %s601
                %s624 = sphi %s609, %s609
              $region104: #{forward.13} parent=100 // loop_header_branch
                %621 = sbr.rel (%p619) target = $region108
              $region105: #{forward.13} parent=100 // loop_body
                %v625 = vld [vmem:[%s623] sm:$0xf]
                %626 = vst [vmem:[%s624] sm:$0xf] %v625
                %v627 = vld [vmem:[%s623 + $0x4] sm:$0xf]
                %628 = vst [vmem:[%s624 + $0xc] sm:$0xf] %v627
              $region106: #{forward.13} parent=100 // loop_footer
                %s622 = sadd.s32 1, %s618
              $region107: #{forward.13} parent=100 // loop_footer_branch
                %617 = sbr.rel target = $region103
              $region108: #{forward.13} parent=100 // loop_exit
                _
            $region101: #{forward.13} parent=92 // pred_fallthru
              _
          $region93: #{forward.13} parent=88 // pred_fallthru
            _
          %652 = vnop
        $region89: #{forward.13} parent=76 // pred_fallthru
          _
      $region77: #{forward.13} parent=5 // pred_fallthru
        _
      %p653 = scmp.le.s32.totalorder 2, %s11
      // Predicated region
      $region127: #{forward.13} parent=5 // pred_check
        %p654 = pneg %p653
      $region128: #{forward.13} parent=5 // pred_check_branch
        %656 = sbr.rel (%p654) target = $region130
      $region129: #{forward.13} parent=5 // pred_region
        %s657 = ssub.s32 %s11, 2
        // Predicated region
        $region131: #{forward.13} parent=129 // pred_check
          %p658 = pneg %p195
        $region132: #{forward.13} parent=129 // pred_check_branch
          %660 = sbr.rel (%p658) target = $region134
        $region133: #{forward.13} parent=129 // pred_region
          %s661 = sand.u32 %s180, 1
          %s662 = sand.u32 %s180, 1
          %s663 = smul.addr %s662, 8
          %s664 = scalar_lea.vmem [#allocation4], %s663
        $region134: #{forward.13} parent=129 // pred_fallthru
          _
      $region130: #{forward.13} parent=5 // pred_fallthru
        _
    $region6: #{forward.13} parent=1 // loop_footer
      %s15 = sadd.s32 1, %s11
    $region7: #{forward.13} parent=1 // loop_footer_branch
      %10 = sbr.rel target = $region3
    $region8: #{forward.13} parent=1 // loop_exit
      _

// kernel: forward.12
$region0: #{forward.12}
  #allocation0 [shape = 'u32[]', space=smem, size = 0x4, offset = 0x4, fixed_abs, tag = 'smem constant byte address 0x4 - core index']
  #allocation1 [shape = 'u32[144,128]{1,0:T(1,128)}', space=vmem, size = 0x12000, scoped, tag = 'internal scratch']
  %s0 = inlined_call_operand.vmem [shape: bf16[8,588], index: 0, kind: input, shape index: {}]
  %s1 = inlined_call_operand.vmem [shape: bf16[588,128], index: 1, kind: input, shape index: {}]
  %s2 = inlined_call_operand.vmem [shape: f32[1,128], index: 2, kind: input, shape index: {}]
  %s3 = inlined_call_operand.vmem [shape: bf16[8,128], index: 3, kind: output, shape index: {}]
  %s4 = sld [smem:[#allocation0]]
  $region22: #{forward.12} parent=0
    _
  %s6 = ssub.s32 1, %s4
  %s7 = scalar_select 0, %s6, %s4
  // Predicated region
  $region2: #{forward.12} parent=0 // pred_check
    _
  $region3: #{forward.12} parent=0 // pred_check_branch
    %9 = sbr.rel (0) target = $region5
  $region4: #{forward.12} parent=0 // pred_region
    _
  $region5: #{forward.12} parent=0 // pred_fallthru
    _
  // Predicated region
  $region6: #{forward.12} parent=0 // pred_check
    _
  $region7: #{forward.12} parent=0 // pred_check_branch
    %11 = sbr.rel (0) target = $region9
  $region8: #{forward.12} parent=0 // pred_region
    _
  $region9: #{forward.12} parent=0 // pred_fallthru
    _
  // Predicated region
  $region10: #{forward.12} parent=0 // pred_check
    _
  $region11: #{forward.12} parent=0 // pred_check_branch
    %13 = sbr.rel (0) target = $region13
  $region12: #{forward.12} parent=0 // pred_region
    _
  $region13: #{forward.12} parent=0 // pred_fallthru
    _
  %v15 = vld [vmem:[%s0] sm:$0xff]
  %v16 = vld [vmem:[%s0 + $0x8] sm:$0xff]
  %v17 = vld [vmem:[%s0 + $0x10] sm:$0xf]
  %v18 = vld [vmem:[%s1] sm:$0xf]
  %v19 = vld [vmem:[%s1 + $0x4] sm:$0xf]
  %v20 = vld [vmem:[%s1 + $0x8] sm:$0xf]
  %v21 = vld [vmem:[%s1 + $0xc] sm:$0xf]
  %v22 = vld [vmem:[%s1 + $0x10] sm:$0xf]
  %v23 = vld [vmem:[%s1 + $0x14] sm:$0xf]
  %v24 = vld [vmem:[%s1 + $0x18] sm:$0xf]
  %v25 = vld [vmem:[%s1 + $0x1c] sm:$0xf]
  %v26 = vld [vmem:[%s1 + $0x20] sm:$0xf]
  %v27 = vld [vmem:[%s1 + $0x24] sm:$0xf]
  %v28 = vld [vmem:[%s1 + $0x28] sm:$0xf]
  %v29 = vld [vmem:[%s1 + $0x2c] sm:$0xf]
  %v30 = vld [vmem:[%s1 + $0x30] sm:$0xf]
  %v31 = vld [vmem:[%s1 + $0x34] sm:$0xf]
  %v32 = vld [vmem:[%s1 + $0x38] sm:$0xf]
  %v33 = vld [vmem:[%s1 + $0x3c] sm:$0xf]
  %v34 = vld [vmem:[%s1 + $0x40] sm:$0xf]
  %v35 = vld [vmem:[%s1 + $0x44] sm:$0xf]
  %v36 = vld [vmem:[%s1 + $0x48] sm:$0xf]
  %v37 = vld [vmem:[%s1 + $0x4c] sm:$0xf]
  %v38 = vld [vmem:[%s1 + $0x50] sm:$0xf]
  %v39 = vld [vmem:[%s1 + $0x54] sm:$0xf]
  %v40 = vld [vmem:[%s1 + $0x58] sm:$0xf]
  %v41 = vld [vmem:[%s1 + $0x5c] sm:$0xf]
  %v42 = vld [vmem:[%s1 + $0x60] sm:$0xf]
  %v43 = vld [vmem:[%s1 + $0x64] sm:$0xf]
  %v44 = vld [vmem:[%s1 + $0x68] sm:$0xf]
  %v45 = vld [vmem:[%s1 + $0x6c] sm:$0xf]
  %v46 = vld [vmem:[%s1 + $0x70] sm:$0xf]
  %v47 = vld [vmem:[%s1 + $0x74] sm:$0xf]
  %v48 = vld [vmem:[%s1 + $0x78] sm:$0xf]
  %v49 = vld [vmem:[%s1 + $0x7c] sm:$0xf]
  %v50 = vld [vmem:[%s1 + $0x80] sm:$0xf]
  %v51 = vld [vmem:[%s1 + $0x84] sm:$0xf]
  %v52 = vld [vmem:[%s1 + $0x88] sm:$0xf]
  %v53 = vld [vmem:[%s1 + $0x8c] sm:$0xf]
  %v54 = vld [vmem:[%s1 + $0x90] sm:$0xf]
  %v55 = vld [vmem:[%s1 + $0x94] sm:$0xf]
  %v56 = vld [vmem:[%s1 + $0x98] sm:$0xf]
  %v57 = vld [vmem:[%s1 + $0x9c] sm:$0xf]
  %v58 = vld [vmem:[%s1 + $0xa0] sm:$0xf]
  %v59 = vld [vmem:[%s1 + $0xa4] sm:$0xf]
  %v60 = vld [vmem:[%s1 + $0xa8] sm:$0xf]
  %v61 = vld [vmem:[%s1 + $0xac] sm:$0xf]
  %v62 = vld [vmem:[%s1 + $0xb0] sm:$0xf]
  %v63 = vld [vmem:[%s1 + $0xb4] sm:$0xf]
  %v64 = vld [vmem:[%s1 + $0xb8] sm:$0xf]
  %v65 = vld [vmem:[%s1 + $0xbc] sm:$0xf]
  %v66 = vld [vmem:[%s1 + $0xc0] sm:$0xf]
  %v67 = vld [vmem:[%s1 + $0xc4] sm:$0xf]
  %v68 = vld [vmem:[%s1 + $0xc8] sm:$0xf]
  %v69 = vld [vmem:[%s1 + $0xcc] sm:$0xf]
  %v70 = vld [vmem:[%s1 + $0xd0] sm:$0xf]
  %v71 = vld [vmem:[%s1 + $0xd4] sm:$0xf]
  %v72 = vld [vmem:[%s1 + $0xd8] sm:$0xf]
  %v73 = vld [vmem:[%s1 + $0xdc] sm:$0xf]
  %v74 = vld [vmem:[%s1 + $0xe0] sm:$0xf]
  %v75 = vld [vmem:[%s1 + $0xe4] sm:$0xf]
  %v76 = vld [vmem:[%s1 + $0xe8] sm:$0xf]
  %v77 = vld [vmem:[%s1 + $0xec] sm:$0xf]
  %v78 = vld [vmem:[%s1 + $0xf0] sm:$0xf]
  %v79 = vld [vmem:[%s1 + $0xf4] sm:$0xf]
  %v80 = vld [vmem:[%s1 + $0xf8] sm:$0xf]
  %v81 = vld [vmem:[%s1 + $0xfc] sm:$0xf]
  %v82 = vld [vmem:[%s1 + $0x100] sm:$0xf]
  %v83 = vld [vmem:[%s1 + $0x104] sm:$0xf]
  %v84 = vld [vmem:[%s1 + $0x108] sm:$0xf]
  %v85 = vld [vmem:[%s1 + $0x10c] sm:$0xf]
  %v86 = vld [vmem:[%s1 + $0x110] sm:$0xf]
  %v87 = vld [vmem:[%s1 + $0x114] sm:$0xf]
  %v88 = vld [vmem:[%s1 + $0x118] sm:$0xf]
  %v89 = vld [vmem:[%s1 + $0x11c] sm:$0xf]
  %v90 = vld [vmem:[%s1 + $0x120] sm:$0xf]
  %v91 = vld [vmem:[%s1 + $0x124] sm:$0x3]
  %v92 = vld [vmem:[%s2] sm:$0x1]
  %v94 = vlaneseq
  %v95 = vshrl.u32 %v94, 7
  %v96 = vsub.s32 0, %v95
  %v97 = vrot.slane %v92, %v96
  %v102 = vunpack.c.l.b16 %v15
  %v103 = vunpack.c.h.b16 %v15
  %v104 = vunpack.c.l.b16 %v16
  %v105 = vunpack.c.h.b16 %v16
  %v106 = vunpack.c.l.b16 %v17
  %v107 = vpack.c.b16 %v102, %v102
  %v108 = vpack.c.b16 %v103, %v103
  %v109 = vpack.c.b16 %v104, %v104
  %v110 = vpack.c.b16 %v105, %v105
  %v111 = vpack.c.b16 %v106, %v106
  %v190 = vunpack.c.l.b16 %v18
  %v191 = vunpack.c.l.b16 %v19
  %v192 = vunpack.c.l.b16 %v20
  %v193 = vunpack.c.l.b16 %v21
  %v194 = vunpack.c.l.b16 %v22
  %v195 = vunpack.c.l.b16 %v23
  %v196 = vunpack.c.l.b16 %v24
  %v197 = vunpack.c.l.b16 %v25
  %v198 = vunpack.c.l.b16 %v26
  %v199 = vunpack.c.l.b16 %v27
  %v200 = vunpack.c.l.b16 %v28
  %v201 = vunpack.c.l.b16 %v29
  %v202 = vunpack.c.l.b16 %v30
  %v203 = vunpack.c.l.b16 %v31
  %v204 = vunpack.c.l.b16 %v32
  %v205 = vunpack.c.l.b16 %v33
  %v206 = vunpack.c.l.b16 %v34
  %v207 = vunpack.c.l.b16 %v35
  %v208 = vunpack.c.l.b16 %v36
  %v209 = vunpack.c.l.b16 %v37
  %v210 = vunpack.c.l.b16 %v38
  %v211 = vunpack.c.l.b16 %v39
  %v212 = vunpack.c.l.b16 %v40
  %v213 = vunpack.c.l.b16 %v41
  %v214 = vunpack.c.l.b16 %v42
  %v215 = vunpack.c.l.b16 %v43
  %v216 = vunpack.c.l.b16 %v44
  %v217 = vunpack.c.l.b16 %v45
  %v218 = vunpack.c.l.b16 %v46
  %v219 = vunpack.c.l.b16 %v47
  %v220 = vunpack.c.l.b16 %v48
  %v221 = vunpack.c.l.b16 %v49
  %v222 = vunpack.c.l.b16 %v50
  %v223 = vunpack.c.l.b16 %v51
  %v224 = vunpack.c.l.b16 %v52
  %v225 = vunpack.c.l.b16 %v53
  %v226 = vunpack.c.l.b16 %v54
  %v227 = vunpack.c.l.b16 %v55
  %v228 = vunpack.c.l.b16 %v56
  %v229 = vunpack.c.l.b16 %v57
  %v230 = vunpack.c.l.b16 %v58
  %v231 = vunpack.c.l.b16 %v59
  %v232 = vunpack.c.l.b16 %v60
  %v233 = vunpack.c.l.b16 %v61
  %v234 = vunpack.c.l.b16 %v62
  %v235 = vunpack.c.l.b16 %v63
  %v236 = vunpack.c.l.b16 %v64
  %v237 = vunpack.c.l.b16 %v65
  %v238 = vunpack.c.l.b16 %v66
  %v239 = vunpack.c.l.b16 %v67
  %v240 = vunpack.c.l.b16 %v68
  %v241 = vunpack.c.l.b16 %v69
  %v242 = vunpack.c.l.b16 %v70
  %v243 = vunpack.c.l.b16 %v71
  %v244 = vunpack.c.l.b16 %v72
  %v245 = vunpack.c.l.b16 %v73
  %v246 = vunpack.c.l.b16 %v74
  %v247 = vunpack.c.l.b16 %v75
  %v248 = vunpack.c.l.b16 %v76
  %v249 = vunpack.c.l.b16 %v77
  %v250 = vunpack.c.l.b16 %v78
  %v251 = vunpack.c.l.b16 %v79
  %v252 = vunpack.c.l.b16 %v80
  %v253 = vunpack.c.l.b16 %v81
  %v254 = vunpack.c.l.b16 %v82
  %v255 = vunpack.c.l.b16 %v83
  %v256 = vunpack.c.l.b16 %v84
  %v257 = vunpack.c.l.b16 %v85
  %v258 = vunpack.c.l.b16 %v86
  %v259 = vunpack.c.l.b16 %v87
  %v260 = vunpack.c.l.b16 %v88
  %v261 = vunpack.c.l.b16 %v89
  %v262 = vunpack.c.l.b16 %v90
  %v263 = vunpack.c.l.b16 %v91
  %v264 = vpack.c.b16 %v191, %v190
  %v265 = vpack.c.b16 %v193, %v192
  %v266 = vpack.c.b16 %v195, %v194
  %v267 = vpack.c.b16 %v197, %v196
  %v268 = vpack.c.b16 %v199, %v198
  %v269 = vpack.c.b16 %v201, %v200
  %v270 = vpack.c.b16 %v203, %v202
  %v271 = vpack.c.b16 %v205, %v204
  %v272 = vpack.c.b16 %v207, %v206
  %v273 = vpack.c.b16 %v209, %v208
  %v274 = vpack.c.b16 %v211, %v210
  %v275 = vpack.c.b16 %v213, %v212
  %v276 = vpack.c.b16 %v215, %v214
  %v277 = vpack.c.b16 %v217, %v216
  %v278 = vpack.c.b16 %v219, %v218
  %v279 = vpack.c.b16 %v221, %v220
  %v280 = vpack.c.b16 %v223, %v222
  %v281 = vpack.c.b16 %v225, %v224
  %v282 = vpack.c.b16 %v227, %v226
  %v283 = vpack.c.b16 %v229, %v228
  %v284 = vpack.c.b16 %v231, %v230
  %v285 = vpack.c.b16 %v233, %v232
  %v286 = vpack.c.b16 %v235, %v234
  %v287 = vpack.c.b16 %v237, %v236
  %v288 = vpack.c.b16 %v239, %v238
  %v289 = vpack.c.b16 %v241, %v240
  %v290 = vpack.c.b16 %v243, %v242
  %v291 = vpack.c.b16 %v245, %v244
  %v292 = vpack.c.b16 %v247, %v246
  %v293 = vpack.c.b16 %v249, %v248
  %v294 = vpack.c.b16 %v251, %v250
  %v295 = vpack.c.b16 %v253, %v252
  %v296 = vpack.c.b16 %v255, %v254
  %v297 = vpack.c.b16 %v257, %v256
  %v298 = vpack.c.b16 %v259, %v258
  %v299 = vpack.c.b16 %v261, %v260
  %v300 = vpack.c.b16 %v263, %v262
  %vm337 = vcmask 621568
  %v339 = vsel %vm337, %v111, 0
  %vm341 = vcmask 1045504
  %v343 = vsel %vm341, %v300, 0
  %345 = vmatprep.subr.bf16.mxu0 0
  %346 = vmatpush1.bf16.msra.mxu0 %v264
  %347 = vmatprep.subr.bf16.mxu0 0
  %348 = vmatpush1.bf16.msra.mxu0 %v265
  %349 = vmatprep.subr.bf16.mxu0 0
  %350 = vmatpush1.bf16.msra.mxu0 %v266
  %351 = vmatprep.subr.bf16.mxu0 0
  %352 = vmatpush1.bf16.msra.mxu0 %v267
  %353 = vmatprep.subr.bf16.mxu0 0
  %354 = vmatpush1.bf16.msra.mxu0 %v268
  %355 = vmatprep.subr.bf16.mxu0 0
  %356 = vmatpush1.bf16.msra.mxu0 %v269
  %357 = vmatprep.subr.bf16.mxu0 0
  %358 = vmatpush1.bf16.msra.mxu0 %v270
  %359 = vmatprep.subr.bf16.mxu0 0
  %360 = vmatpush1.bf16.msra.mxu0 %v271
  %361 = vmatprep.subr.bf16.mxu0 0
  %362 = vmatpush1.bf16.msra.mxu0 %v272
  %363 = vmatprep.subr.bf16.mxu0 0
  %364 = vmatpush1.bf16.msra.mxu0 %v273
  %365 = vmatprep.subr.bf16.mxu0 0
  %366 = vmatpush1.bf16.msra.mxu0 %v274
  %367 = vmatprep.subr.bf16.mxu0 0
  %368 = vmatpush1.bf16.msra.mxu0 %v275
  %369 = vmatprep.subr.bf16.mxu0 0
  %370 = vmatpush1.bf16.msra.mxu0 %v276
  %371 = vmatprep.subr.bf16.mxu0 0
  %372 = vmatpush1.bf16.msra.mxu0 %v277
  %373 = vmatprep.subr.bf16.mxu0 0
  %374 = vmatpush1.bf16.msra.mxu0 %v278
  %375 = vmatprep.subr.bf16.mxu0 0
  %376 = vmatpush1.bf16.msra.mxu0 %v279
  %377 = vmatprep.mubr.bf16.mxu0 %v108
  %378 = vmatmul.mubr.bf16.gmra.mrb[0].mxu0 %v107
  %v379 = vpop.f32.mrb[0].mxu0
  %v380 = vadd.f32 %v97, %v379
  %v381 = vpop.f32.mrb[0].mxu0
  %v382 = vpop.f32.mrb[0].mxu0
  %v383 = vpop.f32.mrb[0].mxu0
  %384 = vdwg.mxu0
  %385 = vmatprep.subr.bf16.mxu0 0
  %386 = vmatpush1.bf16.msra.mxu0 %v280
  %387 = vmatprep.subr.bf16.mxu0 0
  %388 = vmatpush1.bf16.msra.mxu0 %v281
  %389 = vmatprep.subr.bf16.mxu0 0
  %390 = vmatpush1.bf16.msra.mxu0 %v282
  %391 = vmatprep.subr.bf16.mxu0 0
  %392 = vmatpush1.bf16.msra.mxu0 %v283
  %393 = vmatprep.subr.bf16.mxu0 0
  %394 = vmatpush1.bf16.msra.mxu0 %v284
  %395 = vmatprep.subr.bf16.mxu0 0
  %396 = vmatpush1.bf16.msra.mxu0 %v285
  %397 = vmatprep.subr.bf16.mxu0 0
  %398 = vmatpush1.bf16.msra.mxu0 %v286
  %399 = vmatprep.subr.bf16.mxu0 0
  %400 = vmatpush1.bf16.msra.mxu0 %v287
  %401 = vmatprep.subr.bf16.mxu0 0
  %402 = vmatpush1.bf16.msra.mxu0 %v288
  %403 = vmatprep.subr.bf16.mxu0 0
  %404 = vmatpush1.bf16.msra.mxu0 %v289
  %405 = vmatprep.subr.bf16.mxu0 0
  %406 = vmatpush1.bf16.msra.mxu0 %v290
  %407 = vmatprep.subr.bf16.mxu0 0
  %408 = vmatpush1.bf16.msra.mxu0 %v291
  %409 = vmatprep.subr.bf16.mxu0 0
  %410 = vmatpush1.bf16.msra.mxu0 %v292
  %411 = vmatprep.subr.bf16.mxu0 0
  %412 = vmatpush1.bf16.msra.mxu0 %v293
  %413 = vmatprep.subr.bf16.mxu0 0
  %414 = vmatpush1.bf16.msra.mxu0 %v294
  %415 = vmatprep.subr.bf16.mxu0 0
  %416 = vmatpush1.bf16.msra.mxu0 %v295
  %417 = vmatprep.mubr.bf16.mxu0 %v110
  %418 = vmatmul.mubr.bf16.gmra.mrb[0].mxu0 %v109
  %v419 = vpop.f32.mrb[0].mxu0
  %v420 = vadd.f32 %v380, %v419
  %v421 = vpop.f32.mrb[0].mxu0
  %v422 = vpop.f32.mrb[0].mxu0
  %v423 = vpop.f32.mrb[0].mxu0
  %424 = vdwg.mxu0
  %425 = vmatprep.subr.bf16.mxu0 0
  %426 = vmatpush1.bf16.msra.mxu0 %v296
  %427 = vmatprep.subr.bf16.mxu0 0
  %428 = vmatpush1.bf16.msra.mxu0 %v297
  %429 = vmatprep.subr.bf16.mxu0 0
  %430 = vmatpush1.bf16.msra.mxu0 %v298
  %431 = vmatprep.subr.bf16.mxu0 0
  %432 = vmatpush1.bf16.msra.mxu0 %v299
  %433 = vmatprep.subr.bf16.mxu0 0
  %434 = vmatpush1.bf16.msra.mxu0 %v343
  %435 = vmatprep.subr.bf16.mxu0 0
  %436 = vmatpush1.bf16.msra.mxu0 0
  %437 = vmatprep.subr.bf16.mxu0 0
  %438 = vmatpush1.bf16.msra.mxu0 0
  %439 = vmatprep.subr.bf16.mxu0 0
  %440 = vmatpush1.bf16.msra.mxu0 0
  %441 = vmatprep.subr.bf16.mxu0 0
  %442 = vmatpush1.bf16.msra.mxu0 0
  %443 = vmatprep.subr.bf16.mxu0 0
  %444 = vmatpush1.bf16.msra.mxu0 0
  %445 = vmatprep.subr.bf16.mxu0 0
  %446 = vmatpush1.bf16.msra.mxu0 0
  %447 = vmatprep.subr.bf16.mxu0 0
  %448 = vmatpush1.bf16.msra.mxu0 0
  %449 = vmatprep.subr.bf16.mxu0 0
  %450 = vmatpush1.bf16.msra.mxu0 0
  %451 = vmatprep.subr.bf16.mxu0 0
  %452 = vmatpush1.bf16.msra.mxu0 0
  %453 = vmatprep.subr.bf16.mxu0 0
  %454 = vmatpush1.bf16.msra.mxu0 0
  %455 = vmatprep.subr.bf16.mxu0 0
  %456 = vmatpush1.bf16.msra.mxu0 0
  %457 = vmatprep.mubr.bf16.mxu0 0
  %458 = vmatmul.mubr.bf16.gmra.mrb[0].mxu0 %v339
  %v459 = vpop.f32.mrb[0].mxu0
  %v460 = vadd.f32 %v420, %v459
  %v461 = vpop.f32.mrb[0].mxu0
  %v462 = vpop.f32.mrb[0].mxu0
  %v463 = vpop.f32.mrb[0].mxu0
  %464 = vdwg.mxu0
  %v465 = vpack.c.bf16 %v460, %v460
  %466 = vst [vmem:[%s3] sm:$0xf] %v465
  // Predicated region
  $region14: #{forward.12} parent=0 // pred_check
    _
  $region15: #{forward.12} parent=0 // pred_check_branch
    %468 = sbr.rel (0) target = $region17
  $region16: #{forward.12} parent=0 // pred_region
    _
  $region17: #{forward.12} parent=0 // pred_fallthru
    _
  // Predicated region
  $region18: #{forward.12} parent=0 // pred_check
    _
  $region19: #{forward.12} parent=0 // pred_check_branch
    %470 = sbr.rel (0) target = $region21
  $region20: #{forward.12} parent=0 // pred_region
    _
  $region21: #{forward.12} parent=0 // pred_fallthru
    _

// kernel: forward.14
$region0: #{forward.14}
  #allocation0 [shape = 'u32[]', space=smem, size = 0x4, offset = 0x4, fixed_abs, tag = 'smem constant byte address 0x4 - core index']
  #allocation1 [shape = 'u32[144,128]{1,0:T(1,128)}', space=vmem, size = 0x12000, scoped, tag = 'internal scratch']
  %s0 = inlined_call_operand.vmem [shape: bf16[2,8,384], index: 0, kind: input, shape index: {}, may-alias: {0,1,2}]
  %s1 = inlined_call_operand.vmem [shape: bf16[2,8,384], index: 1, kind: input, shape index: {}, may-alias: {0,1,2}]
  %s2 = inlined_call_operand.vmem [shape: bf16[2,8,384], index: 2, kind: input, shape index: {}, may-alias: {0,1,2}]
  %s3 = inlined_call_operand.vmem [shape: bf16[2,8,128], index: 3, kind: output, shape index: {}]
  %s4 = sld [smem:[#allocation0]]
  $region45: #{forward.14} parent=0
    _
  %s6 = ssub.s32 1, %s4
  %s7 = scalar_select 0, %s6, %s4
  loop: start=0, step=1, limit=4
  $region2: #{forward.14} parent=0 // loop_pre_header
    _
  $region3: #{forward.14} parent=0 // loop_header
    %s9 = sphi 0, %s13
    %p10 = scmp.ge.s32.totalorder %s9, 4
    %s16 = sphi 0, %s35
    %s17 = sphi 0, %s31
    %s18 = sphi 0, %s27
    %s19 = sphi 0, %s16
    %s20 = sphi 0, %s17
    %s21 = sphi 0, %s18
    %s22 = sphi 0, %s19
    %s23 = sphi 0, %s20
    %s24 = sphi 0, %s21
    %s42 = sphi 0, %s44
    %s45 = sphi 0, %s42
    %s46 = sphi 0, %s45
    %s62 = sphi 0, %s46
    %s72 = sphi 0, %s74
    %s75 = sphi 0, %s72
    %s76 = sphi 0, %s75
    %s92 = sphi 0, %s76
    %s102 = sphi 0, %s104
    %s105 = sphi 0, %s102
    %s106 = sphi 0, %s105
    %s122 = sphi 0, %s106
    %s132 = sphi 0, %s134
    %s135 = sphi 0, %s132
    %s136 = sphi 0, %s135
    %s152 = sphi 0, %s136
  $region4: #{forward.14} parent=0 // loop_header_branch
    %12 = sbr.rel (%p10) target = $region8
  $region5: #{forward.14} parent=0 // loop_body
    %s14 = ssub.s32 %s9, 1
    %s15 = ssub.s32 %s9, 2
    %s25 = sadd.s32 1, %s18
    %p26 = scmp.ge.s32.totalorder %s25, 1
    %s27 = scalar_select %p26, 0, %s25
    %s28 = sadd.s32 1, %s17
    %s29 = scalar_select %p26, %s28, %s17
    %p30 = scmp.ge.s32.totalorder %s29, 1
    %s31 = scalar_select %p30, 0, %s29
    %s32 = sadd.s32 1, %s16
    %s33 = scalar_select %p30, %s32, %s16
    %p34 = scmp.ge.s32.totalorder %s33, 2
    %s35 = scalar_select %p34, 0, %s33
    %s36 = ssub.s32 %s16, %s35
    %s37 = ssub.s32 %s18, %s27
    %s38 = sor.u32 %s36, %s37
    %s39 = ssub.s32 %s17, %s31
    %s40 = sor.u32 %s38, %s39
    %p41 = scmp.eq.s32.totalorder %s40, 0
    %s43 = sadd.s32 %s42, 1
    %s44 = scalar_select %p41, %s42, %s43
    %p47 = pneg %p41
    %p48 = scmp.eq.s32.totalorder %s9, 1
    %p49 = por %p47, %p48
    %p50 = scmp.ne.s32.totalorder %s42, %s45
    %p51 = scmp.eq.s32.totalorder %s9, 0
    %p52 = por %p50, %p51
    %p53 = scmp.ne.s32.totalorder %s42, %s45
    %p54 = scmp.eq.s32.totalorder %s14, 1
    %p55 = por %p53, %p54
    %p56 = scmp.ne.s32.totalorder %s45, %s46
    %p57 = scmp.eq.s32.totalorder %s14, 0
    %p58 = por %p56, %p57
    %p59 = scmp.ne.s32.totalorder %s45, %s46
    %p60 = scmp.eq.s32.totalorder %s15, 1
    %p61 = por %p59, %p60
    %p63 = scmp.ne.s32.totalorder %s46, %s62
    %p64 = scmp.eq.s32.totalorder %s15, 0
    %p65 = por %p63, %p64
    %s66 = sadd.s32 %s17, 1
    %s67 = sadd.s32 %s31, 1
    %s68 = ssub.s32 %s16, %s35
    %s69 = ssub.s32 %s66, %s67
    %s70 = sor.u32 %s68, %s69
    %p71 = scmp.eq.s32.totalorder %s70, 0
    %s73 = sadd.s32 %s72, 1
    %s74 = scalar_select %p71, %s72, %s73
    %p77 = pneg %p71
    %p78 = scmp.eq.s32.totalorder %s9, 1
    %p79 = por %p77, %p78
    %p80 = scmp.ne.s32.totalorder %s72, %s75
    %p81 = scmp.eq.s32.totalorder %s9, 0
    %p82 = por %p80, %p81
    %p83 = scmp.ne.s32.totalorder %s72, %s75
    %p84 = scmp.eq.s32.totalorder %s14, 1
    %p85 = por %p83, %p84
    %p86 = scmp.ne.s32.totalorder %s75, %s76
    %p87 = scmp.eq.s32.totalorder %s14, 0
    %p88 = por %p86, %p87
    %p89 = scmp.ne.s32.totalorder %s75, %s76
    %p90 = scmp.eq.s32.totalorder %s15, 1
    %p91 = por %p89, %p90
    %p93 = scmp.ne.s32.totalorder %s76, %s92
    %p94 = scmp.eq.s32.totalorder %s15, 0
    %p95 = por %p93, %p94
    %s96 = sadd.s32 %s17, 2
    %s97 = sadd.s32 %s31, 2
    %s98 = ssub.s32 %s16, %s35
    %s99 = ssub.s32 %s96, %s97
    %s100 = sor.u32 %s98, %s99
    %p101 = scmp.eq.s32.totalorder %s100, 0
    %s103 = sadd.s32 %s102, 1
    %s104 = scalar_select %p101, %s102, %s103
    %p107 = pneg %p101
    %p108 = scmp.eq.s32.totalorder %s9, 1
    %p109 = por %p107, %p108
    %p110 = scmp.ne.s32.totalorder %s102, %s105
    %p111 = scmp.eq.s32.totalorder %s9, 0
    %p112 = por %p110, %p111
    %p113 = scmp.ne.s32.totalorder %s102, %s105
    %p114 = scmp.eq.s32.totalorder %s14, 1
    %p115 = por %p113, %p114
    %p116 = scmp.ne.s32.totalorder %s105, %s106
    %p117 = scmp.eq.s32.totalorder %s14, 0
    %p118 = por %p116, %p117
    %p119 = scmp.ne.s32.totalorder %s105, %s106
    %p120 = scmp.eq.s32.totalorder %s15, 1
    %p121 = por %p119, %p120
    %p123 = scmp.ne.s32.totalorder %s106, %s122
    %p124 = scmp.eq.s32.totalorder %s15, 0
    %p125 = por %p123, %p124
    %s126 = ssub.s32 %s16, %s35
    %s127 = ssub.s32 %s18, %s27
    %s128 = sor.u32 %s126, %s127
    %s129 = ssub.s32 %s17, %s31
    %s130 = sor.u32 %s128, %s129
    %p131 = scmp.eq.s32.totalorder %s130, 0
    %s133 = sadd.s32 %s132, 1
    %s134 = scalar_select %p131, %s132, %s133
    %p137 = pneg %p131
    %p138 = scmp.eq.s32.totalorder %s9, 1
    %p139 = por %p137, %p138
    %p140 = scmp.ne.s32.totalorder %s132, %s135
    %p141 = scmp.eq.s32.totalorder %s9, 0
    %p142 = por %p140, %p141
    %p143 = scmp.ne.s32.totalorder %s132, %s135
    %p144 = scmp.eq.s32.totalorder %s14, 1
    %p145 = por %p143, %p144
    %p146 = scmp.ne.s32.totalorder %s135, %s136
    %p147 = scmp.eq.s32.totalorder %s14, 0
    %p148 = por %p146, %p147
    %p149 = scmp.ne.s32.totalorder %s135, %s136
    %p150 = scmp.eq.s32.totalorder %s15, 1
    %p151 = por %p149, %p150
    %p153 = scmp.ne.s32.totalorder %s136, %s152
    %p154 = scmp.eq.s32.totalorder %s15, 0
    %p155 = por %p153, %p154
    %p156 = scmp.le.s32.totalorder 1, %s9
    %p157 = scmp.lt.s32.totalorder %s9, 3
    %p158 = pnand %p156, %p157
    %p159 = pneg %p158
    // Predicated region
    $region9: #{forward.14} parent=5 // pred_check
      _
    $region10: #{forward.14} parent=5 // pred_check_branch
      %161 = sbr.rel (%p158) target = $region12
    $region11: #{forward.14} parent=5 // pred_region
      %s162 = ssub.s32 %s9, 1
    $region12: #{forward.14} parent=5 // pred_fallthru
      _
    %p163 = scmp.lt.s32.totalorder %s9, 2
    // Predicated region
    $region13: #{forward.14} parent=5 // pred_check
      %p164 = pneg %p163
    $region14: #{forward.14} parent=5 // pred_check_branch
      %166 = sbr.rel (%p164) target = $region16
    $region15: #{forward.14} parent=5 // pred_region
      // Predicated region
      $region17: #{forward.14} parent=15 // pred_check
        %p167 = pneg %p52
      $region18: #{forward.14} parent=15 // pred_check_branch
        %169 = sbr.rel (%p167) target = $region20
      $region19: #{forward.14} parent=15 // pred_region
        %p170 = scmp.lt.s32.totalorder %s16, 1
        %s171 = scalar_select %p170, %s16, 1
        %p172 = scmp.lt.s32.totalorder %s18, 0
        %s173 = scalar_select %p172, %s18, 0
        %p174 = scmp.lt.s32.totalorder %s17, 2
        %s175 = scalar_select %p174, %s17, 2
        %s176 = smul.addr %s173, 3
        %s177 = sadd.s32 %s175, %s176
        %s178 = smul.addr %s171, 3
        %s179 = sadd.s32 %s177, %s178
        %s180 = smul.addr %s179, 4
        %s181 = scalar_lea.vmem %s0, %s180
      $region20: #{forward.14} parent=15 // pred_fallthru
        _
      // Predicated region
      $region21: #{forward.14} parent=15 // pred_check
        %p182 = pneg %p82
      $region22: #{forward.14} parent=15 // pred_check_branch
        %184 = sbr.rel (%p182) target = $region24
      $region23: #{forward.14} parent=15 // pred_region
        %s185 = sadd.s32 %s17, 1
        %p186 = scmp.lt.s32.totalorder %s16, 1
        %s187 = scalar_select %p186, %s16, 1
        %p188 = scmp.lt.s32.totalorder %s185, 2
        %s189 = scalar_select %p188, %s185, 2
        %s190 = smul.addr %s187, 3
        %s191 = sadd.s32 %s189, %s190
        %s192 = smul.addr %s191, 4
        %s193 = scalar_lea.vmem %s1, %s192
        %s194 = sadd.s32 %s17, 1
      $region24: #{forward.14} parent=15 // pred_fallthru
        _
      // Predicated region
      $region25: #{forward.14} parent=15 // pred_check
        %p195 = pneg %p112
      $region26: #{forward.14} parent=15 // pred_check_branch
        %197 = sbr.rel (%p195) target = $region28
      $region27: #{forward.14} parent=15 // pred_region
        %s198 = sadd.s32 %s17, 2
        %p199 = scmp.lt.s32.totalorder %s16, 1
        %s200 = scalar_select %p199, %s16, 1
        %p201 = scmp.lt.s32.totalorder %s198, 2
        %s202 = scalar_select %p201, %s198, 2
        %s203 = smul.addr %s200, 3
        %s204 = sadd.s32 %s202, %s203
        %s205 = smul.addr %s204, 4
        %s206 = scalar_lea.vmem %s2, %s205
        %s207 = sadd.s32 %s17, 2
      $region28: #{forward.14} parent=15 // pred_fallthru
        _
    $region16: #{forward.14} parent=5 // pred_fallthru
      _
    %p208 = scmp.le.s32.totalorder 1, %s9
    %p209 = scmp.lt.s32.totalorder %s9, 3
    %p210 = pnand %p208, %p209
    %p211 = pneg %p210
    // Predicated region
    $region29: #{forward.14} parent=5 // pred_check
      _
    $region30: #{forward.14} parent=5 // pred_check_branch
      %213 = sbr.rel (%p210) target = $region32
    $region31: #{forward.14} parent=5 // pred_region
      %s214 = ssub.s32 %s9, 1
      %p215 = scmp.lt.s32.totalorder %s19, 1
      %s216 = scalar_select %p215, %s19, 1
      %p217 = scmp.lt.s32.totalorder %s21, 0
      %s218 = scalar_select %p217, %s21, 0
      %p219 = scmp.lt.s32.totalorder %s20, 2
      %s220 = scalar_select %p219, %s20, 2
      %s221 = smul.addr %s218, 3
      %s222 = sadd.s32 %s220, %s221
      %s223 = smul.addr %s216, 3
      %s224 = sadd.s32 %s222, %s223
      %s225 = smul.addr %s224, 4
      %s226 = scalar_lea.vmem %s0, %s225
      %p227 = pneg %p58
      %p228 = pneg %p55
      %s229 = sadd.s32 %s20, 1
      %p230 = scmp.lt.s32.totalorder %s19, 1
      %s231 = scalar_select %p230, %s19, 1
      %p232 = scmp.lt.s32.totalorder %s229, 2
      %s233 = scalar_select %p232, %s229, 2
      %s234 = smul.addr %s231, 3
      %s235 = sadd.s32 %s233, %s234
      %s236 = smul.addr %s235, 4
      %s237 = scalar_lea.vmem %s1, %s236
      %p238 = pneg %p88
      %p239 = pneg %p85
      %s240 = sadd.s32 %s20, 2
      %p241 = scmp.lt.s32.totalorder %s19, 1
      %s242 = scalar_select %p241, %s19, 1
      %p243 = scmp.lt.s32.totalorder %s240, 2
      %s244 = scalar_select %p243, %s240, 2
      %s245 = smul.addr %s242, 3
      %s246 = sadd.s32 %s244, %s245
      %s247 = smul.addr %s246, 4
      %s248 = scalar_lea.vmem %s2, %s247
      %p249 = pneg %p118
      %p250 = pneg %p115
      %p251 = pneg %p148
      %p252 = pneg %p145
      %p253 = scmp.lt.s32.totalorder %s19, 1
      %s254 = scalar_select %p253, %s19, 1
      %p255 = scmp.lt.s32.totalorder %s21, 0
      %s256 = scalar_select %p255, %s21, 0
      %p257 = scmp.lt.s32.totalorder %s20, 0
      %s258 = scalar_select %p257, %s20, 0
      %s259 = sadd.s32 %s258, %s256
      %s260 = sadd.s32 %s259, %s254
      %s261 = smul.addr %s260, 4
      %s262 = scalar_lea.vmem %s3, %s261
      %p263 = scmp.lt.s32.totalorder %s19, 1
      %s264 = scalar_select %p263, %s19, 1
      %p265 = scmp.lt.s32.totalorder %s21, 0
      %s266 = scalar_select %p265, %s21, 0
      %p267 = scmp.lt.s32.totalorder %s20, 2
      %s268 = scalar_select %p267, %s20, 2
      %s269 = smul.addr %s266, 3
      %s270 = sadd.s32 %s268, %s269
      %s271 = smul.addr %s264, 3
      %s272 = sadd.s32 %s270, %s271
      %s273 = smul.addr %s272, 4
      %s274 = scalar_lea.vmem %s0, %s273
      %s275 = sadd.s32 %s20, 1
      %p276 = scmp.lt.s32.totalorder %s19, 1
      %s277 = scalar_select %p276, %s19, 1
      %p278 = scmp.lt.s32.totalorder %s275, 2
      %s279 = scalar_select %p278, %s275, 2
      %s280 = smul.addr %s277, 3
      %s281 = sadd.s32 %s279, %s280
      %s282 = smul.addr %s281, 4
      %s283 = scalar_lea.vmem %s1, %s282
      %s284 = sadd.s32 %s20, 1
      %s285 = sadd.s32 %s20, 2
      %p286 = scmp.lt.s32.totalorder %s19, 1
      %s287 = scalar_select %p286, %s19, 1
      %p288 = scmp.lt.s32.totalorder %s285, 2
      %s289 = scalar_select %p288, %s285, 2
      %s290 = smul.addr %s287, 3
      %s291 = sadd.s32 %s289, %s290
      %s292 = smul.addr %s291, 4
      %s293 = scalar_lea.vmem %s2, %s292
      %s294 = sadd.s32 %s20, 2
      %p295 = scmp.lt.s32.totalorder %s19, 1
      %s296 = scalar_select %p295, %s19, 1
      %p297 = scmp.lt.s32.totalorder %s21, 0
      %s298 = scalar_select %p297, %s21, 0
      %p299 = scmp.lt.s32.totalorder %s20, 0
      %s300 = scalar_select %p299, %s20, 0
      %s301 = sadd.s32 %s300, %s298
      %s302 = sadd.s32 %s301, %s296
      %s303 = smul.addr %s302, 4
      %s304 = scalar_lea.vmem %s3, %s303
      %v306 = vld [vmem:[%s274] sm:$0xf]
      %v307 = vld [vmem:[%s283] sm:$0xf]
      %v308 = vld [vmem:[%s293] sm:$0xf]
      %v309 = vlaneseq
      %v310 = vand.u32 %v309, 127
      %vm311 = vcmp.lt.s32.totalorder %v310, 5
      %vm312 = vcmask 523264
      %v314 = vsel %vm312, %v306, 0
      %v317 = vsel %vm312, %v307, 0
      %319 = vmatprep.subr.bf16.mxu0 0
      %320 = vmatpush1.bf16.xpose.msra.mxu0 %v317
      %321 = vmatprep.subr.bf16.mxu0 0
      %322 = vmatpush1.bf16.xpose.msra.mxu0 0
      %323 = vmatprep.subr.bf16.mxu0 0
      %324 = vmatpush1.bf16.xpose.msra.mxu0 0
      %325 = vmatprep.subr.bf16.mxu0 0
      %326 = vmatpush1.bf16.xpose.msra.mxu0 0
      %327 = vmatprep.subr.bf16.mxu0 0
      %328 = vmatpush1.bf16.xpose.msra.mxu0 0
      %329 = vmatprep.subr.bf16.mxu0 0
      %330 = vmatpush1.bf16.xpose.msra.mxu0 0
      %331 = vmatprep.subr.bf16.mxu0 0
      %332 = vmatpush1.bf16.xpose.msra.mxu0 0
      %333 = vmatprep.subr.bf16.mxu0 0
      %334 = vmatpush1.bf16.xpose.msra.mxu0 0
      %335 = vmatprep.subr.bf16.mxu0 0
      %336 = vmatpush1.bf16.xpose.msra.mxu0 0
      %337 = vmatprep.subr.bf16.mxu0 0
      %338 = vmatpush1.bf16.xpose.msra.mxu0 0
      %339 = vmatprep.subr.bf16.mxu0 0
      %340 = vmatpush1.bf16.xpose.msra.mxu0 0
      %341 = vmatprep.subr.bf16.mxu0 0
      %342 = vmatpush1.bf16.xpose.msra.mxu0 0
      %343 = vmatprep.subr.bf16.mxu0 0
      %344 = vmatpush1.bf16.xpose.msra.mxu0 0
      %345 = vmatprep.subr.bf16.mxu0 0
      %346 = vmatpush1.bf16.xpose.msra.mxu0 0
      %347 = vmatprep.subr.bf16.mxu0 0
      %348 = vmatpush1.bf16.xpose.msra.mxu0 0
      %349 = vmatprep.subr.bf16.mxu0 0
      %350 = vmatpush1.bf16.xpose.msra.mxu0 0
      %351 = vmatprep.mubr.bf16.mxu0 0
      %352 = vmatmul.mubr.bf16.gmra.mrb[0].mxu0 %v314
      %v353 = vpop.f32.mrb[0].mxu0
      %v354 = vadd.f32 0.0, %v353
      %v355 = vpop.f32.mrb[0].mxu0
      %v356 = vpop.f32.mrb[0].mxu0
      %v357 = vpop.f32.mrb[0].mxu0
      %358 = vdwg.mxu0
      %v359 = vmul.f32 %v354, 0.125
      %v360 = vsel %vm311, 1, 0
      %vm361 = vcmp.eq.s32.totalorder %v360, 1
      %v362 = vsel %vm361, %v359, -1e+30
      %vm363 = vcmask 64512
      %v364 = vsel %vm363, %v362, -inf
      %365 = vmax.xlane.f32.xlu0 %v364
      %v366 = vpop.xlane.xlu0 %365
      %v367 = vsub.f32 %v362, %v366
      %v368 = vmul.f32 %v367, 1.442695
      %v369 = vpow.pop %v368
      %v370 = vsel %vm363, %v369, 0.0
      %371 = vadd.xlane.f32.xlu0 %v370
      %v372 = vpop.xlane.xlu0 %371
      %v373 = vrcp.pop %v372
      %v374 = vmul.f32 %v369, %v373
      %v375 = vpack.c.bf16 %v374, %v374
      %v377 = vsel %vm363, %v375, 0
      %vm379 = vcmask 1043456
      %v381 = vsel %vm379, %v308, 0
      %383 = vmatprep.subr.bf16.mxu0 0
      %384 = vmatpush1.bf16.msra.mxu0 %v381
      %385 = vmatprep.subr.bf16.mxu0 0
      %386 = vmatpush1.bf16.msra.mxu0 0
      %387 = vmatprep.subr.bf16.mxu0 0
      %388 = vmatpush1.bf16.msra.mxu0 0
      %389 = vmatprep.subr.bf16.mxu0 0
      %390 = vmatpush1.bf16.msra.mxu0 0
      %391 = vmatprep.subr.bf16.mxu0 0
      %392 = vmatpush1.bf16.msra.mxu0 0
      %393 = vmatprep.subr.bf16.mxu0 0
      %394 = vmatpush1.bf16.msra.mxu0 0
      %395 = vmatprep.subr.bf16.mxu0 0
      %396 = vmatpush1.bf16.msra.mxu0 0
      %397 = vmatprep.subr.bf16.mxu0 0
      %398 = vmatpush1.bf16.msra.mxu0 0
      %399 = vmatprep.subr.bf16.mxu0 0
      %400 = vmatpush1.bf16.msra.mxu0 0
      %401 = vmatprep.subr.bf16.mxu0 0
      %402 = vmatpush1.bf16.msra.mxu0 0
      %403 = vmatprep.subr.bf16.mxu0 0
      %404 = vmatpush1.bf16.msra.mxu0 0
      %405 = vmatprep.subr.bf16.mxu0 0
      %406 = vmatpush1.bf16.msra.mxu0 0
      %407 = vmatprep.subr.bf16.mxu0 0
      %408 = vmatpush1.bf16.msra.mxu0 0
      %409 = vmatprep.subr.bf16.mxu0 0
      %410 = vmatpush1.bf16.msra.mxu0 0
      %411 = vmatprep.subr.bf16.mxu0 0
      %412 = vmatpush1.bf16.msra.mxu0 0
      %413 = vmatprep.subr.bf16.mxu0 0
      %414 = vmatpush1.bf16.msra.mxu0 0
      %415 = vmatprep.mubr.bf16.mxu0 0
      %416 = vmatmul.mubr.bf16.gmra.mrb[0].mxu0 %v377
      %v417 = vpop.f32.mrb[0].mxu0
      %v418 = vadd.f32 0.0, %v417
      %v419 = vpop.f32.mrb[0].mxu0
      %v420 = vpop.f32.mrb[0].mxu0
      %v421 = vpop.f32.mrb[0].mxu0
      %422 = vdwg.mxu0
      %v424 = vunpack.c.l.b16 %v306
      %v425 = vpack.c.b16 %v424, %v424
      %426 = vrot.lane.b32.xlu0 %v425, 64
      %v427 = vpop.permute.xlu0 %426
      %v429 = vunpack.c.l.b16 %v307
      %v430 = vpack.c.b16 %v429, %v429
      %431 = vrot.lane.b32.xlu0 %v430, 64
      %v432 = vpop.permute.xlu0 %431
      %v434 = vsel %vm312, %v427, 0
      %v437 = vsel %vm312, %v432, 0
      %439 = vmatprep.subr.bf16.mxu0 0
      %440 = vmatpush1.bf16.xpose.msra.mxu0 %v437
      %441 = vmatprep.subr.bf16.mxu0 0
      %442 = vmatpush1.bf16.xpose.msra.mxu0 0
      %443 = vmatprep.subr.bf16.mxu0 0
      %444 = vmatpush1.bf16.xpose.msra.mxu0 0
      %445 = vmatprep.subr.bf16.mxu0 0
      %446 = vmatpush1.bf16.xpose.msra.mxu0 0
      %447 = vmatprep.subr.bf16.mxu0 0
      %448 = vmatpush1.bf16.xpose.msra.mxu0 0
      %449 = vmatprep.subr.bf16.mxu0 0
      %450 = vmatpush1.bf16.xpose.msra.mxu0 0
      %451 = vmatprep.subr.bf16.mxu0 0
      %452 = vmatpush1.bf16.xpose.msra.mxu0 0
      %453 = vmatprep.subr.bf16.mxu0 0
      %454 = vmatpush1.bf16.xpose.msra.mxu0 0
      %455 = vmatprep.subr.bf16.mxu0 0
      %456 = vmatpush1.bf16.xpose.msra.mxu0 0
      %457 = vmatprep.subr.bf16.mxu0 0
      %458 = vmatpush1.bf16.xpose.msra.mxu0 0
      %459 = vmatprep.subr.bf16.mxu0 0
      %460 = vmatpush1.bf16.xpose.msra.mxu0 0
      %461 = vmatprep.subr.bf16.mxu0 0
      %462 = vmatpush1.bf16.xpose.msra.mxu0 0
      %463 = vmatprep.subr.bf16.mxu0 0
      %464 = vmatpush1.bf16.xpose.msra.mxu0 0
      %465 = vmatprep.subr.bf16.mxu0 0
      %466 = vmatpush1.bf16.xpose.msra.mxu0 0
      %467 = vmatprep.subr.bf16.mxu0 0
      %468 = vmatpush1.bf16.xpose.msra.mxu0 0
      %469 = vmatprep.subr.bf16.mxu0 0
      %470 = vmatpush1.bf16.xpose.msra.mxu0 0
      %471 = vmatprep.mubr.bf16.mxu0 0
      %472 = vmatmul.mubr.bf16.gmra.mrb[0].mxu0 %v434
      %v473 = vpop.f32.mrb[0].mxu0
      %v474 = vadd.f32 0.0, %v473
      %v475 = vpop.f32.mrb[0].mxu0
      %v476 = vpop.f32.mrb[0].mxu0
      %v477 = vpop.f32.mrb[0].mxu0
      %478 = vdwg.mxu0
      %v479 = vmul.f32 %v474, 0.125
      %v480 = vsel %vm361, %v479, -1e+30
      %v481 = vsel %vm363, %v480, -inf
      %482 = vmax.xlane.f32.xlu0 %v481
      %v483 = vpop.xlane.xlu0 %482
      %v484 = vsub.f32 %v480, %v483
      %v485 = vmul.f32 %v484, 1.442695
      %v486 = vpow.pop %v485
      %v487 = vsel %vm363, %v486, 0.0
      %488 = vadd.xlane.f32.xlu0 %v487
      %v489 = vpop.xlane.xlu0 %488
      %v490 = vrcp.pop %v489
      %v491 = vmul.f32 %v486, %v490
      %v492 = vpack.c.bf16 %v491, %v491
      %v494 = vunpack.c.l.b16 %v308
      %v495 = vpack.c.b16 %v494, %v494
      %496 = vrot.lane.b32.xlu0 %v495, 64
      %v497 = vpop.permute.xlu0 %496
      %v499 = vsel %vm363, %v492, 0
      %v502 = vsel %vm379, %v497, 0
      %504 = vmatprep.subr.bf16.mxu0 0
      %505 = vmatpush1.bf16.msra.mxu0 %v502
      %506 = vmatprep.subr.bf16.mxu0 0
      %507 = vmatpush1.bf16.msra.mxu0 0
      %508 = vmatprep.subr.bf16.mxu0 0
      %509 = vmatpush1.bf16.msra.mxu0 0
      %510 = vmatprep.subr.bf16.mxu0 0
      %511 = vmatpush1.bf16.msra.mxu0 0
      %512 = vmatprep.subr.bf16.mxu0 0
      %513 = vmatpush1.bf16.msra.mxu0 0
      %514 = vmatprep.subr.bf16.mxu0 0
      %515 = vmatpush1.bf16.msra.mxu0 0
      %516 = vmatprep.subr.bf16.mxu0 0
      %517 = vmatpush1.bf16.msra.mxu0 0
      %518 = vmatprep.subr.bf16.mxu0 0
      %519 = vmatpush1.bf16.msra.mxu0 0
      %520 = vmatprep.subr.bf16.mxu0 0
      %521 = vmatpush1.bf16.msra.mxu0 0
      %522 = vmatprep.subr.bf16.mxu0 0
      %523 = vmatpush1.bf16.msra.mxu0 0
      %524 = vmatprep.subr.bf16.mxu0 0
      %525 = vmatpush1.bf16.msra.mxu0 0
      %526 = vmatprep.subr.bf16.mxu0 0
      %527 = vmatpush1.bf16.msra.mxu0 0
      %528 = vmatprep.subr.bf16.mxu0 0
      %529 = vmatpush1.bf16.msra.mxu0 0
      %530 = vmatprep.subr.bf16.mxu0 0
      %531 = vmatpush1.bf16.msra.mxu0 0
      %532 = vmatprep.subr.bf16.mxu0 0
      %533 = vmatpush1.bf16.msra.mxu0 0
      %534 = vmatprep.subr.bf16.mxu0 0
      %535 = vmatpush1.bf16.msra.mxu0 0
      %536 = vmatprep.mubr.bf16.mxu0 0
      %537 = vmatmul.mubr.bf16.gmra.mrb[0].mxu0 %v499
      %v538 = vpop.f32.mrb[0].mxu0
      %v539 = vadd.f32 0.0, %v538
      %v540 = vpop.f32.mrb[0].mxu0
      %v541 = vpop.f32.mrb[0].mxu0
      %v542 = vpop.f32.mrb[0].mxu0
      %543 = vdwg.mxu0
      %545 = vrot.lane.b32.xlu0 %v539, 64
      %v546 = vpop.permute.xlu0 %545
      %v548 = vsel %vm312, %v418, %v546
      %v549 = vpack.c.bf16 %v548, %v548
      %550 = vst [vmem:[%s304] sm:$0xf] %v549
      %p551 = scmp.lt.s32.totalorder %s19, 1
      %s552 = scalar_select %p551, %s19, 1
      %p553 = scmp.lt.s32.totalorder %s21, 0
      %s554 = scalar_select %p553, %s21, 0
      %p555 = scmp.lt.s32.totalorder %s20, 0
      %s556 = scalar_select %p555, %s20, 0
      %s557 = sadd.s32 %s556, %s554
      %s558 = sadd.s32 %s557, %s552
      %s559 = smul.addr %s558, 4
      %s560 = scalar_lea.vmem %s3, %s559
      // Predicated region
      $region33: #{forward.14} parent=31 // pred_check
        %p561 = pneg %p145
      $region34: #{forward.14} parent=31 // pred_check_branch
        %563 = sbr.rel (%p561) target = $region36
      $region35: #{forward.14} parent=31 // pred_region
        _
      $region36: #{forward.14} parent=31 // pred_fallthru
        _
    $region32: #{forward.14} parent=5 // pred_fallthru
      _
    %p564 = scmp.le.s32.totalorder 2, %s9
    // Predicated region
    $region37: #{forward.14} parent=5 // pred_check
      %p565 = pneg %p564
    $region38: #{forward.14} parent=5 // pred_check_branch
      %567 = sbr.rel (%p565) target = $region40
    $region39: #{forward.14} parent=5 // pred_region
      %s568 = ssub.s32 %s9, 2
      // Predicated region
      $region41: #{forward.14} parent=39 // pred_check
        %p569 = pneg %p151
      $region42: #{forward.14} parent=39 // pred_check_branch
        %571 = sbr.rel (%p569) target = $region44
      $region43: #{forward.14} parent=39 // pred_region
        %p572 = scmp.lt.s32.totalorder %s22, 1
        %s573 = scalar_select %p572, %s22, 1
        %p574 = scmp.lt.s32.totalorder %s24, 0
        %s575 = scalar_select %p574, %s24, 0
        %p576 = scmp.lt.s32.totalorder %s23, 0
        %s577 = scalar_select %p576, %s23, 0
        %s578 = sadd.s32 %s577, %s575
        %s579 = sadd.s32 %s578, %s573
        %s580 = smul.addr %s579, 4
        %s581 = scalar_lea.vmem %s3, %s580
      $region44: #{forward.14} parent=39 // pred_fallthru
        _
    $region40: #{forward.14} parent=5 // pred_fallthru
      _
  $region6: #{forward.14} parent=0 // loop_footer
    %s13 = sadd.s32 1, %s9
  $region7: #{forward.14} parent=0 // loop_footer_branch
    %8 = sbr.rel target = $region3
  $region8: #{forward.14} parent=0 // loop_exit
    _

// kernel: forward.15
$region0: #{forward.15}
  #allocation0 [shape = 'u32[]', space=smem, size = 0x4, offset = 0x4, fixed_abs, tag = 'smem constant byte address 0x4 - core index']
  #allocation1 [shape = 'u32[144,128]{1,0:T(1,128)}', space=vmem, size = 0x12000, scoped, tag = 'internal scratch']
  %s0 = inlined_call_operand.vmem [shape: bf16[16,128], index: 0, kind: input, shape index: {}]
  %s1 = inlined_call_operand.vmem [shape: bf16[128,128], index: 1, kind: input, shape index: {}]
  %s2 = inlined_call_operand.vmem [shape: f32[1,128], index: 2, kind: input, shape index: {}]
  %s3 = inlined_call_operand.vmem [shape: bf16[16,128], index: 3, kind: input, shape index: {}]
  %s4 = inlined_call_operand.vmem [shape: bf16[16,128], index: 4, kind: output, shape index: {}]
  %s5 = sld [smem:[#allocation0]]
  $region26: #{forward.15} parent=0
    _
  %s7 = ssub.s32 1, %s5
  %s8 = scalar_select 0, %s7, %s5
  // Predicated region
  $region2: #{forward.15} parent=0 // pred_check
    _
  $region3: #{forward.15} parent=0 // pred_check_branch
    %10 = sbr.rel (0) target = $region5
  $region4: #{forward.15} parent=0 // pred_region
    _
  $region5: #{forward.15} parent=0 // pred_fallthru
    _
  // Predicated region
  $region6: #{forward.15} parent=0 // pred_check
    _
  $region7: #{forward.15} parent=0 // pred_check_branch
    %12 = sbr.rel (0) target = $region9
  $region8: #{forward.15} parent=0 // pred_region
    _
  $region9: #{forward.15} parent=0 // pred_fallthru
    _
  // Predicated region
  $region10: #{forward.15} parent=0 // pred_check
    _
  $region11: #{forward.15} parent=0 // pred_check_branch
    %14 = sbr.rel (0) target = $region13
  $region12: #{forward.15} parent=0 // pred_region
    _
  $region13: #{forward.15} parent=0 // pred_fallthru
    _
  // Predicated region
  $region14: #{forward.15} parent=0 // pred_check
    _
  $region15: #{forward.15} parent=0 // pred_check_branch
    %16 = sbr.rel (0) target = $region17
  $region16: #{forward.15} parent=0 // pred_region
    _
  $region17: #{forward.15} parent=0 // pred_fallthru
    _
  %v18 = vld [vmem:[%s0] sm:$0xf]
  %v19 = vld [vmem:[%s0 + $0x4] sm:$0xf]
  %v20 = vld [vmem:[%s1] sm:$0xf]
  %v21 = vld [vmem:[%s1 + $0x4] sm:$0xf]
  %v22 = vld [vmem:[%s1 + $0x8] sm:$0xf]
  %v23 = vld [vmem:[%s1 + $0xc] sm:$0xf]
  %v24 = vld [vmem:[%s1 + $0x10] sm:$0xf]
  %v25 = vld [vmem:[%s1 + $0x14] sm:$0xf]
  %v26 = vld [vmem:[%s1 + $0x18] sm:$0xf]
  %v27 = vld [vmem:[%s1 + $0x1c] sm:$0xf]
  %v28 = vld [vmem:[%s1 + $0x20] sm:$0xf]
  %v29 = vld [vmem:[%s1 + $0x24] sm:$0xf]
  %v30 = vld [vmem:[%s1 + $0x28] sm:$0xf]
  %v31 = vld [vmem:[%s1 + $0x2c] sm:$0xf]
  %v32 = vld [vmem:[%s1 + $0x30] sm:$0xf]
  %v33 = vld [vmem:[%s1 + $0x34] sm:$0xf]
  %v34 = vld [vmem:[%s1 + $0x38] sm:$0xf]
  %v35 = vld [vmem:[%s1 + $0x3c] sm:$0xf]
  %v36 = vld [vmem:[%s2] sm:$0x1]
  %v38 = vlaneseq
  %v39 = vshrl.u32 %v38, 7
  %v40 = vsub.s32 0, %v39
  %v41 = vrot.slane %v36, %v40
  %v45 = vunpack.c.l.b16 %v18
  %v46 = vunpack.c.l.b16 %v19
  %v47 = vpack.c.b16 %v46, %v45
  %v65 = vunpack.c.l.b16 %v20
  %v66 = vunpack.c.l.b16 %v21
  %v67 = vunpack.c.l.b16 %v22
  %v68 = vunpack.c.l.b16 %v23
  %v69 = vunpack.c.l.b16 %v24
  %v70 = vunpack.c.l.b16 %v25
  %v71 = vunpack.c.l.b16 %v26
  %v72 = vunpack.c.l.b16 %v27
  %v73 = vunpack.c.l.b16 %v28
  %v74 = vunpack.c.l.b16 %v29
  %v75 = vunpack.c.l.b16 %v30
  %v76 = vunpack.c.l.b16 %v31
  %v77 = vunpack.c.l.b16 %v32
  %v78 = vunpack.c.l.b16 %v33
  %v79 = vunpack.c.l.b16 %v34
  %v80 = vunpack.c.l.b16 %v35
  %v81 = vpack.c.b16 %v66, %v65
  %v82 = vpack.c.b16 %v68, %v67
  %v83 = vpack.c.b16 %v70, %v69
  %v84 = vpack.c.b16 %v72, %v71
  %v85 = vpack.c.b16 %v74, %v73
  %v86 = vpack.c.b16 %v76, %v75
  %v87 = vpack.c.b16 %v78, %v77
  %v88 = vpack.c.b16 %v80, %v79
  %97 = vmatprep.subr.bf16.mxu0 0
  %98 = vmatpush1.bf16.msra.mxu0 %v81
  %99 = vmatprep.subr.bf16.mxu0 0
  %100 = vmatpush1.bf16.msra.mxu0 %v82
  %101 = vmatprep.subr.bf16.mxu0 0
  %102 = vmatpush1.bf16.msra.mxu0 %v83
  %103 = vmatprep.subr.bf16.mxu0 0
  %104 = vmatpush1.bf16.msra.mxu0 %v84
  %105 = vmatprep.subr.bf16.mxu0 0
  %106 = vmatpush1.bf16.msra.mxu0 %v85
  %107 = vmatprep.subr.bf16.mxu0 0
  %108 = vmatpush1.bf16.msra.mxu0 %v86
  %109 = vmatprep.subr.bf16.mxu0 0
  %110 = vmatpush1.bf16.msra.mxu0 %v87
  %111 = vmatprep.subr.bf16.mxu0 0
  %112 = vmatpush1.bf16.msra.mxu0 %v88
  %113 = vmatprep.subr.bf16.mxu0 0
  %114 = vmatpush1.bf16.msra.mxu0 0
  %115 = vmatprep.subr.bf16.mxu0 0
  %116 = vmatpush1.bf16.msra.mxu0 0
  %117 = vmatprep.subr.bf16.mxu0 0
  %118 = vmatpush1.bf16.msra.mxu0 0
  %119 = vmatprep.subr.bf16.mxu0 0
  %120 = vmatpush1.bf16.msra.mxu0 0
  %121 = vmatprep.subr.bf16.mxu0 0
  %122 = vmatpush1.bf16.msra.mxu0 0
  %123 = vmatprep.subr.bf16.mxu0 0
  %124 = vmatpush1.bf16.msra.mxu0 0
  %125 = vmatprep.subr.bf16.mxu0 0
  %126 = vmatpush1.bf16.msra.mxu0 0
  %127 = vmatprep.subr.bf16.mxu0 0
  %128 = vmatpush1.bf16.msra.mxu0 0
  %129 = vmatprep.mubr.bf16.mxu0 0
  %130 = vmatmul.mubr.bf16.gmra.mrb[0].mxu0 %v47
  %v131 = vpop.f32.mrb[0].mxu0
  %v132 = vadd.f32 %v41, %v131
  %v133 = vpop.f32.mrb[0].mxu0
  %v134 = vpop.f32.mrb[0].mxu0
  %v135 = vadd.f32 %v41, %v134
  %v136 = vpop.f32.mrb[0].mxu0
  %137 = vdwg.mxu0
  %v138 = vld [vmem:[%s3] sm:$0xf]
  %v139 = vld [vmem:[%s3 + $0x4] sm:$0xf]
  %v140 = vunpack.c.l.bf16 %v138
  %v141 = vunpack.c.l.bf16 %v139
  %v142 = vadd.f32 %v132, %v140
  %v143 = vadd.f32 %v135, %v141
  %v144 = vpack.c.bf16 %v143, %v142
  %v146 = vunpack.c.l.b16 %v144
  %v147 = vunpack.c.h.b16 %v144
  %v148 = vpack.c.b16 %v146, %v146
  %v149 = vpack.c.b16 %v147, %v147
  %152 = vst [vmem:[%s4] sm:$0xf] %v148
  %153 = vst [vmem:[%s4 + $0x4] sm:$0xf] %v149
  // Predicated region
  $region18: #{forward.15} parent=0 // pred_check
    _
  $region19: #{forward.15} parent=0 // pred_check_branch
    %155 = sbr.rel (0) target = $region21
  $region20: #{forward.15} parent=0 // pred_region
    _
  $region21: #{forward.15} parent=0 // pred_fallthru
    _
  // Predicated region
  $region22: #{forward.15} parent=0 // pred_check
    _
  $region23: #{forward.15} parent=0 // pred_check_branch
    %157 = sbr.rel (0) target = $region25
  $region24: #{forward.15} parent=0 // pred_region
    _
  $region25: #{forward.15} parent=0 // pred_fallthru
    _

// kernel: forward.16
$region0: #{forward.16}
  #allocation0 [shape = 'u32[]', space=smem, size = 0x4, offset = 0x4, fixed_abs, tag = 'smem constant byte address 0x4 - core index']
  #allocation1 [shape = 'u32[144,128]{1,0:T(1,128)}', space=vmem, size = 0x12000, scoped, tag = 'internal scratch']
  #allocation2 [shape = 'bf16[16,128]{1,0:T(16,128)(2,1)}', space=vmem, size = 0x1000, scoped, tag = 'scratch operand']
  %s0 = inlined_call_operand.vmem [shape: bf16[16,128], index: 0, kind: input, shape index: {}]
  %s1 = inlined_call_operand.vmem [shape: bf16[128,1024], index: 1, kind: input, shape index: {}]
  %s2 = inlined_call_operand.vmem [shape: f32[1,1024], index: 2, kind: input, shape index: {}]
  %s3 = inlined_call_operand.vmem [shape: f32[1,128], index: 3, kind: input, shape index: {}]
  %s4 = inlined_call_operand.vmem [shape: f32[1,128], index: 4, kind: input, shape index: {}]
  %s5 = inlined_call_operand.vmem [shape: bf16[16,1024], index: 5, kind: output, shape index: {}]
  %s6 = sld [smem:[#allocation0]]
  $region129: #{forward.16} parent=0
    _
  %s8 = ssub.s32 1, %s6
  %s9 = scalar_select 0, %s8, %s6
  $region1: #{forward.16} parent=0
    #allocation3 [shape = 'u8[131072]{0}', space=vmem, size = 0x20000, scoped, tag = 'input window, operand 1']
    #allocation4 [shape = 'u8[16384]{0}', space=vmem, size = 0x4000, scoped, tag = 'output window, operand 0']
    loop: start=0, step=1, limit=6
    $region2: #{forward.16} parent=1 // loop_pre_header
      _
    $region3: #{forward.16} parent=1 // loop_header
      %s11 = sphi 0, %s15
      %p12 = scmp.ge.s32.totalorder %s11, 6
      %s18 = sphi 0, %s37
      %s19 = sphi 0, %s33
      %s20 = sphi 0, %s29
      %s21 = sphi 0, %s18
      %s22 = sphi 0, %s19
      %s23 = sphi 0, %s20
      %s24 = sphi 0, %s21
      %s25 = sphi 0, %s22
      %s26 = sphi 0, %s23
      %s42 = sphi 0, %s44
      %s45 = sphi 0, %s42
      %s46 = sphi 0, %s45
      %s62 = sphi 0, %s46
      %s70 = sphi 0, %s72
      %s73 = sphi 0, %s70
      %s74 = sphi 0, %s73
      %s90 = sphi 0, %s74
      %s96 = sphi 0, %s98
      %s99 = sphi 0, %s96
      %s100 = sphi 0, %s99
      %s116 = sphi 0, %s100
      %s122 = sphi 0, %s124
      %s125 = sphi 0, %s122
      %s126 = sphi 0, %s125
      %s142 = sphi 0, %s126
      %s148 = sphi 0, %s150
      %s151 = sphi 0, %s148
      %s152 = sphi 0, %s151
      %s168 = sphi 0, %s152
      %s176 = sphi 0, %s178
      %s179 = sphi 0, %s176
      %s180 = sphi 0, %s179
      %s196 = sphi 0, %s180
    $region4: #{forward.16} parent=1 // loop_header_branch
      %14 = sbr.rel (%p12) target = $region8
    $region5: #{forward.16} parent=1 // loop_body
      %s16 = ssub.s32 %s11, 1
      %s17 = ssub.s32 %s11, 2
      %s27 = sadd.s32 1, %s20
      %p28 = scmp.ge.s32.totalorder %s27, 1
      %s29 = scalar_select %p28, 0, %s27
      %s30 = sadd.s32 1, %s19
      %s31 = scalar_select %p28, %s30, %s19
      %p32 = scmp.ge.s32.totalorder %s31, 4
      %s33 = scalar_select %p32, 0, %s31
      %s34 = sadd.s32 1, %s18
      %s35 = scalar_select %p32, %s34, %s18
      %p36 = scmp.ge.s32.totalorder %s35, 1
      %s37 = scalar_select %p36, 0, %s35
      %s38 = ssub.s32 %s18, %s37
      %s39 = ssub.s32 %s20, %s29
      %s40 = sor.u32 %s38, %s39
      %p41 = scmp.eq.s32.totalorder %s40, 0
      %s43 = sadd.s32 %s42, 1
      %s44 = scalar_select %p41, %s42, %s43
      %p47 = pneg %p41
      %p48 = scmp.eq.s32.totalorder %s11, 3
      %p49 = por %p47, %p48
      %p50 = scmp.ne.s32.totalorder %s42, %s45
      %p51 = scmp.eq.s32.totalorder %s11, 0
      %p52 = por %p50, %p51
      %p53 = scmp.ne.s32.totalorder %s42, %s45
      %p54 = scmp.eq.s32.totalorder %s16, 3
      %p55 = por %p53, %p54
      %p56 = scmp.ne.s32.totalorder %s45, %s46
      %p57 = scmp.eq.s32.totalorder %s16, 0
      %p58 = por %p56, %p57
      %p59 = scmp.ne.s32.totalorder %s45, %s46
      %p60 = scmp.eq.s32.totalorder %s17, 3
      %p61 = por %p59, %p60
      %p63 = scmp.ne.s32.totalorder %s46, %s62
      %p64 = scmp.eq.s32.totalorder %s17, 0
      %p65 = por %p63, %p64
      %s66 = ssub.s32 %s20, %s29
      %s67 = ssub.s32 %s19, %s33
      %s68 = sor.u32 %s66, %s67
      %p69 = scmp.eq.s32.totalorder %s68, 0
      %s71 = sadd.s32 %s70, 1
      %s72 = scalar_select %p69, %s70, %s71
      %p75 = pneg %p69
      %p76 = scmp.eq.s32.totalorder %s11, 3
      %p77 = por %p75, %p76
      %p78 = scmp.ne.s32.totalorder %s70, %s73
      %p79 = scmp.eq.s32.totalorder %s11, 0
      %p80 = por %p78, %p79
      %p81 = scmp.ne.s32.totalorder %s70, %s73
      %p82 = scmp.eq.s32.totalorder %s16, 3
      %p83 = por %p81, %p82
      %p84 = scmp.ne.s32.totalorder %s73, %s74
      %p85 = scmp.eq.s32.totalorder %s16, 0
      %p86 = por %p84, %p85
      %p87 = scmp.ne.s32.totalorder %s73, %s74
      %p88 = scmp.eq.s32.totalorder %s17, 3
      %p89 = por %p87, %p88
      %p91 = scmp.ne.s32.totalorder %s74, %s90
      %p92 = scmp.eq.s32.totalorder %s17, 0
      %p93 = por %p91, %p92
      %s94 = ssub.s32 %s19, %s33
      %p95 = scmp.eq.s32.totalorder %s94, 0
      %s97 = sadd.s32 %s96, 1
      %s98 = scalar_select %p95, %s96, %s97
      %p101 = pneg %p95
      %p102 = scmp.eq.s32.totalorder %s11, 3
      %p103 = por %p101, %p102
      %p104 = scmp.ne.s32.totalorder %s96, %s99
      %p105 = scmp.eq.s32.totalorder %s11, 0
      %p106 = por %p104, %p105
      %p107 = scmp.ne.s32.totalorder %s96, %s99
      %p108 = scmp.eq.s32.totalorder %s16, 3
      %p109 = por %p107, %p108
      %p110 = scmp.ne.s32.totalorder %s99, %s100
      %p111 = scmp.eq.s32.totalorder %s16, 0
      %p112 = por %p110, %p111
      %p113 = scmp.ne.s32.totalorder %s99, %s100
      %p114 = scmp.eq.s32.totalorder %s17, 3
      %p115 = por %p113, %p114
      %p117 = scmp.ne.s32.totalorder %s100, %s116
      %p118 = scmp.eq.s32.totalorder %s17, 0
      %p119 = por %p117, %p118
      %s120 = ssub.s32 %s20, %s29
      %p121 = scmp.eq.s32.totalorder %s120, 0
      %s123 = sadd.s32 %s122, 1
      %s124 = scalar_select %p121, %s122, %s123
      %p127 = pneg %p121
      %p128 = scmp.eq.s32.totalorder %s11, 3
      %p129 = por %p127, %p128
      %p130 = scmp.ne.s32.totalorder %s122, %s125
      %p131 = scmp.eq.s32.totalorder %s11, 0
      %p132 = por %p130, %p131
      %p133 = scmp.ne.s32.totalorder %s122, %s125
      %p134 = scmp.eq.s32.totalorder %s16, 3
      %p135 = por %p133, %p134
      %p136 = scmp.ne.s32.totalorder %s125, %s126
      %p137 = scmp.eq.s32.totalorder %s16, 0
      %p138 = por %p136, %p137
      %p139 = scmp.ne.s32.totalorder %s125, %s126
      %p140 = scmp.eq.s32.totalorder %s17, 3
      %p141 = por %p139, %p140
      %p143 = scmp.ne.s32.totalorder %s126, %s142
      %p144 = scmp.eq.s32.totalorder %s17, 0
      %p145 = por %p143, %p144
      %s146 = ssub.s32 %s20, %s29
      %p147 = scmp.eq.s32.totalorder %s146, 0
      %s149 = sadd.s32 %s148, 1
      %s150 = scalar_select %p147, %s148, %s149
      %p153 = pneg %p147
      %p154 = scmp.eq.s32.totalorder %s11, 3
      %p155 = por %p153, %p154
      %p156 = scmp.ne.s32.totalorder %s148, %s151
      %p157 = scmp.eq.s32.totalorder %s11, 0
      %p158 = por %p156, %p157
      %p159 = scmp.ne.s32.totalorder %s148, %s151
      %p160 = scmp.eq.s32.totalorder %s16, 3
      %p161 = por %p159, %p160
      %p162 = scmp.ne.s32.totalorder %s151, %s152
      %p163 = scmp.eq.s32.totalorder %s16, 0
      %p164 = por %p162, %p163
      %p165 = scmp.ne.s32.totalorder %s151, %s152
      %p166 = scmp.eq.s32.totalorder %s17, 3
      %p167 = por %p165, %p166
      %p169 = scmp.ne.s32.totalorder %s152, %s168
      %p170 = scmp.eq.s32.totalorder %s17, 0
      %p171 = por %p169, %p170
      %s172 = ssub.s32 %s18, %s37
      %s173 = ssub.s32 %s19, %s33
      %s174 = sor.u32 %s172, %s173
      %p175 = scmp.eq.s32.totalorder %s174, 0
      %s177 = sadd.s32 %s176, 1
      %s178 = scalar_select %p175, %s176, %s177
      %p181 = pneg %p175
      %p182 = scmp.eq.s32.totalorder %s11, 3
      %p183 = por %p181, %p182
      %p184 = scmp.ne.s32.totalorder %s176, %s179
      %p185 = scmp.eq.s32.totalorder %s11, 0
      %p186 = por %p184, %p185
      %p187 = scmp.ne.s32.totalorder %s176, %s179
      %p188 = scmp.eq.s32.totalorder %s16, 3
      %p189 = por %p187, %p188
      %p190 = scmp.ne.s32.totalorder %s179, %s180
      %p191 = scmp.eq.s32.totalorder %s16, 0
      %p192 = por %p190, %p191
      %p193 = scmp.ne.s32.totalorder %s179, %s180
      %p194 = scmp.eq.s32.totalorder %s17, 3
      %p195 = por %p193, %p194
      %p197 = scmp.ne.s32.totalorder %s180, %s196
      %p198 = scmp.eq.s32.totalorder %s17, 0
      %p199 = por %p197, %p198
      %p200 = scmp.le.s32.totalorder 1, %s11
      %p201 = scmp.lt.s32.totalorder %s11, 5
      %p202 = pnand %p200, %p201
      %p203 = pneg %p202
      // Predicated region
      $region9: #{forward.16} parent=5 // pred_check
        _
      $region10: #{forward.16} parent=5 // pred_check_branch
        %205 = sbr.rel (%p202) target = $region12
      $region11: #{forward.16} parent=5 // pred_region
        %s206 = ssub.s32 %s11, 1
        // Predicated region
        $region13: #{forward.16} parent=11 // pred_check
          %p207 = pneg %p58
        $region14: #{forward.16} parent=11 // pred_check_branch
          %209 = sbr.rel (%p207) target = $region16
        $region15: #{forward.16} parent=11 // pred_region
          %s210 = smul.u32 2, %s21
          %p211 = scmp.lt.s32.totalorder %s210, 1
          %s212 = scalar_select %p211, %s210, 1
          %p213 = scmp.lt.s32.totalorder %s23, 0
          %s214 = scalar_select %p213, %s23, 0
          %s215 = sadd.s32 %s214, %s212
          %s216 = smul.addr %s215, 4
          %s217 = scalar_lea.vmem %s0, %s216
          %s218 = smul.u32 2, %s21
        $region16: #{forward.16} parent=11 // pred_fallthru
          _
        // Predicated region
        $region17: #{forward.16} parent=11 // pred_check
          %p219 = pneg %p138
        $region18: #{forward.16} parent=11 // pred_check_branch
          %221 = sbr.rel (%p219) target = $region20
        $region19: #{forward.16} parent=11 // pred_region
          %p222 = scmp.lt.s32.totalorder %s23, 0
          %s223 = scalar_select %p222, %s23, 0
          %s224 = scalar_lea.vmem %s3, %s223
        $region20: #{forward.16} parent=11 // pred_fallthru
          _
        // Predicated region
        $region21: #{forward.16} parent=11 // pred_check
          %p225 = pneg %p164
        $region22: #{forward.16} parent=11 // pred_check_branch
          %227 = sbr.rel (%p225) target = $region24
        $region23: #{forward.16} parent=11 // pred_region
          %p228 = scmp.lt.s32.totalorder %s23, 0
          %s229 = scalar_select %p228, %s23, 0
          %s230 = scalar_lea.vmem %s4, %s229
        $region24: #{forward.16} parent=11 // pred_fallthru
          _
      $region12: #{forward.16} parent=5 // pred_fallthru
        _
      %p231 = scmp.lt.s32.totalorder %s11, 4
      // Predicated region
      $region25: #{forward.16} parent=5 // pred_check
        %p232 = pneg %p231
      $region26: #{forward.16} parent=5 // pred_check_branch
        %234 = sbr.rel (%p232) target = $region28
      $region27: #{forward.16} parent=5 // pred_region
        // Predicated region
        $region29: #{forward.16} parent=27 // pred_check
          %p235 = pneg %p80
        $region30: #{forward.16} parent=27 // pred_check_branch
          %237 = sbr.rel (%p235) target = $region32
        $region31: #{forward.16} parent=27 // pred_region
          %s238 = sand.u32 %s70, 1
          %s239 = sand.u32 %s70, 1
          %s240 = smul.addr %s239, 128
          %s241 = scalar_lea.vmem [#allocation3], %s240
          %s242 = smul.u32 16, %s20
          %s243 = smul.u32 2, %s19
          %s244 = smul.addr %s242, 8
          %s245 = sadd.s32 %s243, %s244
          %s246 = smul.addr %s245, 4
          %s247 = scalar_lea.vmem %s1, %s246
          // Predicated region
          $region33: #{forward.16} parent=31 // pred_check
            _
          $region34: #{forward.16} parent=31 // pred_check_branch
            %249 = sbr.rel (0) target = $region36
          $region35: #{forward.16} parent=31 // pred_region
            // Predicated region
            $region37: #{forward.16} parent=35 // pred_check
              _
            $region38: #{forward.16} parent=35 // pred_check_branch
              %251 = sbr.rel (0) target = $region40
            $region39: #{forward.16} parent=35 // pred_region
              // Predicated region
              $region52: #{forward.16} parent=39 // pred_check
                _
              $region53: #{forward.16} parent=39 // pred_check_branch
                %296 = sbr.rel (0) target = $region55
              $region54: #{forward.16} parent=39 // pred_region
                loop: start=0, step=1, limit=1
                $region56: #{forward.16} parent=54 // loop_pre_header
                  _
                $region57: #{forward.16} parent=54 // loop_header
                  %s298 = sphi 0, %s302
                  %p299 = scmp.ge.s32.totalorder %s298, 1
                  %s303 = sphi %s247, %s247
                  %s304 = sphi %s241, %s241
                $region58: #{forward.16} parent=54 // loop_header_branch
                  %301 = sbr.rel (%p299) target = $region62
                $region59: #{forward.16} parent=54 // loop_body
                  %v305 = vld [vmem:[%s303] sm:$0xff]
                  %306 = vst [vmem:[%s304] sm:$0xff] %v305
                  %v307 = vld [vmem:[%s303 + $0x20] sm:$0xff]
                  %308 = vst [vmem:[%s304 + $0x8] sm:$0xff] %v307
                  %v309 = vld [vmem:[%s303 + $0x40] sm:$0xff]
                  %310 = vst [vmem:[%s304 + $0x10] sm:$0xff] %v309
                  %v311 = vld [vmem:[%s303 + $0x60] sm:$0xff]
                  %312 = vst [vmem:[%s304 + $0x18] sm:$0xff] %v311
                  %v313 = vld [vmem:[%s303 + $0x80] sm:$0xff]
                  %314 = vst [vmem:[%s304 + $0x20] sm:$0xff] %v313
                  %v315 = vld [vmem:[%s303 + $0xa0] sm:$0xff]
                  %316 = vst [vmem:[%s304 + $0x28] sm:$0xff] %v315
                  %v317 = vld [vmem:[%s303 + $0xc0] sm:$0xff]
                  %318 = vst [vmem:[%s304 + $0x30] sm:$0xff] %v317
                  %v319 = vld [vmem:[%s303 + $0xe0] sm:$0xff]
                  %320 = vst [vmem:[%s304 + $0x38] sm:$0xff] %v319
                  %v321 = vld [vmem:[%s303 + $0x100] sm:$0xff]
                  %322 = vst [vmem:[%s304 + $0x40] sm:$0xff] %v321
                  %v323 = vld [vmem:[%s303 + $0x120] sm:$0xff]
                  %324 = vst [vmem:[%s304 + $0x48] sm:$0xff] %v323
                  %v325 = vld [vmem:[%s303 + $0x140] sm:$0xff]
                  %326 = vst [vmem:[%s304 + $0x50] sm:$0xff] %v325
                  %v327 = vld [vmem:[%s303 + $0x160] sm:$0xff]
                  %328 = vst [vmem:[%s304 + $0x58] sm:$0xff] %v327
                  %v329 = vld [vmem:[%s303 + $0x180] sm:$0xff]
                  %330 = vst [vmem:[%s304 + $0x60] sm:$0xff] %v329
                  %v331 = vld [vmem:[%s303 + $0x1a0] sm:$0xff]
                  %332 = vst [vmem:[%s304 + $0x68] sm:$0xff] %v331
                  %v333 = vld [vmem:[%s303 + $0x1c0] sm:$0xff]
                  %334 = vst [vmem:[%s304 + $0x70] sm:$0xff] %v333
                  %v335 = vld [vmem:[%s303 + $0x1e0] sm:$0xff]
                  %336 = vst [vmem:[%s304 + $0x78] sm:$0xff] %v335
                $region60: #{forward.16} parent=54 // loop_footer
                  %s302 = sadd.s32 1, %s298
                $region61: #{forward.16} parent=54 // loop_footer_branch
                  %297 = sbr.rel target = $region57
                $region62: #{forward.16} parent=54 // loop_exit
                  _
              $region55: #{forward.16} parent=39 // pred_fallthru
                _
              // Predicated region
              $region63: #{forward.16} parent=39 // pred_check
                _
              $region64: #{forward.16} parent=39 // pred_check_branch
                %338 = sbr.rel target = $region66
              $region65: #{forward.16} parent=39 // pred_region
                _
              $region66: #{forward.16} parent=39 // pred_fallthru
                _
            $region40: #{forward.16} parent=35 // pred_fallthru
              _
            // Predicated region
            $region41: #{forward.16} parent=35 // pred_check
              _
            $region42: #{forward.16} parent=35 // pred_check_branch
              %253 = sbr.rel target = $region44
            $region43: #{forward.16} parent=35 // pred_region
              loop: start=0, step=1, limit=1
              $region45: #{forward.16} parent=43 // loop_pre_header
                _
              $region46: #{forward.16} parent=43 // loop_header
                %s256 = sphi 0, %s260
                %p257 = scmp.ge.s32.totalorder %s256, 1
                %s261 = sphi %s247, %s247
                %s262 = sphi %s241, %s241
              $region47: #{forward.16} parent=43 // loop_header_branch
                %259 = sbr.rel (%p257) target = $region51
              $region48: #{forward.16} parent=43 // loop_body
                %v263 = vld [vmem:[%s261] sm:$0xff]
                %264 = vst [vmem:[%s262] sm:$0xff] %v263
                %v265 = vld [vmem:[%s261 + $0x20] sm:$0xff]
                %266 = vst [vmem:[%s262 + $0x8] sm:$0xff] %v265
                %v267 = vld [vmem:[%s261 + $0x40] sm:$0xff]
                %268 = vst [vmem:[%s262 + $0x10] sm:$0xff] %v267
                %v269 = vld [vmem:[%s261 + $0x60] sm:$0xff]
                %270 = vst [vmem:[%s262 + $0x18] sm:$0xff] %v269
                %v271 = vld [vmem:[%s261 + $0x80] sm:$0xff]
                %272 = vst [vmem:[%s262 + $0x20] sm:$0xff] %v271
                %v273 = vld [vmem:[%s261 + $0xa0] sm:$0xff]
                %274 = vst [vmem:[%s262 + $0x28] sm:$0xff] %v273
                %v275 = vld [vmem:[%s261 + $0xc0] sm:$0xff]
                %276 = vst [vmem:[%s262 + $0x30] sm:$0xff] %v275
                %v277 = vld [vmem:[%s261 + $0xe0] sm:$0xff]
                %278 = vst [vmem:[%s262 + $0x38] sm:$0xff] %v277
                %v279 = vld [vmem:[%s261 + $0x100] sm:$0xff]
                %280 = vst [vmem:[%s262 + $0x40] sm:$0xff] %v279
                %v281 = vld [vmem:[%s261 + $0x120] sm:$0xff]
                %282 = vst [vmem:[%s262 + $0x48] sm:$0xff] %v281
                %v283 = vld [vmem:[%s261 + $0x140] sm:$0xff]
                %284 = vst [vmem:[%s262 + $0x50] sm:$0xff] %v283
                %v285 = vld [vmem:[%s261 + $0x160] sm:$0xff]
                %286 = vst [vmem:[%s262 + $0x58] sm:$0xff] %v285
                %v287 = vld [vmem:[%s261 + $0x180] sm:$0xff]
                %288 = vst [vmem:[%s262 + $0x60] sm:$0xff] %v287
                %v289 = vld [vmem:[%s261 + $0x1a0] sm:$0xff]
                %290 = vst [vmem:[%s262 + $0x68] sm:$0xff] %v289
                %v291 = vld [vmem:[%s261 + $0x1c0] sm:$0xff]
                %292 = vst [vmem:[%s262 + $0x70] sm:$0xff] %v291
                %v293 = vld [vmem:[%s261 + $0x1e0] sm:$0xff]
                %294 = vst [vmem:[%s262 + $0x78] sm:$0xff] %v293
              $region49: #{forward.16} parent=43 // loop_footer
                %s260 = sadd.s32 1, %s256
              $region50: #{forward.16} parent=43 // loop_footer_branch
                %255 = sbr.rel target = $region46
              $region51: #{forward.16} parent=43 // loop_exit
                _
            $region44: #{forward.16} parent=35 // pred_fallthru
              _
          $region36: #{forward.16} parent=31 // pred_fallthru
            _
          %339 = vnop
        $region32: #{forward.16} parent=27 // pred_fallthru
          _
        // Predicated region
        $region67: #{forward.16} parent=27 // pred_check
          %p340 = pneg %p106
        $region68: #{forward.16} parent=27 // pred_check_branch
          %342 = sbr.rel (%p340) target = $region70
        $region69: #{forward.16} parent=27 // pred_region
          %s343 = smul.u32 2, %s19
          %p344 = scmp.lt.s32.totalorder %s343, 7
          %s345 = scalar_select %p344, %s343, 7
          %s346 = scalar_lea.vmem %s2, %s345
          %s347 = smul.u32 2, %s19
        $region70: #{forward.16} parent=27 // pred_fallthru
          _
      $region28: #{forward.16} parent=5 // pred_fallthru
        _
      %p348 = scmp.le.s32.totalorder 1, %s11
      %p349 = scmp.lt.s32.totalorder %s11, 5
      %p350 = pnand %p348, %p349
      %p351 = pneg %p350
      // Predicated region
      $region71: #{forward.16} parent=5 // pred_check
        _
      $region72: #{forward.16} parent=5 // pred_check_branch
        %353 = sbr.rel (%p350) target = $region74
      $region73: #{forward.16} parent=5 // pred_region
        %s354 = ssub.s32 %s11, 1
        %s355 = sand.u32 %s73, 1
        %s356 = sand.u32 %s73, 1
        %s357 = smul.addr %s356, 128
        %s358 = scalar_lea.vmem [#allocation3], %s357
        // Predicated region
        $region75: #{forward.16} parent=73 // pred_check
          %p359 = pneg %p86
        $region76: #{forward.16} parent=73 // pred_check_branch
          %361 = sbr.rel (%p359) target = $region78
        $region77: #{forward.16} parent=73 // pred_region
          _
        $region78: #{forward.16} parent=73 // pred_fallthru
          _
        %s362 = smul.u32 2, %s21
        %p363 = scmp.lt.s32.totalorder %s362, 1
        %s364 = scalar_select %p363, %s362, 1
        %p365 = scmp.lt.s32.totalorder %s23, 0
        %s366 = scalar_select %p365, %s23, 0
        %s367 = sadd.s32 %s366, %s364
        %s368 = smul.addr %s367, 4
        %s369 = scalar_lea.vmem %s0, %s368
        %p370 = pneg %p58
        %p371 = pneg %p55
        %s372 = sand.u32 %s73, 1
        %s373 = sand.u32 %s73, 1
        %s374 = smul.addr %s373, 128
        %s375 = scalar_lea.vmem [#allocation3], %s374
        %p376 = pneg %p86
        %p377 = pneg %p83
        %s378 = smul.u32 2, %s22
        %p379 = scmp.lt.s32.totalorder %s378, 7
        %s380 = scalar_select %p379, %s378, 7
        %s381 = scalar_lea.vmem %s2, %s380
        %p382 = pneg %p112
        %p383 = pneg %p109
        %p384 = scmp.lt.s32.totalorder %s23, 0
        %s385 = scalar_select %p384, %s23, 0
        %s386 = scalar_lea.vmem %s3, %s385
        %p387 = pneg %p138
        %p388 = pneg %p135
        %p389 = scmp.lt.s32.totalorder %s23, 0
        %s390 = scalar_select %p389, %s23, 0
        %s391 = scalar_lea.vmem %s4, %s390
        %p392 = pneg %p164
        %p393 = pneg %p161
        %p394 = pneg %p192
        %p395 = pneg %p189
        %s396 = sand.u32 %s179, 1
        %s397 = sand.u32 %s179, 1
        %s398 = smul.addr %s397, 16
        %s399 = scalar_lea.vmem [#allocation4], %s398
        %s400 = smul.u32 2, %s21
        %p401 = scmp.lt.s32.totalorder %s400, 1
        %s402 = scalar_select %p401, %s400, 1
        %p403 = scmp.lt.s32.totalorder %s23, 0
        %s404 = scalar_select %p403, %s23, 0
        %s405 = sadd.s32 %s404, %s402
        %s406 = smul.addr %s405, 4
        %s407 = scalar_lea.vmem %s0, %s406
        %s408 = smul.u32 2, %s21
        %s409 = smul.u32 16, %s23
        %s410 = smul.u32 2, %s22
        %s411 = smul.u32 2, %s22
        %p412 = scmp.lt.s32.totalorder %s411, 7
        %s413 = scalar_select %p412, %s411, 7
        %s414 = scalar_lea.vmem %s2, %s413
        %s415 = smul.u32 2, %s22
        %p416 = scmp.lt.s32.totalorder %s23, 0
        %s417 = scalar_select %p416, %s23, 0
        %s418 = scalar_lea.vmem %s3, %s417
        %p419 = scmp.lt.s32.totalorder %s23, 0
        %s420 = scalar_select %p419, %s23, 0
        %s421 = scalar_lea.vmem %s4, %s420
        %s422 = smul.u32 2, %s21
        %s423 = smul.u32 2, %s22
        %p425 = scmp.eq.s32.totalorder %s22, 0
        // Predicated region
        $region79: #{forward.16} parent=73 // pred_check
          %p426 = pneg %p425
        $region80: #{forward.16} parent=73 // pred_check_branch
          %428 = sbr.rel (%p426) target = $region82
        $region81: #{forward.16} parent=73 // pred_region
          %v429 = vld [vmem:[%s407] sm:$0xf]
          %v430 = vld [vmem:[%s407 + $0x4] sm:$0xf]
          %v431 = vunpack.c.l.bf16 %v429
          %v432 = vunpack.c.l.bf16 %v430
          %433 = vadd.xlane.f32.xlu0 %v431
          %v434 = vpop.xlane.xlu0 %433
          %435 = vadd.xlane.f32.xlu0 %v432
          %v436 = vpop.xlane.xlu0 %435
          %v437 = vrcp.pop 128.0
          %v438 = vmul.f32 %v434, %v437
          %v439 = vmul.f32 %v436, %v437
          %v440 = vsub.f32 %v431, %v438
          %v441 = vsub.f32 %v432, %v439
          %v442 = vmul.f32 %v440, %v440
          %v443 = vmul.f32 %v441, %v441
          %444 = vadd.xlane.f32.xlu0 %v442
          %v445 = vpop.xlane.xlu0 %444
          %446 = vadd.xlane.f32.xlu0 %v443
          %v447 = vpop.xlane.xlu0 %446
          %v448 = vmul.f32 %v445, %v437
          %v449 = vmul.f32 %v447, %v437
          %v450 = vadd.f32 %v448, 1e-06
          %v451 = vadd.f32 %v449, 1e-06
          %v452 = vrsqrt.pop %v450
          %v453 = vrsqrt.pop %v451
          %v454 = vmul.f32 %v440, %v452
          %v455 = vmul.f32 %v441, %v453
          %v456 = vld [vmem:[%s418] sm:$0x1]
          %v458 = vlaneseq
          %v459 = vshrl.u32 %v458, 7
          %v460 = vsub.s32 0, %v459
          %v461 = vrot.slane %v456, %v460
          %v463 = vmul.f32 %v454, %v461
          %v464 = vmul.f32 %v455, %v461
          %v465 = vld [vmem:[%s421] sm:$0x1]
          %v467 = vlaneseq
          %v468 = vshrl.u32 %v467, 7
          %v469 = vsub.s32 0, %v468
          %v470 = vrot.slane %v465, %v469
          %v472 = vadd.f32 %v463, %v470
          %v473 = vadd.f32 %v464, %v470
          %v474 = vpack.c.bf16 %v473, %v472
          %475 = vst [vmem:[#allocation2] sm:$0xff] %v474
        $region82: #{forward.16} parent=73 // pred_fallthru
          _
        %v476 = vld [vmem:[#allocation2] sm:$0xff]
        %v477 = vld [vmem:[%s358] sm:$0xff]
        %v478 = vld [vmem:[%s358 + $0x8] sm:$0xff]
        %v479 = vld [vmem:[%s358 + $0x10] sm:$0xff]
        %v480 = vld [vmem:[%s358 + $0x18] sm:$0xff]
        %v481 = vld [vmem:[%s358 + $0x20] sm:$0xff]
        %v482 = vld [vmem:[%s358 + $0x28] sm:$0xff]
        %v483 = vld [vmem:[%s358 + $0x30] sm:$0xff]
        %v484 = vld [vmem:[%s358 + $0x38] sm:$0xff]
        %v485 = vld [vmem:[%s358 + $0x40] sm:$0xff]
        %v486 = vld [vmem:[%s358 + $0x48] sm:$0xff]
        %v487 = vld [vmem:[%s358 + $0x50] sm:$0xff]
        %v488 = vld [vmem:[%s358 + $0x58] sm:$0xff]
        %v489 = vld [vmem:[%s358 + $0x60] sm:$0xff]
        %v490 = vld [vmem:[%s358 + $0x68] sm:$0xff]
        %v491 = vld [vmem:[%s358 + $0x70] sm:$0xff]
        %v492 = vld [vmem:[%s358 + $0x78] sm:$0xff]
        %v493 = vld [vmem:[%s414] sm:$0x3]
        %v495 = vlaneseq
        %v496 = vshrl.u32 %v495, 7
        %v497 = vsub.s32 0, %v496
        %v498 = vrot.slane %v493, %v497
        %v499 = vlaneseq
        %v500 = vshrl.u32 %v499, 7
        %v501 = vsub.s32 1, %v500
        %v502 = vrot.slane %v493, %v501
        %v521 = vunpack.c.l.b16 %v477
        %v522 = vunpack.c.h.b16 %v477
        %v523 = vunpack.c.l.b16 %v478
        %v524 = vunpack.c.h.b16 %v478
        %v525 = vunpack.c.l.b16 %v479
        %v526 = vunpack.c.h.b16 %v479
        %v527 = vunpack.c.l.b16 %v480
        %v528 = vunpack.c.h.b16 %v480
        %v529 = vunpack.c.l.b16 %v481
        %v530 = vunpack.c.h.b16 %v481
        %v531 = vunpack.c.l.b16 %v482
        %v532 = vunpack.c.h.b16 %v482
        %v533 = vunpack.c.l.b16 %v483
        %v534 = vunpack.c.h.b16 %v483
        %v535 = vunpack.c.l.b16 %v484
        %v536 = vunpack.c.h.b16 %v484
        %v537 = vunpack.c.l.b16 %v485
        %v538 = vunpack.c.h.b16 %v485
        %v539 = vunpack.c.l.b16 %v486
        %v540 = vunpack.c.h.b16 %v486
        %v541 = vunpack.c.l.b16 %v487
        %v542 = vunpack.c.h.b16 %v487
        %v543 = vunpack.c.l.b16 %v488
        %v544 = vunpack.c.h.b16 %v488
        %v545 = vunpack.c.l.b16 %v489
        %v546 = vunpack.c.h.b16 %v489
        %v547 = vunpack.c.l.b16 %v490
        %v548 = vunpack.c.h.b16 %v490
        %v549 = vunpack.c.l.b16 %v491
        %v550 = vunpack.c.h.b16 %v491
        %v551 = vunpack.c.l.b16 %v492
        %v552 = vunpack.c.h.b16 %v492
        %v553 = vpack.c.b16 %v523, %v521
        %v554 = vpack.c.b16 %v524, %v522
        %v555 = vpack.c.b16 %v527, %v525
        %v556 = vpack.c.b16 %v528, %v526
        %v557 = vpack.c.b16 %v531, %v529
        %v558 = vpack.c.b16 %v532, %v530
        %v559 = vpack.c.b16 %v535, %v533
        %v560 = vpack.c.b16 %v536, %v534
        %v561 = vpack.c.b16 %v539, %v537
        %v562 = vpack.c.b16 %v540, %v538
        %v563 = vpack.c.b16 %v543, %v541
        %v564 = vpack.c.b16 %v544, %v542
        %v565 = vpack.c.b16 %v547, %v545
        %v566 = vpack.c.b16 %v548, %v546
        %v567 = vpack.c.b16 %v551, %v549
        %v568 = vpack.c.b16 %v552, %v550
        %585 = vmatprep.subr.bf16.mxu0 %v554
        %586 = vmatpush1.bf16.msra.mxu0 %v553
        %587 = vmatprep.subr.bf16.mxu0 %v556
        %588 = vmatpush1.bf16.msra.mxu0 %v555
        %589 = vmatprep.subr.bf16.mxu0 %v558
        %590 = vmatpush1.bf16.msra.mxu0 %v557
        %591 = vmatprep.subr.bf16.mxu0 %v560
        %592 = vmatpush1.bf16.msra.mxu0 %v559
        %593 = vmatprep.subr.bf16.mxu0 %v562
        %594 = vmatpush1.bf16.msra.mxu0 %v561
        %595 = vmatprep.subr.bf16.mxu0 %v564
        %596 = vmatpush1.bf16.msra.mxu0 %v563
        %597 = vmatprep.subr.bf16.mxu0 %v566
        %598 = vmatpush1.bf16.msra.mxu0 %v565
        %599 = vmatprep.subr.bf16.mxu0 %v568
        %600 = vmatpush1.bf16.msra.mxu0 %v567
        %601 = vmatprep.subr.bf16.mxu0 0
        %602 = vmatpush1.bf16.msra.mxu0 0
        %603 = vmatprep.subr.bf16.mxu0 0
        %604 = vmatpush1.bf16.msra.mxu0 0
        %605 = vmatprep.subr.bf16.mxu0 0
        %606 = vmatpush1.bf16.msra.mxu0 0
        %607 = vmatprep.subr.bf16.mxu0 0
        %608 = vmatpush1.bf16.msra.mxu0 0
        %609 = vmatprep.subr.bf16.mxu0 0
        %610 = vmatpush1.bf16.msra.mxu0 0
        %611 = vmatprep.subr.bf16.mxu0 0
        %612 = vmatpush1.bf16.msra.mxu0 0
        %613 = vmatprep.subr.bf16.mxu0 0
        %614 = vmatpush1.bf16.msra.mxu0 0
        %615 = vmatprep.subr.bf16.mxu0 0
        %616 = vmatpush1.bf16.msra.mxu0 0
        %617 = vmatprep.mubr.bf16.mxu0 0
        %618 = vmatmul.mubr.bf16.gmra.mrb[0].mxu0 %v476
        %v619 = vpop.f32.mrb[0].mxu0
        %v620 = vadd.f32 %v498, %v619
        %v621 = vpop.f32.mrb[0].mxu0
        %v622 = vadd.f32 %v502, %v621
        %v623 = vpop.f32.mrb[0].mxu0
        %v624 = vadd.f32 %v498, %v623
        %v625 = vpop.f32.mrb[0].mxu0
        %v626 = vadd.f32 %v502, %v625
        %627 = vdwg.mxu0
        %v628 = vmul.f32 %v620, 0.5
        %v629 = vmul.f32 %v622, 0.5
        %v630 = vmul.f32 %v624, 0.5
        %v631 = vmul.f32 %v626, 0.5
        %v632 = vmul.f32 %v620, 0.044715
        %v633 = vmul.f32 %v622, 0.044715
        %v634 = vmul.f32 %v624, 0.044715
        %v635 = vmul.f32 %v626, 0.044715
        %v636 = vmul.f32 %v632, %v620
        %v637 = vmul.f32 %v633, %v622
        %v638 = vmul.f32 %v634, %v624
        %v639 = vmul.f32 %v635, %v626
        %v640 = vmul.f32 %v636, %v620
        %v641 = vmul.f32 %v637, %v622
        %v642 = vmul.f32 %v638, %v624
        %v643 = vmul.f32 %v639, %v626
        %v644 = vadd.f32 %v620, %v640
        %v645 = vadd.f32 %v622, %v641
        %v646 = vadd.f32 %v624, %v642
        %v647 = vadd.f32 %v626, %v643
        %v648 = vmul.f32 %v644, 0.7978846
        %v649 = vmul.f32 %v645, 0.7978846
        %v650 = vmul.f32 %v646, 0.7978846
        %v651 = vmul.f32 %v647, 0.7978846
        %v652 = vtanh.pop %v648
        %v653 = vtanh.pop %v649
        %v654 = vtanh.pop %v650
        %v655 = vtanh.pop %v651
        %v656 = vadd.f32 %v652, 1.0
        %v657 = vadd.f32 %v653, 1.0
        %v658 = vadd.f32 %v654, 1.0
        %v659 = vadd.f32 %v655, 1.0
        %v660 = vmul.f32 %v628, %v656
        %v661 = vmul.f32 %v629, %v657
        %v662 = vmul.f32 %v630, %v658
        %v663 = vmul.f32 %v631, %v659
        %v664 = vpack.c.bf16 %v662, %v660
        %v665 = vpack.c.bf16 %v663, %v661
        %v668 = vunpack.c.l.b16 %v664
        %v669 = vunpack.c.l.b16 %v665
        %v670 = vunpack.c.h.b16 %v664
        %v671 = vunpack.c.h.b16 %v665
        %v672 = vpack.c.b16 %v669, %v668
        %v673 = vpack.c.b16 %v671, %v670
        %676 = vst [vmem:[%s399] sm:$0xff] %v672
        %677 = vst [vmem:[%s399 + $0x8] sm:$0xff] %v673
        %s678 = sand.u32 %s179, 1
        %s679 = sand.u32 %s179, 1
        %s680 = smul.addr %s679, 16
        %s681 = scalar_lea.vmem [#allocation4], %s680
        // Predicated region
        $region83: #{forward.16} parent=73 // pred_check
          %p682 = pneg %p189
        $region84: #{forward.16} parent=73 // pred_check_branch
          %684 = sbr.rel (%p682) target = $region86
        $region85: #{forward.16} parent=73 // pred_region
          %s685 = smul.u32 2, %s21
          %s686 = smul.u32 2, %s22
          %s687 = smul.addr %s685, 8
          %s688 = sadd.s32 %s686, %s687
          %s689 = smul.addr %s688, 4
          %s690 = scalar_lea.vmem %s5, %s689
          // Predicated region
          $region87: #{forward.16} parent=85 // pred_check
            _
          $region88: #{forward.16} parent=85 // pred_check_branch
            %692 = sbr.rel (0) target = $region90
          $region89: #{forward.16} parent=85 // pred_region
            // Predicated region
            $region91: #{forward.16} parent=89 // pred_check
              _
            $region92: #{forward.16} parent=89 // pred_check_branch
              %694 = sbr.rel (0) target = $region94
            $region93: #{forward.16} parent=89 // pred_region
              // Predicated region
              $region106: #{forward.16} parent=93 // pred_check
                _
              $region107: #{forward.16} parent=93 // pred_check_branch
                %711 = sbr.rel (0) target = $region109
              $region108: #{forward.16} parent=93 // pred_region
                loop: start=0, step=1, limit=1
                $region110: #{forward.16} parent=108 // loop_pre_header
                  _
                $region111: #{forward.16} parent=108 // loop_header
                  %s713 = sphi 0, %s717
                  %p714 = scmp.ge.s32.totalorder %s713, 1
                  %s718 = sphi %s681, %s681
                  %s719 = sphi %s690, %s690
                $region112: #{forward.16} parent=108 // loop_header_branch
                  %716 = sbr.rel (%p714) target = $region116
                $region113: #{forward.16} parent=108 // loop_body
                  %v720 = vld [vmem:[%s718] sm:$0xff]
                  %721 = vst [vmem:[%s719] sm:$0xff] %v720
                  %v722 = vld [vmem:[%s718 + $0x8] sm:$0xff]
                  %723 = vst [vmem:[%s719 + $0x20] sm:$0xff] %v722
                $region114: #{forward.16} parent=108 // loop_footer
                  %s717 = sadd.s32 1, %s713
                $region115: #{forward.16} parent=108 // loop_footer_branch
                  %712 = sbr.rel target = $region111
                $region116: #{forward.16} parent=108 // loop_exit
                  _
              $region109: #{forward.16} parent=93 // pred_fallthru
                _
              // Predicated region
              $region117: #{forward.16} parent=93 // pred_check
                _
              $region118: #{forward.16} parent=93 // pred_check_branch
                %725 = sbr.rel target = $region120
              $region119: #{forward.16} parent=93 // pred_region
                _
              $region120: #{forward.16} parent=93 // pred_fallthru
                _
            $region94: #{forward.16} parent=89 // pred_fallthru
              _
            // Predicated region
            $region95: #{forward.16} parent=89 // pred_check
              _
            $region96: #{forward.16} parent=89 // pred_check_branch
              %696 = sbr.rel target = $region98
            $region97: #{forward.16} parent=89 // pred_region
              loop: start=0, step=1, limit=1
              $region99: #{forward.16} parent=97 // loop_pre_header
                _
              $region100: #{forward.16} parent=97 // loop_header
                %s699 = sphi 0, %s703
                %p700 = scmp.ge.s32.totalorder %s699, 1
                %s704 = sphi %s681, %s681
                %s705 = sphi %s690, %s690
              $region101: #{forward.16} parent=97 // loop_header_branch
                %702 = sbr.rel (%p700) target = $region105
              $region102: #{forward.16} parent=97 // loop_body
                %v706 = vld [vmem:[%s704] sm:$0xff]
                %707 = vst [vmem:[%s705] sm:$0xff] %v706
                %v708 = vld [vmem:[%s704 + $0x8] sm:$0xff]
                %709 = vst [vmem:[%s705 + $0x20] sm:$0xff] %v708
              $region103: #{forward.16} parent=97 // loop_footer
                %s703 = sadd.s32 1, %s699
              $region104: #{forward.16} parent=97 // loop_footer_branch
                %698 = sbr.rel target = $region100
              $region105: #{forward.16} parent=97 // loop_exit
                _
            $region98: #{forward.16} parent=89 // pred_fallthru
              _
          $region90: #{forward.16} parent=85 // pred_fallthru
            _
          %726 = vnop
        $region86: #{forward.16} parent=73 // pred_fallthru
          _
      $region74: #{forward.16} parent=5 // pred_fallthru
        _
      %p727 = scmp.le.s32.totalorder 2, %s11
      // Predicated region
      $region121: #{forward.16} parent=5 // pred_check
        %p728 = pneg %p727
      $region122: #{forward.16} parent=5 // pred_check_branch
        %730 = sbr.rel (%p728) target = $region124
      $region123: #{forward.16} parent=5 // pred_region
        %s731 = ssub.s32 %s11, 2
        // Predicated region
        $region125: #{forward.16} parent=123 // pred_check
          %p732 = pneg %p195
        $region126: #{forward.16} parent=123 // pred_check_branch
          %734 = sbr.rel (%p732) target = $region128
        $region127: #{forward.16} parent=123 // pred_region
          %s735 = sand.u32 %s180, 1
          %s736 = sand.u32 %s180, 1
          %s737 = smul.addr %s736, 16
          %s738 = scalar_lea.vmem [#allocation4], %s737
        $region128: #{forward.16} parent=123 // pred_fallthru
          _
      $region124: #{forward.16} parent=5 // pred_fallthru
        _
    $region6: #{forward.16} parent=1 // loop_footer
      %s15 = sadd.s32 1, %s11
    $region7: #{forward.16} parent=1 // loop_footer_branch
      %10 = sbr.rel target = $region3
    $region8: #{forward.16} parent=1 // loop_exit
      _

// kernel: forward.17
$region0: #{forward.17}
  #allocation0 [shape = 'u32[]', space=smem, size = 0x4, offset = 0x4, fixed_abs, tag = 'smem constant byte address 0x4 - core index']
  #allocation1 [shape = 'u32[144,128]{1,0:T(1,128)}', space=vmem, size = 0x12000, scoped, tag = 'internal scratch']
  #allocation2 [shape = 'f32[16,128]{1,0:T(8,128)}', space=vmem, size = 0x2000, scoped, tag = 'scratch operand']
  %s0 = inlined_call_operand.vmem [shape: bf16[16,1024], index: 0, kind: input, shape index: {}]
  %s1 = inlined_call_operand.vmem [shape: bf16[1024,128], index: 1, kind: input, shape index: {}]
  %s2 = inlined_call_operand.vmem [shape: f32[1,128], index: 2, kind: input, shape index: {}]
  %s3 = inlined_call_operand.vmem [shape: bf16[16,128], index: 3, kind: input, shape index: {}]
  %s4 = inlined_call_operand.vmem [shape: bf16[16,128], index: 4, kind: output, shape index: {}]
  %s5 = sld [smem:[#allocation0]]
  $region80: #{forward.17} parent=0
    _
  %s7 = ssub.s32 1, %s5
  %s8 = scalar_select 0, %s7, %s5
  $region1: #{forward.17} parent=0
    #allocation3 [shape = 'u8[32768]{0}', space=vmem, size = 0x8000, scoped, tag = 'input window, operand 0']
    loop: start=0, step=1, limit=4
    $region2: #{forward.17} parent=1 // loop_pre_header
      _
    $region3: #{forward.17} parent=1 // loop_header
      %s10 = sphi 0, %s14
      %p11 = scmp.ge.s32.totalorder %s10, 4
      %s17 = sphi 0, %s36
      %s18 = sphi 0, %s32
      %s19 = sphi 0, %s28
      %s20 = sphi 0, %s17
      %s21 = sphi 0, %s18
      %s22 = sphi 0, %s19
      %s23 = sphi 0, %s20
      %s24 = sphi 0, %s21
      %s25 = sphi 0, %s22
      %s41 = sphi 0, %s43
      %s44 = sphi 0, %s41
      %s45 = sphi 0, %s44
      %s61 = sphi 0, %s45
      %s69 = sphi 0, %s71
      %s72 = sphi 0, %s69
      %s73 = sphi 0, %s72
      %s89 = sphi 0, %s73
      %s95 = sphi 0, %s97
      %s98 = sphi 0, %s95
      %s99 = sphi 0, %s98
      %s115 = sphi 0, %s99
      %s123 = sphi 0, %s125
      %s126 = sphi 0, %s123
      %s127 = sphi 0, %s126
      %s143 = sphi 0, %s127
      %s151 = sphi 0, %s153
      %s154 = sphi 0, %s151
      %s155 = sphi 0, %s154
      %s171 = sphi 0, %s155
    $region4: #{forward.17} parent=1 // loop_header_branch
      %13 = sbr.rel (%p11) target = $region8
    $region5: #{forward.17} parent=1 // loop_body
      %s15 = ssub.s32 %s10, 1
      %s16 = ssub.s32 %s10, 2
      %s26 = sadd.s32 1, %s19
      %p27 = scmp.ge.s32.totalorder %s26, 2
      %s28 = scalar_select %p27, 0, %s26
      %s29 = sadd.s32 1, %s18
      %s30 = scalar_select %p27, %s29, %s18
      %p31 = scmp.ge.s32.totalorder %s30, 1
      %s32 = scalar_select %p31, 0, %s30
      %s33 = sadd.s32 1, %s17
      %s34 = scalar_select %p31, %s33, %s17
      %p35 = scmp.ge.s32.totalorder %s34, 1
      %s36 = scalar_select %p35, 0, %s34
      %s37 = ssub.s32 %s17, %s36
      %s38 = ssub.s32 %s19, %s28
      %s39 = sor.u32 %s37, %s38
      %p40 = scmp.eq.s32.totalorder %s39, 0
      %s42 = sadd.s32 %s41, 1
      %s43 = scalar_select %p40, %s41, %s42
      %p46 = pneg %p40
      %p47 = scmp.eq.s32.totalorder %s10, 1
      %p48 = por %p46, %p47
      %p49 = scmp.ne.s32.totalorder %s41, %s44
      %p50 = scmp.eq.s32.totalorder %s10, 0
      %p51 = por %p49, %p50
      %p52 = scmp.ne.s32.totalorder %s41, %s44
      %p53 = scmp.eq.s32.totalorder %s15, 1
      %p54 = por %p52, %p53
      %p55 = scmp.ne.s32.totalorder %s44, %s45
      %p56 = scmp.eq.s32.totalorder %s15, 0
      %p57 = por %p55, %p56
      %p58 = scmp.ne.s32.totalorder %s44, %s45
      %p59 = scmp.eq.s32.totalorder %s16, 1
      %p60 = por %p58, %p59
      %p62 = scmp.ne.s32.totalorder %s45, %s61
      %p63 = scmp.eq.s32.totalorder %s16, 0
      %p64 = por %p62, %p63
      %s65 = ssub.s32 %s19, %s28
      %s66 = ssub.s32 %s18, %s32
      %s67 = sor.u32 %s65, %s66
      %p68 = scmp.eq.s32.totalorder %s67, 0
      %s70 = sadd.s32 %s69, 1
      %s71 = scalar_select %p68, %s69, %s70
      %p74 = pneg %p68
      %p75 = scmp.eq.s32.totalorder %s10, 1
      %p76 = por %p74, %p75
      %p77 = scmp.ne.s32.totalorder %s69, %s72
      %p78 = scmp.eq.s32.totalorder %s10, 0
      %p79 = por %p77, %p78
      %p80 = scmp.ne.s32.totalorder %s69, %s72
      %p81 = scmp.eq.s32.totalorder %s15, 1
      %p82 = por %p80, %p81
      %p83 = scmp.ne.s32.totalorder %s72, %s73
      %p84 = scmp.eq.s32.totalorder %s15, 0
      %p85 = por %p83, %p84
      %p86 = scmp.ne.s32.totalorder %s72, %s73
      %p87 = scmp.eq.s32.totalorder %s16, 1
      %p88 = por %p86, %p87
      %p90 = scmp.ne.s32.totalorder %s73, %s89
      %p91 = scmp.eq.s32.totalorder %s16, 0
      %p92 = por %p90, %p91
      %s93 = ssub.s32 %s18, %s32
      %p94 = scmp.eq.s32.totalorder %s93, 0
      %s96 = sadd.s32 %s95, 1
      %s97 = scalar_select %p94, %s95, %s96
      %p100 = pneg %p94
      %p101 = scmp.eq.s32.totalorder %s10, 1
      %p102 = por %p100, %p101
      %p103 = scmp.ne.s32.totalorder %s95, %s98
      %p104 = scmp.eq.s32.totalorder %s10, 0
      %p105 = por %p103, %p104
      %p106 = scmp.ne.s32.totalorder %s95, %s98
      %p107 = scmp.eq.s32.totalorder %s15, 1
      %p108 = por %p106, %p107
      %p109 = scmp.ne.s32.totalorder %s98, %s99
      %p110 = scmp.eq.s32.totalorder %s15, 0
      %p111 = por %p109, %p110
      %p112 = scmp.ne.s32.totalorder %s98, %s99
      %p113 = scmp.eq.s32.totalorder %s16, 1
      %p114 = por %p112, %p113
      %p116 = scmp.ne.s32.totalorder %s99, %s115
      %p117 = scmp.eq.s32.totalorder %s16, 0
      %p118 = por %p116, %p117
      %s119 = ssub.s32 %s17, %s36
      %s120 = ssub.s32 %s18, %s32
      %s121 = sor.u32 %s119, %s120
      %p122 = scmp.eq.s32.totalorder %s121, 0
      %s124 = sadd.s32 %s123, 1
      %s125 = scalar_select %p122, %s123, %s124
      %p128 = pneg %p122
      %p129 = scmp.eq.s32.totalorder %s10, 1
      %p130 = por %p128, %p129
      %p131 = scmp.ne.s32.totalorder %s123, %s126
      %p132 = scmp.eq.s32.totalorder %s10, 0
      %p133 = por %p131, %p132
      %p134 = scmp.ne.s32.totalorder %s123, %s126
      %p135 = scmp.eq.s32.totalorder %s15, 1
      %p136 = por %p134, %p135
      %p137 = scmp.ne.s32.totalorder %s126, %s127
      %p138 = scmp.eq.s32.totalorder %s15, 0
      %p139 = por %p137, %p138
      %p140 = scmp.ne.s32.totalorder %s126, %s127
      %p141 = scmp.eq.s32.totalorder %s16, 1
      %p142 = por %p140, %p141
      %p144 = scmp.ne.s32.totalorder %s127, %s143
      %p145 = scmp.eq.s32.totalorder %s16, 0
      %p146 = por %p144, %p145
      %s147 = ssub.s32 %s17, %s36
      %s148 = ssub.s32 %s18, %s32
      %s149 = sor.u32 %s147, %s148
      %p150 = scmp.eq.s32.totalorder %s149, 0
      %s152 = sadd.s32 %s151, 1
      %s153 = scalar_select %p150, %s151, %s152
      %p156 = pneg %p150
      %p157 = scmp.eq.s32.totalorder %s10, 1
      %p158 = por %p156, %p157
      %p159 = scmp.ne.s32.totalorder %s151, %s154
      %p160 = scmp.eq.s32.totalorder %s10, 0
      %p161 = por %p159, %p160
      %p162 = scmp.ne.s32.totalorder %s151, %s154
      %p163 = scmp.eq.s32.totalorder %s15, 1
      %p164 = por %p162, %p163
      %p165 = scmp.ne.s32.totalorder %s154, %s155
      %p166 = scmp.eq.s32.totalorder %s15, 0
      %p167 = por %p165, %p166
      %p168 = scmp.ne.s32.totalorder %s154, %s155
      %p169 = scmp.eq.s32.totalorder %s16, 1
      %p170 = por %p168, %p169
      %p172 = scmp.ne.s32.totalorder %s155, %s171
      %p173 = scmp.eq.s32.totalorder %s16, 0
      %p174 = por %p172, %p173
      %p175 = scmp.le.s32.totalorder 1, %s10
      %p176 = scmp.lt.s32.totalorder %s10, 3
      %p177 = pnand %p175, %p176
      %p178 = pneg %p177
      // Predicated region
      $region9: #{forward.17} parent=5 // pred_check
        _
      $region10: #{forward.17} parent=5 // pred_check_branch
        %180 = sbr.rel (%p177) target = $region12
      $region11: #{forward.17} parent=5 // pred_region
        %s181 = ssub.s32 %s10, 1
        // Predicated region
        $region13: #{forward.17} parent=11 // pred_check
          %p182 = pneg %p111
        $region14: #{forward.17} parent=11 // pred_check_branch
          %184 = sbr.rel (%p182) target = $region16
        $region15: #{forward.17} parent=11 // pred_region
          %p185 = scmp.lt.s32.totalorder %s21, 0
          %s186 = scalar_select %p185, %s21, 0
          %s187 = scalar_lea.vmem %s2, %s186
        $region16: #{forward.17} parent=11 // pred_fallthru
          _
        // Predicated region
        $region17: #{forward.17} parent=11 // pred_check
          %p188 = pneg %p139
        $region18: #{forward.17} parent=11 // pred_check_branch
          %190 = sbr.rel (%p188) target = $region20
        $region19: #{forward.17} parent=11 // pred_region
          %s191 = smul.u32 2, %s20
          %p192 = scmp.lt.s32.totalorder %s191, 1
          %s193 = scalar_select %p192, %s191, 1
          %p194 = scmp.lt.s32.totalorder %s21, 0
          %s195 = scalar_select %p194, %s21, 0
          %s196 = sadd.s32 %s195, %s193
          %s197 = smul.addr %s196, 4
          %s198 = scalar_lea.vmem %s3, %s197
          %s199 = smul.u32 2, %s20
        $region20: #{forward.17} parent=11 // pred_fallthru
          _
      $region12: #{forward.17} parent=5 // pred_fallthru
        _
      %p200 = scmp.lt.s32.totalorder %s10, 2
      // Predicated region
      $region21: #{forward.17} parent=5 // pred_check
        %p201 = pneg %p200
      $region22: #{forward.17} parent=5 // pred_check_branch
        %203 = sbr.rel (%p201) target = $region24
      $region23: #{forward.17} parent=5 // pred_region
        // Predicated region
        $region25: #{forward.17} parent=23 // pred_check
          %p204 = pneg %p51
        $region26: #{forward.17} parent=23 // pred_check_branch
          %206 = sbr.rel (%p204) target = $region28
        $region27: #{forward.17} parent=23 // pred_region
          %s207 = sand.u32 %s41, 1
          %s208 = sand.u32 %s41, 1
          %s209 = smul.addr %s208, 32
          %s210 = scalar_lea.vmem [#allocation3], %s209
          %s211 = smul.u32 2, %s17
          %s212 = smul.u32 4, %s19
          %s213 = smul.addr %s211, 8
          %s214 = sadd.s32 %s212, %s213
          %s215 = smul.addr %s214, 4
          %s216 = scalar_lea.vmem %s0, %s215
          // Predicated region
          $region29: #{forward.17} parent=27 // pred_check
            _
          $region30: #{forward.17} parent=27 // pred_check_branch
            %218 = sbr.rel (0) target = $region32
          $region31: #{forward.17} parent=27 // pred_region
            // Predicated region
            $region33: #{forward.17} parent=31 // pred_check
              _
            $region34: #{forward.17} parent=31 // pred_check_branch
              %220 = sbr.rel (0) target = $region36
            $region35: #{forward.17} parent=31 // pred_region
              loop: start=0, step=1, limit=1
              $region37: #{forward.17} parent=35 // loop_pre_header
                _
              $region38: #{forward.17} parent=35 // loop_header
                %s222 = sphi 0, %s226
                %p223 = scmp.ge.s32.totalorder %s222, 1
                %s227 = sphi %s216, %s216
                %s228 = sphi %s210, %s210
              $region39: #{forward.17} parent=35 // loop_header_branch
                %225 = sbr.rel (%p223) target = $region43
              $region40: #{forward.17} parent=35 // loop_body
                %v229 = vld [vmem:[%s227] sm:$0xff]
                %230 = vst [vmem:[%s228] sm:$0xff] %v229
                %v231 = vld [vmem:[%s227 + $0x8] sm:$0xff]
                %232 = vst [vmem:[%s228 + $0x8] sm:$0xff] %v231
                %v233 = vld [vmem:[%s227 + $0x20] sm:$0xff]
                %234 = vst [vmem:[%s228 + $0x10] sm:$0xff] %v233
                %v235 = vld [vmem:[%s227 + $0x28] sm:$0xff]
                %236 = vst [vmem:[%s228 + $0x18] sm:$0xff] %v235
              $region41: #{forward.17} parent=35 // loop_footer
                %s226 = sadd.s32 1, %s222
              $region42: #{forward.17} parent=35 // loop_footer_branch
                %221 = sbr.rel target = $region38
              $region43: #{forward.17} parent=35 // loop_exit
                _
            $region36: #{forward.17} parent=31 // pred_fallthru
              _
            // Predicated region
            $region44: #{forward.17} parent=31 // pred_check
              _
            $region45: #{forward.17} parent=31 // pred_check_branch
              %238 = sbr.rel target = $region47
            $region46: #{forward.17} parent=31 // pred_region
              _
            $region47: #{forward.17} parent=31 // pred_fallthru
              _
          $region32: #{forward.17} parent=27 // pred_fallthru
            _
          %239 = vnop
        $region28: #{forward.17} parent=23 // pred_fallthru
          _
        // Predicated region
        $region48: #{forward.17} parent=23 // pred_check
          %p240 = pneg %p79
        $region49: #{forward.17} parent=23 // pred_check_branch
          %242 = sbr.rel (%p240) target = $region51
        $region50: #{forward.17} parent=23 // pred_region
          %s243 = smul.u32 64, %s19
          %p244 = scmp.lt.s32.totalorder %s243, 127
          %s245 = scalar_select %p244, %s243, 127
          %p246 = scmp.lt.s32.totalorder %s18, 0
          %s247 = scalar_select %p246, %s18, 0
          %s248 = sadd.s32 %s247, %s245
          %s249 = smul.addr %s248, 4
          %s250 = scalar_lea.vmem %s1, %s249
          %s251 = smul.u32 64, %s19
        $region51: #{forward.17} parent=23 // pred_fallthru
          _
      $region24: #{forward.17} parent=5 // pred_fallthru
        _
      %p252 = scmp.le.s32.totalorder 1, %s10
      %p253 = scmp.lt.s32.totalorder %s10, 3
      %p254 = pnand %p252, %p253
      %p255 = pneg %p254
      // Predicated region
      $region52: #{forward.17} parent=5 // pred_check
        _
      $region53: #{forward.17} parent=5 // pred_check_branch
        %257 = sbr.rel (%p254) target = $region55
      $region54: #{forward.17} parent=5 // pred_region
        %s258 = ssub.s32 %s10, 1
        %s259 = sand.u32 %s44, 1
        %s260 = sand.u32 %s44, 1
        %s261 = smul.addr %s260, 32
        %s262 = scalar_lea.vmem [#allocation3], %s261
        // Predicated region
        $region56: #{forward.17} parent=54 // pred_check
          %p263 = pneg %p57
        $region57: #{forward.17} parent=54 // pred_check_branch
          %265 = sbr.rel (%p263) target = $region59
        $region58: #{forward.17} parent=54 // pred_region
          _
        $region59: #{forward.17} parent=54 // pred_fallthru
          _
        %s266 = sand.u32 %s44, 1
        %s267 = sand.u32 %s44, 1
        %s268 = smul.addr %s267, 32
        %s269 = scalar_lea.vmem [#allocation3], %s268
        %p270 = pneg %p57
        %p271 = pneg %p54
        %s272 = smul.u32 64, %s22
        %p273 = scmp.lt.s32.totalorder %s272, 127
        %s274 = scalar_select %p273, %s272, 127
        %p275 = scmp.lt.s32.totalorder %s21, 0
        %s276 = scalar_select %p275, %s21, 0
        %s277 = sadd.s32 %s276, %s274
        %s278 = smul.addr %s277, 4
        %s279 = scalar_lea.vmem %s1, %s278
        %p280 = pneg %p85
        %p281 = pneg %p82
        %p282 = scmp.lt.s32.totalorder %s21, 0
        %s283 = scalar_select %p282, %s21, 0
        %s284 = scalar_lea.vmem %s2, %s283
        %p285 = pneg %p111
        %p286 = pneg %p108
        %s287 = smul.u32 2, %s20
        %p288 = scmp.lt.s32.totalorder %s287, 1
        %s289 = scalar_select %p288, %s287, 1
        %p290 = scmp.lt.s32.totalorder %s21, 0
        %s291 = scalar_select %p290, %s21, 0
        %s292 = sadd.s32 %s291, %s289
        %s293 = smul.addr %s292, 4
        %s294 = scalar_lea.vmem %s3, %s293
        %p295 = pneg %p139
        %p296 = pneg %p136
        %p297 = pneg %p167
        %p298 = pneg %p164
        %s299 = smul.u32 2, %s20
        %p300 = scmp.lt.s32.totalorder %s299, 1
        %s301 = scalar_select %p300, %s299, 1
        %p302 = scmp.lt.s32.totalorder %s21, 0
        %s303 = scalar_select %p302, %s21, 0
        %s304 = sadd.s32 %s303, %s301
        %s305 = smul.addr %s304, 4
        %s306 = scalar_lea.vmem %s4, %s305
        %s307 = smul.u32 2, %s20
        %s308 = smul.u32 4, %s22
        %s309 = smul.u32 64, %s22
        %p310 = scmp.lt.s32.totalorder %s309, 127
        %s311 = scalar_select %p310, %s309, 127
        %p312 = scmp.lt.s32.totalorder %s21, 0
        %s313 = scalar_select %p312, %s21, 0
        %s314 = sadd.s32 %s313, %s311
        %s315 = smul.addr %s314, 4
        %s316 = scalar_lea.vmem %s1, %s315
        %s317 = smul.u32 64, %s22
        %p318 = scmp.lt.s32.totalorder %s21, 0
        %s319 = scalar_select %p318, %s21, 0
        %s320 = scalar_lea.vmem %s2, %s319
        %s321 = smul.u32 2, %s20
        %p322 = scmp.lt.s32.totalorder %s321, 1
        %s323 = scalar_select %p322, %s321, 1
        %p324 = scmp.lt.s32.totalorder %s21, 0
        %s325 = scalar_select %p324, %s21, 0
        %s326 = sadd.s32 %s325, %s323
        %s327 = smul.addr %s326, 4
        %s328 = scalar_lea.vmem %s3, %s327
        %s329 = smul.u32 2, %s20
        %s330 = smul.u32 2, %s20
        %p331 = scmp.lt.s32.totalorder %s330, 1
        %s332 = scalar_select %p331, %s330, 1
        %p333 = scmp.lt.s32.totalorder %s21, 0
        %s334 = scalar_select %p333, %s21, 0
        %s335 = sadd.s32 %s334, %s332
        %s336 = smul.addr %s335, 4
        %s337 = scalar_lea.vmem %s4, %s336
        %s338 = smul.u32 2, %s20
        %p340 = scmp.eq.s32.totalorder %s22, 0
        // Predicated region
        $region60: #{forward.17} parent=54 // pred_check
          %p341 = pneg %p340
        $region61: #{forward.17} parent=54 // pred_check_branch
          %343 = sbr.rel (%p341) target = $region63
        $region62: #{forward.17} parent=54 // pred_region
          %344 = vst [vmem:[#allocation2] sm:$0xff] 0.0
          %345 = vst [vmem:[#allocation2 + $0x8] sm:$0xff] 0.0
        $region63: #{forward.17} parent=54 // pred_fallthru
          _
        %v346 = vld [vmem:[#allocation2] sm:$0xff]
        %v347 = vld [vmem:[#allocation2 + $0x8] sm:$0xff]
        %v348 = vld [vmem:[%s262] sm:$0xff]
        %v349 = vld [vmem:[%s262 + $0x8] sm:$0xff]
        %v350 = vld [vmem:[%s262 + $0x10] sm:$0xff]
        %v351 = vld [vmem:[%s262 + $0x18] sm:$0xff]
        %v352 = vld [vmem:[%s316] sm:$0xf]
        %v353 = vld [vmem:[%s316 + $0x4] sm:$0xf]
        %v354 = vld [vmem:[%s316 + $0x8] sm:$0xf]
        %v355 = vld [vmem:[%s316 + $0xc] sm:$0xf]
        %v356 = vld [vmem:[%s316 + $0x10] sm:$0xf]
        %v357 = vld [vmem:[%s316 + $0x14] sm:$0xf]
        %v358 = vld [vmem:[%s316 + $0x18] sm:$0xf]
        %v359 = vld [vmem:[%s316 + $0x1c] sm:$0xf]
        %v360 = vld [vmem:[%s316 + $0x20] sm:$0xf]
        %v361 = vld [vmem:[%s316 + $0x24] sm:$0xf]
        %v362 = vld [vmem:[%s316 + $0x28] sm:$0xf]
        %v363 = vld [vmem:[%s316 + $0x2c] sm:$0xf]
        %v364 = vld [vmem:[%s316 + $0x30] sm:$0xf]
        %v365 = vld [vmem:[%s316 + $0x34] sm:$0xf]
        %v366 = vld [vmem:[%s316 + $0x38] sm:$0xf]
        %v367 = vld [vmem:[%s316 + $0x3c] sm:$0xf]
        %v368 = vld [vmem:[%s316 + $0x40] sm:$0xf]
        %v369 = vld [vmem:[%s316 + $0x44] sm:$0xf]
        %v370 = vld [vmem:[%s316 + $0x48] sm:$0xf]
        %v371 = vld [vmem:[%s316 + $0x4c] sm:$0xf]
        %v372 = vld [vmem:[%s316 + $0x50] sm:$0xf]
        %v373 = vld [vmem:[%s316 + $0x54] sm:$0xf]
        %v374 = vld [vmem:[%s316 + $0x58] sm:$0xf]
        %v375 = vld [vmem:[%s316 + $0x5c] sm:$0xf]
        %v376 = vld [vmem:[%s316 + $0x60] sm:$0xf]
        %v377 = vld [vmem:[%s316 + $0x64] sm:$0xf]
        %v378 = vld [vmem:[%s316 + $0x68] sm:$0xf]
        %v379 = vld [vmem:[%s316 + $0x6c] sm:$0xf]
        %v380 = vld [vmem:[%s316 + $0x70] sm:$0xf]
        %v381 = vld [vmem:[%s316 + $0x74] sm:$0xf]
        %v382 = vld [vmem:[%s316 + $0x78] sm:$0xf]
        %v383 = vld [vmem:[%s316 + $0x7c] sm:$0xf]
        %v384 = vld [vmem:[%s316 + $0x80] sm:$0xf]
        %v385 = vld [vmem:[%s316 + $0x84] sm:$0xf]
        %v386 = vld [vmem:[%s316 + $0x88] sm:$0xf]
        %v387 = vld [vmem:[%s316 + $0x8c] sm:$0xf]
        %v388 = vld [vmem:[%s316 + $0x90] sm:$0xf]
        %v389 = vld [vmem:[%s316 + $0x94] sm:$0xf]
        %v390 = vld [vmem:[%s316 + $0x98] sm:$0xf]
        %v391 = vld [vmem:[%s316 + $0x9c] sm:$0xf]
        %v392 = vld [vmem:[%s316 + $0xa0] sm:$0xf]
        %v393 = vld [vmem:[%s316 + $0xa4] sm:$0xf]
        %v394 = vld [vmem:[%s316 + $0xa8] sm:$0xf]
        %v395 = vld [vmem:[%s316 + $0xac] sm:$0xf]
        %v396 = vld [vmem:[%s316 + $0xb0] sm:$0xf]
        %v397 = vld [vmem:[%s316 + $0xb4] sm:$0xf]
        %v398 = vld [vmem:[%s316 + $0xb8] sm:$0xf]
        %v399 = vld [vmem:[%s316 + $0xbc] sm:$0xf]
        %v400 = vld [vmem:[%s316 + $0xc0] sm:$0xf]
        %v401 = vld [vmem:[%s316 + $0xc4] sm:$0xf]
        %v402 = vld [vmem:[%s316 + $0xc8] sm:$0xf]
        %v403 = vld [vmem:[%s316 + $0xcc] sm:$0xf]
        %v404 = vld [vmem:[%s316 + $0xd0] sm:$0xf]
        %v405 = vld [vmem:[%s316 + $0xd4] sm:$0xf]
        %v406 = vld [vmem:[%s316 + $0xd8] sm:$0xf]
        %v407 = vld [vmem:[%s316 + $0xdc] sm:$0xf]
        %v408 = vld [vmem:[%s316 + $0xe0] sm:$0xf]
        %v409 = vld [vmem:[%s316 + $0xe4] sm:$0xf]
        %v410 = vld [vmem:[%s316 + $0xe8] sm:$0xf]
        %v411 = vld [vmem:[%s316 + $0xec] sm:$0xf]
        %v412 = vld [vmem:[%s316 + $0xf0] sm:$0xf]
        %v413 = vld [vmem:[%s316 + $0xf4] sm:$0xf]
        %v414 = vld [vmem:[%s316 + $0xf8] sm:$0xf]
        %v415 = vld [vmem:[%s316 + $0xfc] sm:$0xf]
        %v420 = vunpack.c.l.b16 %v348
        %v421 = vunpack.c.h.b16 %v348
        %v422 = vunpack.c.l.b16 %v349
        %v423 = vunpack.c.h.b16 %v349
        %v424 = vunpack.c.l.b16 %v350
        %v425 = vunpack.c.h.b16 %v350
        %v426 = vunpack.c.l.b16 %v351
        %v427 = vunpack.c.h.b16 %v351
        %v428 = vpack.c.b16 %v424, %v420
        %v429 = vpack.c.b16 %v425, %v421
        %v430 = vpack.c.b16 %v426, %v422
        %v431 = vpack.c.b16 %v427, %v423
        %v500 = vunpack.c.l.b16 %v352
        %v501 = vunpack.c.l.b16 %v353
        %v502 = vunpack.c.l.b16 %v354
        %v503 = vunpack.c.l.b16 %v355
        %v504 = vunpack.c.l.b16 %v356
        %v505 = vunpack.c.l.b16 %v357
        %v506 = vunpack.c.l.b16 %v358
        %v507 = vunpack.c.l.b16 %v359
        %v508 = vunpack.c.l.b16 %v360
        %v509 = vunpack.c.l.b16 %v361
        %v510 = vunpack.c.l.b16 %v362
        %v511 = vunpack.c.l.b16 %v363
        %v512 = vunpack.c.l.b16 %v364
        %v513 = vunpack.c.l.b16 %v365
        %v514 = vunpack.c.l.b16 %v366
        %v515 = vunpack.c.l.b16 %v367
        %v516 = vunpack.c.l.b16 %v368
        %v517 = vunpack.c.l.b16 %v369
        %v518 = vunpack.c.l.b16 %v370
        %v519 = vunpack.c.l.b16 %v371
        %v520 = vunpack.c.l.b16 %v372
        %v521 = vunpack.c.l.b16 %v373
        %v522 = vunpack.c.l.b16 %v374
        %v523 = vunpack.c.l.b16 %v375
        %v524 = vunpack.c.l.b16 %v376
        %v525 = vunpack.c.l.b16 %v377
        %v526 = vunpack.c.l.b16 %v378
        %v527 = vunpack.c.l.b16 %v379
        %v528 = vunpack.c.l.b16 %v380
        %v529 = vunpack.c.l.b16 %v381
        %v530 = vunpack.c.l.b16 %v382
        %v531 = vunpack.c.l.b16 %v383
        %v532 = vunpack.c.l.b16 %v384
        %v533 = vunpack.c.l.b16 %v385
        %v534 = vunpack.c.l.b16 %v386
        %v535 = vunpack.c.l.b16 %v387
        %v536 = vunpack.c.l.b16 %v388
        %v537 = vunpack.c.l.b16 %v389
        %v538 = vunpack.c.l.b16 %v390
        %v539 = vunpack.c.l.b16 %v391
        %v540 = vunpack.c.l.b16 %v392
        %v541 = vunpack.c.l.b16 %v393
        %v542 = vunpack.c.l.b16 %v394
        %v543 = vunpack.c.l.b16 %v395
        %v544 = vunpack.c.l.b16 %v396
        %v545 = vunpack.c.l.b16 %v397
        %v546 = vunpack.c.l.b16 %v398
        %v547 = vunpack.c.l.b16 %v399
        %v548 = vunpack.c.l.b16 %v400
        %v549 = vunpack.c.l.b16 %v401
        %v550 = vunpack.c.l.b16 %v402
        %v551 = vunpack.c.l.b16 %v403
        %v552 = vunpack.c.l.b16 %v404
        %v553 = vunpack.c.l.b16 %v405
        %v554 = vunpack.c.l.b16 %v406
        %v555 = vunpack.c.l.b16 %v407
        %v556 = vunpack.c.l.b16 %v408
        %v557 = vunpack.c.l.b16 %v409
        %v558 = vunpack.c.l.b16 %v410
        %v559 = vunpack.c.l.b16 %v411
        %v560 = vunpack.c.l.b16 %v412
        %v561 = vunpack.c.l.b16 %v413
        %v562 = vunpack.c.l.b16 %v414
        %v563 = vunpack.c.l.b16 %v415
        %v564 = vpack.c.b16 %v501, %v500
        %v565 = vpack.c.b16 %v503, %v502
        %v566 = vpack.c.b16 %v505, %v504
        %v567 = vpack.c.b16 %v507, %v506
        %v568 = vpack.c.b16 %v509, %v508
        %v569 = vpack.c.b16 %v511, %v510
        %v570 = vpack.c.b16 %v513, %v512
        %v571 = vpack.c.b16 %v515, %v514
        %v572 = vpack.c.b16 %v517, %v516
        %v573 = vpack.c.b16 %v519, %v518
        %v574 = vpack.c.b16 %v521, %v520
        %v575 = vpack.c.b16 %v523, %v522
        %v576 = vpack.c.b16 %v525, %v524
        %v577 = vpack.c.b16 %v527, %v526
        %v578 = vpack.c.b16 %v529, %v528
        %v579 = vpack.c.b16 %v531, %v530
        %v580 = vpack.c.b16 %v533, %v532
        %v581 = vpack.c.b16 %v535, %v534
        %v582 = vpack.c.b16 %v537, %v536
        %v583 = vpack.c.b16 %v539, %v538
        %v584 = vpack.c.b16 %v541, %v540
        %v585 = vpack.c.b16 %v543, %v542
        %v586 = vpack.c.b16 %v545, %v544
        %v587 = vpack.c.b16 %v547, %v546
        %v588 = vpack.c.b16 %v549, %v548
        %v589 = vpack.c.b16 %v551, %v550
        %v590 = vpack.c.b16 %v553, %v552
        %v591 = vpack.c.b16 %v555, %v554
        %v592 = vpack.c.b16 %v557, %v556
        %v593 = vpack.c.b16 %v559, %v558
        %v594 = vpack.c.b16 %v561, %v560
        %v595 = vpack.c.b16 %v563, %v562
        %628 = vmatprep.subr.bf16.mxu0 0
        %629 = vmatpush1.bf16.msra.mxu0 %v564
        %630 = vmatprep.subr.bf16.mxu0 0
        %631 = vmatpush1.bf16.msra.mxu0 %v565
        %632 = vmatprep.subr.bf16.mxu0 0
        %633 = vmatpush1.bf16.msra.mxu0 %v566
        %634 = vmatprep.subr.bf16.mxu0 0
        %635 = vmatpush1.bf16.msra.mxu0 %v567
        %636 = vmatprep.subr.bf16.mxu0 0
        %637 = vmatpush1.bf16.msra.mxu0 %v568
        %638 = vmatprep.subr.bf16.mxu0 0
        %639 = vmatpush1.bf16.msra.mxu0 %v569
        %640 = vmatprep.subr.bf16.mxu0 0
        %641 = vmatpush1.bf16.msra.mxu0 %v570
        %642 = vmatprep.subr.bf16.mxu0 0
        %643 = vmatpush1.bf16.msra.mxu0 %v571
        %644 = vmatprep.subr.bf16.mxu0 0
        %645 = vmatpush1.bf16.msra.mxu0 %v572
        %646 = vmatprep.subr.bf16.mxu0 0
        %647 = vmatpush1.bf16.msra.mxu0 %v573
        %648 = vmatprep.subr.bf16.mxu0 0
        %649 = vmatpush1.bf16.msra.mxu0 %v574
        %650 = vmatprep.subr.bf16.mxu0 0
        %651 = vmatpush1.bf16.msra.mxu0 %v575
        %652 = vmatprep.subr.bf16.mxu0 0
        %653 = vmatpush1.bf16.msra.mxu0 %v576
        %654 = vmatprep.subr.bf16.mxu0 0
        %655 = vmatpush1.bf16.msra.mxu0 %v577
        %656 = vmatprep.subr.bf16.mxu0 0
        %657 = vmatpush1.bf16.msra.mxu0 %v578
        %658 = vmatprep.subr.bf16.mxu0 0
        %659 = vmatpush1.bf16.msra.mxu0 %v579
        %660 = vmatprep.mubr.bf16.mxu0 %v429
        %661 = vmatmul.mubr.bf16.gmra.mrb[0].mxu0 %v428
        %v662 = vpop.f32.mrb[0].mxu0
        %v663 = vadd.f32 0.0, %v662
        %v664 = vpop.f32.mrb[0].mxu0
        %v665 = vpop.f32.mrb[0].mxu0
        %v666 = vadd.f32 0.0, %v665
        %v667 = vpop.f32.mrb[0].mxu0
        %668 = vdwg.mxu0
        %669 = vmatprep.subr.bf16.mxu0 0
        %670 = vmatpush1.bf16.msra.mxu0 %v580
        %671 = vmatprep.subr.bf16.mxu0 0
        %672 = vmatpush1.bf16.msra.mxu0 %v581
        %673 = vmatprep.subr.bf16.mxu0 0
        %674 = vmatpush1.bf16.msra.mxu0 %v582
        %675 = vmatprep.subr.bf16.mxu0 0
        %676 = vmatpush1.bf16.msra.mxu0 %v583
        %677 = vmatprep.subr.bf16.mxu0 0
        %678 = vmatpush1.bf16.msra.mxu0 %v584
        %679 = vmatprep.subr.bf16.mxu0 0
        %680 = vmatpush1.bf16.msra.mxu0 %v585
        %681 = vmatprep.subr.bf16.mxu0 0
        %682 = vmatpush1.bf16.msra.mxu0 %v586
        %683 = vmatprep.subr.bf16.mxu0 0
        %684 = vmatpush1.bf16.msra.mxu0 %v587
        %685 = vmatprep.subr.bf16.mxu0 0
        %686 = vmatpush1.bf16.msra.mxu0 %v588
        %687 = vmatprep.subr.bf16.mxu0 0
        %688 = vmatpush1.bf16.msra.mxu0 %v589
        %689 = vmatprep.subr.bf16.mxu0 0
        %690 = vmatpush1.bf16.msra.mxu0 %v590
        %691 = vmatprep.subr.bf16.mxu0 0
        %692 = vmatpush1.bf16.msra.mxu0 %v591
        %693 = vmatprep.subr.bf16.mxu0 0
        %694 = vmatpush1.bf16.msra.mxu0 %v592
        %695 = vmatprep.subr.bf16.mxu0 0
        %696 = vmatpush1.bf16.msra.mxu0 %v593
        %697 = vmatprep.subr.bf16.mxu0 0
        %698 = vmatpush1.bf16.msra.mxu0 %v594
        %699 = vmatprep.subr.bf16.mxu0 0
        %700 = vmatpush1.bf16.msra.mxu0 %v595
        %701 = vmatprep.mubr.bf16.mxu0 %v431
        %702 = vmatmul.mubr.bf16.gmra.mrb[0].mxu0 %v430
        %v703 = vpop.f32.mrb[0].mxu0
        %v704 = vadd.f32 %v663, %v703
        %v705 = vpop.f32.mrb[0].mxu0
        %v706 = vpop.f32.mrb[0].mxu0
        %v707 = vadd.f32 %v666, %v706
        %v708 = vpop.f32.mrb[0].mxu0
        %709 = vdwg.mxu0
        %v710 = vadd.f32 %v346, %v704
        %v711 = vadd.f32 %v347, %v707
        %712 = vst [vmem:[#allocation2] sm:$0xff] %v710
        %713 = vst [vmem:[#allocation2 + $0x8] sm:$0xff] %v711
        %p714 = scmp.eq.s32.totalorder %s22, 1
        // Predicated region
        $region64: #{forward.17} parent=54 // pred_check
          %p715 = pneg %p714
        $region65: #{forward.17} parent=54 // pred_check_branch
          %717 = sbr.rel (%p715) target = $region67
        $region66: #{forward.17} parent=54 // pred_region
          %v718 = vld [vmem:[#allocation2] sm:$0xff]
          %v719 = vld [vmem:[#allocation2 + $0x8] sm:$0xff]
          %v720 = vld [vmem:[%s320] sm:$0x1]
          %v722 = vlaneseq
          %v723 = vshrl.u32 %v722, 7
          %v724 = vsub.s32 0, %v723
          %v725 = vrot.slane %v720, %v724
          %v727 = vadd.f32 %v718, %v725
          %v728 = vadd.f32 %v719, %v725
          %v729 = vld [vmem:[%s328] sm:$0xf]
          %v730 = vld [vmem:[%s328 + $0x4] sm:$0xf]
          %v731 = vunpack.c.l.bf16 %v729
          %v732 = vunpack.c.l.bf16 %v730
          %v733 = vadd.f32 %v727, %v731
          %v734 = vadd.f32 %v728, %v732
          %v735 = vpack.c.bf16 %v734, %v733
          %v737 = vunpack.c.l.b16 %v735
          %v738 = vunpack.c.h.b16 %v735
          %v739 = vpack.c.b16 %v737, %v737
          %v740 = vpack.c.b16 %v738, %v738
          %743 = vst [vmem:[%s337] sm:$0xf] %v739
          %744 = vst [vmem:[%s337 + $0x4] sm:$0xf] %v740
        $region67: #{forward.17} parent=54 // pred_fallthru
          _
        %s745 = smul.u32 2, %s20
        %p746 = scmp.lt.s32.totalorder %s745, 1
        %s747 = scalar_select %p746, %s745, 1
        %p748 = scmp.lt.s32.totalorder %s21, 0
        %s749 = scalar_select %p748, %s21, 0
        %s750 = sadd.s32 %s749, %s747
        %s751 = smul.addr %s750, 4
        %s752 = scalar_lea.vmem %s4, %s751
        // Predicated region
        $region68: #{forward.17} parent=54 // pred_check
          %p753 = pneg %p164
        $region69: #{forward.17} parent=54 // pred_check_branch
          %755 = sbr.rel (%p753) target = $region71
        $region70: #{forward.17} parent=54 // pred_region
          %s756 = smul.u32 2, %s20
        $region71: #{forward.17} parent=54 // pred_fallthru
          _
        // Predicated region
        $region72: #{forward.17} parent=54 // pred_check
          %p757 = pneg %p164
        $region73: #{forward.17} parent=54 // pred_check_branch
          %759 = sbr.rel (%p757) target = $region75
        $region74: #{forward.17} parent=54 // pred_region
          %s760 = smul.u32 2, %s20
          %p761 = scmp.lt.s32.totalorder %s760, 1
          %s762 = scalar_select %p761, %s760, 1
          %p763 = scmp.lt.s32.totalorder %s21, 0
          %s764 = scalar_select %p763, %s21, 0
          %s765 = sadd.s32 %s764, %s762
          %s766 = smul.addr %s765, 4
          %s767 = scalar_lea.vmem %s4, %s766
        $region75: #{forward.17} parent=54 // pred_fallthru
          _
      $region55: #{forward.17} parent=5 // pred_fallthru
        _
      %p768 = scmp.le.s32.totalorder 2, %s10
      // Predicated region
      $region76: #{forward.17} parent=5 // pred_check
        %p769 = pneg %p768
      $region77: #{forward.17} parent=5 // pred_check_branch
        %771 = sbr.rel (%p769) target = $region79
      $region78: #{forward.17} parent=5 // pred_region
        %s772 = ssub.s32 %s10, 2
      $region79: #{forward.17} parent=5 // pred_fallthru
        _
    $region6: #{forward.17} parent=1 // loop_footer
      %s14 = sadd.s32 1, %s10
    $region7: #{forward.17} parent=1 // loop_footer_branch
      %9 = sbr.rel target = $region3
    $region8: #{forward.17} parent=1 // loop_exit
      _

// kernel: forward.23
$region0: #{forward.23}
  #allocation0 [shape = 'u32[]', space=smem, size = 0x4, offset = 0x4, fixed_abs, tag = 'smem constant byte address 0x4 - core index']
  #allocation1 [shape = 'u32[144,128]{1,0:T(1,128)}', space=vmem, size = 0x12000, scoped, tag = 'internal scratch']
  %s0 = inlined_call_operand.vmem [shape: bf16[2,128], index: 0, kind: input, shape index: {}]
  %s1 = inlined_call_operand.vmem [shape: f32[1,128], index: 1, kind: input, shape index: {}]
  %s2 = inlined_call_operand.vmem [shape: f32[1,128], index: 2, kind: input, shape index: {}]
  %s3 = inlined_call_operand.vmem [shape: bf16[128,128], index: 3, kind: input, shape index: {}]
  %s4 = inlined_call_operand.vmem [shape: f32[1,128], index: 4, kind: input, shape index: {}]
  %s5 = inlined_call_operand.vmem [shape: bf16[128,128], index: 5, kind: input, shape index: {}]
  %s6 = inlined_call_operand.vmem [shape: f32[1,128], index: 6, kind: input, shape index: {}]
  %s7 = inlined_call_operand.hbm [shape: f32[2,128], index: 7, kind: output, shape index: {0}]
  %s8 = inlined_call_operand.hbm [shape: f32[2,128], index: 8, kind: output, shape index: {1}]
  %9 = xla_tuple %s7, %s8
  %s10 = sld [smem:[#allocation0]]
  $region46: #{forward.23} parent=0
    _
  %s12 = ssub.s32 1, %s10
  %s13 = scalar_select 0, %s12, %s10
  $region1: #{forward.23} parent=0
    #allocation2 [shape = 'u8[1024]{0}', space=vmem, size = 0x400, scoped, tag = 'output window, operand 0, single buffered']
    #allocation3 [shape = 's32[1]{0}', space=sflag, size = 0x4, scoped, tag = 'scoped memory for forward.23']
    #allocation4 [shape = 'u8[1024]{0}', space=vmem, size = 0x400, scoped, tag = 'output window, operand 1, single buffered']
    #allocation5 [shape = 's32[1]{0}', space=sflag, size = 0x4, scoped, tag = 'scoped memory for forward.23']
    %14 = vsyncpa [#allocation3], 0
    %15 = vsyncpa [#allocation5], 0
    // Predicated region
    $region2: #{forward.23} parent=1 // pred_check
      _
    $region3: #{forward.23} parent=1 // pred_check_branch
      %17 = sbr.rel (0) target = $region5
    $region4: #{forward.23} parent=1 // pred_region
      _
    $region5: #{forward.23} parent=1 // pred_fallthru
      _
    // Predicated region
    $region6: #{forward.23} parent=1 // pred_check
      _
    $region7: #{forward.23} parent=1 // pred_check_branch
      %19 = sbr.rel (0) target = $region9
    $region8: #{forward.23} parent=1 // pred_region
      _
    $region9: #{forward.23} parent=1 // pred_fallthru
      _
    // Predicated region
    $region10: #{forward.23} parent=1 // pred_check
      _
    $region11: #{forward.23} parent=1 // pred_check_branch
      %21 = sbr.rel (0) target = $region13
    $region12: #{forward.23} parent=1 // pred_region
      _
    $region13: #{forward.23} parent=1 // pred_fallthru
      _
    // Predicated region
    $region14: #{forward.23} parent=1 // pred_check
      _
    $region15: #{forward.23} parent=1 // pred_check_branch
      %23 = sbr.rel (0) target = $region17
    $region16: #{forward.23} parent=1 // pred_region
      _
    $region17: #{forward.23} parent=1 // pred_fallthru
      _
    // Predicated region
    $region18: #{forward.23} parent=1 // pred_check
      _
    $region19: #{forward.23} parent=1 // pred_check_branch
      %25 = sbr.rel (0) target = $region21
    $region20: #{forward.23} parent=1 // pred_region
      _
    $region21: #{forward.23} parent=1 // pred_fallthru
      _
    // Predicated region
    $region22: #{forward.23} parent=1 // pred_check
      _
    $region23: #{forward.23} parent=1 // pred_check_branch
      %27 = sbr.rel (0) target = $region25
    $region24: #{forward.23} parent=1 // pred_region
      _
    $region25: #{forward.23} parent=1 // pred_fallthru
      _
    // Predicated region
    $region26: #{forward.23} parent=1 // pred_check
      _
    $region27: #{forward.23} parent=1 // pred_check_branch
      %29 = sbr.rel (0) target = $region29
    $region28: #{forward.23} parent=1 // pred_region
      _
    $region29: #{forward.23} parent=1 // pred_fallthru
      _
    %v31 = vld [vmem:[%s0] sm:$0x1]
    %v32 = vunpack.c.l.bf16 %v31
    %vm33 = vcmask 1041408
    %v34 = vsel %vm33, %v32, 0.0
    %35 = vadd.xlane.f32.xlu0 %v34
    %v36 = vpop.xlane.xlu0 %35
    %v37 = vrcp.pop 128.0
    %v38 = vmul.f32 %v36, %v37
    %v39 = vsub.f32 %v32, %v38
    %v40 = vmul.f32 %v39, %v39
    %v41 = vsel %vm33, %v40, 0.0
    %42 = vadd.xlane.f32.xlu0 %v41
    %v43 = vpop.xlane.xlu0 %42
    %v44 = vmul.f32 %v43, %v37
    %v45 = vadd.f32 %v44, 1e-06
    %v46 = vrsqrt.pop %v45
    %v47 = vmul.f32 %v39, %v46
    %v48 = vld [vmem:[%s1] sm:$0x1]
    %v50 = vlaneseq
    %v51 = vshrl.u32 %v50, 7
    %v52 = vsub.s32 0, %v51
    %v53 = vrot.slane %v48, %v52
    %v55 = vmul.f32 %v47, %v53
    %v56 = vld [vmem:[%s2] sm:$0x1]
    %v58 = vlaneseq
    %v59 = vshrl.u32 %v58, 7
    %v60 = vsub.s32 0, %v59
    %v61 = vrot.slane %v56, %v60
    %v63 = vadd.f32 %v55, %v61
    %v64 = vpack.c.bf16 %v63, %v63
    %v65 = vld [vmem:[%s3] sm:$0xf]
    %v66 = vld [vmem:[%s3 + $0x4] sm:$0xf]
    %v67 = vld [vmem:[%s3 + $0x8] sm:$0xf]
    %v68 = vld [vmem:[%s3 + $0xc] sm:$0xf]
    %v69 = vld [vmem:[%s3 + $0x10] sm:$0xf]
    %v70 = vld [vmem:[%s3 + $0x14] sm:$0xf]
    %v71 = vld [vmem:[%s3 + $0x18] sm:$0xf]
    %v72 = vld [vmem:[%s3 + $0x1c] sm:$0xf]
    %v73 = vld [vmem:[%s3 + $0x20] sm:$0xf]
    %v74 = vld [vmem:[%s3 + $0x24] sm:$0xf]
    %v75 = vld [vmem:[%s3 + $0x28] sm:$0xf]
    %v76 = vld [vmem:[%s3 + $0x2c] sm:$0xf]
    %v77 = vld [vmem:[%s3 + $0x30] sm:$0xf]
    %v78 = vld [vmem:[%s3 + $0x34] sm:$0xf]
    %v79 = vld [vmem:[%s3 + $0x38] sm:$0xf]
    %v80 = vld [vmem:[%s3 + $0x3c] sm:$0xf]
    %v81 = vld [vmem:[%s4] sm:$0x1]
    %v83 = vlaneseq
    %v84 = vshrl.u32 %v83, 7
    %v85 = vsub.s32 0, %v84
    %v86 = vrot.slane %v81, %v85
    %v104 = vunpack.c.l.b16 %v65
    %v105 = vunpack.c.l.b16 %v66
    %v106 = vunpack.c.l.b16 %v67
    %v107 = vunpack.c.l.b16 %v68
    %v108 = vunpack.c.l.b16 %v69
    %v109 = vunpack.c.l.b16 %v70
    %v110 = vunpack.c.l.b16 %v71
    %v111 = vunpack.c.l.b16 %v72
    %v112 = vunpack.c.l.b16 %v73
    %v113 = vunpack.c.l.b16 %v74
    %v114 = vunpack.c.l.b16 %v75
    %v115 = vunpack.c.l.b16 %v76
    %v116 = vunpack.c.l.b16 %v77
    %v117 = vunpack.c.l.b16 %v78
    %v118 = vunpack.c.l.b16 %v79
    %v119 = vunpack.c.l.b16 %v80
    %v120 = vpack.c.b16 %v105, %v104
    %v121 = vpack.c.b16 %v107, %v106
    %v122 = vpack.c.b16 %v109, %v108
    %v123 = vpack.c.b16 %v111, %v110
    %v124 = vpack.c.b16 %v113, %v112
    %v125 = vpack.c.b16 %v115, %v114
    %v126 = vpack.c.b16 %v117, %v116
    %v127 = vpack.c.b16 %v119, %v118
    %136 = vmatprep.subr.bf16.mxu0 0
    %137 = vmatpush1.bf16.msra.mxu0 %v120
    %138 = vmatprep.subr.bf16.mxu0 0
    %139 = vmatpush1.bf16.msra.mxu0 %v121
    %140 = vmatprep.subr.bf16.mxu0 0
    %141 = vmatpush1.bf16.msra.mxu0 %v122
    %142 = vmatprep.subr.bf16.mxu0 0
    %143 = vmatpush1.bf16.msra.mxu0 %v123
    %144 = vmatprep.subr.bf16.mxu0 0
    %145 = vmatpush1.bf16.msra.mxu0 %v124
    %146 = vmatprep.subr.bf16.mxu0 0
    %147 = vmatpush1.bf16.msra.mxu0 %v125
    %148 = vmatprep.subr.bf16.mxu0 0
    %149 = vmatpush1.bf16.msra.mxu0 %v126
    %150 = vmatprep.subr.bf16.mxu0 0
    %151 = vmatpush1.bf16.msra.mxu0 %v127
    %152 = vmatprep.subr.bf16.mxu0 0
    %153 = vmatpush1.bf16.msra.mxu0 0
    %154 = vmatprep.subr.bf16.mxu0 0
    %155 = vmatpush1.bf16.msra.mxu0 0
    %156 = vmatprep.subr.bf16.mxu0 0
    %157 = vmatpush1.bf16.msra.mxu0 0
    %158 = vmatprep.subr.bf16.mxu0 0
    %159 = vmatpush1.bf16.msra.mxu0 0
    %160 = vmatprep.subr.bf16.mxu0 0
    %161 = vmatpush1.bf16.msra.mxu0 0
    %162 = vmatprep.subr.bf16.mxu0 0
    %163 = vmatpush1.bf16.msra.mxu0 0
    %164 = vmatprep.subr.bf16.mxu0 0
    %165 = vmatpush1.bf16.msra.mxu0 0
    %166 = vmatprep.subr.bf16.mxu0 0
    %167 = vmatpush1.bf16.msra.mxu0 0
    %168 = vmatprep.mubr.bf16.mxu0 0
    %169 = vmatmul.mubr.bf16.gmra.mrb[0].mxu0 %v64
    %v170 = vpop.f32.mrb[0].mxu0
    %v171 = vadd.f32 %v86, %v170
    %v172 = vpop.f32.mrb[0].mxu0
    %v173 = vpop.f32.mrb[0].mxu0
    %v174 = vpop.f32.mrb[0].mxu0
    %175 = vdwg.mxu0
    %176 = vst [vmem:[#allocation2] sm:$0x3] %v171
    %v177 = vpack.c.bf16 %v171, %v171
    %v178 = vld [vmem:[%s5] sm:$0xf]
    %v179 = vld [vmem:[%s5 + $0x4] sm:$0xf]
    %v180 = vld [vmem:[%s5 + $0x8] sm:$0xf]
    %v181 = vld [vmem:[%s5 + $0xc] sm:$0xf]
    %v182 = vld [vmem:[%s5 + $0x10] sm:$0xf]
    %v183 = vld [vmem:[%s5 + $0x14] sm:$0xf]
    %v184 = vld [vmem:[%s5 + $0x18] sm:$0xf]
    %v185 = vld [vmem:[%s5 + $0x1c] sm:$0xf]
    %v186 = vld [vmem:[%s5 + $0x20] sm:$0xf]
    %v187 = vld [vmem:[%s5 + $0x24] sm:$0xf]
    %v188 = vld [vmem:[%s5 + $0x28] sm:$0xf]
    %v189 = vld [vmem:[%s5 + $0x2c] sm:$0xf]
    %v190 = vld [vmem:[%s5 + $0x30] sm:$0xf]
    %v191 = vld [vmem:[%s5 + $0x34] sm:$0xf]
    %v192 = vld [vmem:[%s5 + $0x38] sm:$0xf]
    %v193 = vld [vmem:[%s5 + $0x3c] sm:$0xf]
    %v194 = vld [vmem:[%s6] sm:$0x1]
    %v196 = vlaneseq
    %v197 = vshrl.u32 %v196, 7
    %v198 = vsub.s32 0, %v197
    %v199 = vrot.slane %v194, %v198
    %v217 = vunpack.c.l.b16 %v178
    %v218 = vunpack.c.l.b16 %v179
    %v219 = vunpack.c.l.b16 %v180
    %v220 = vunpack.c.l.b16 %v181
    %v221 = vunpack.c.l.b16 %v182
    %v222 = vunpack.c.l.b16 %v183
    %v223 = vunpack.c.l.b16 %v184
    %v224 = vunpack.c.l.b16 %v185
    %v225 = vunpack.c.l.b16 %v186
    %v226 = vunpack.c.l.b16 %v187
    %v227 = vunpack.c.l.b16 %v188
    %v228 = vunpack.c.l.b16 %v189
    %v229 = vunpack.c.l.b16 %v190
    %v230 = vunpack.c.l.b16 %v191
    %v231 = vunpack.c.l.b16 %v192
    %v232 = vunpack.c.l.b16 %v193
    %v233 = vpack.c.b16 %v218, %v217
    %v234 = vpack.c.b16 %v220, %v219
    %v235 = vpack.c.b16 %v222, %v221
    %v236 = vpack.c.b16 %v224, %v223
    %v237 = vpack.c.b16 %v226, %v225
    %v238 = vpack.c.b16 %v228, %v227
    %v239 = vpack.c.b16 %v230, %v229
    %v240 = vpack.c.b16 %v232, %v231
    %249 = vmatprep.subr.bf16.mxu0 0
    %250 = vmatpush1.bf16.msra.mxu0 %v233
    %251 = vmatprep.subr.bf16.mxu0 0
    %252 = vmatpush1.bf16.msra.mxu0 %v234
    %253 = vmatprep.subr.bf16.mxu0 0
    %254 = vmatpush1.bf16.msra.mxu0 %v235
    %255 = vmatprep.subr.bf16.mxu0 0
    %256 = vmatpush1.bf16.msra.mxu0 %v236
    %257 = vmatprep.subr.bf16.mxu0 0
    %258 = vmatpush1.bf16.msra.mxu0 %v237
    %259 = vmatprep.subr.bf16.mxu0 0
    %260 = vmatpush1.bf16.msra.mxu0 %v238
    %261 = vmatprep.subr.bf16.mxu0 0
    %262 = vmatpush1.bf16.msra.mxu0 %v239
    %263 = vmatprep.subr.bf16.mxu0 0
    %264 = vmatpush1.bf16.msra.mxu0 %v240
    %265 = vmatprep.subr.bf16.mxu0 0
    %266 = vmatpush1.bf16.msra.mxu0 0
    %267 = vmatprep.subr.bf16.mxu0 0
    %268 = vmatpush1.bf16.msra.mxu0 0
    %269 = vmatprep.subr.bf16.mxu0 0
    %270 = vmatpush1.bf16.msra.mxu0 0
    %271 = vmatprep.subr.bf16.mxu0 0
    %272 = vmatpush1.bf16.msra.mxu0 0
    %273 = vmatprep.subr.bf16.mxu0 0
    %274 = vmatpush1.bf16.msra.mxu0 0
    %275 = vmatprep.subr.bf16.mxu0 0
    %276 = vmatpush1.bf16.msra.mxu0 0
    %277 = vmatprep.subr.bf16.mxu0 0
    %278 = vmatpush1.bf16.msra.mxu0 0
    %279 = vmatprep.subr.bf16.mxu0 0
    %280 = vmatpush1.bf16.msra.mxu0 0
    %281 = vmatprep.mubr.bf16.mxu0 0
    %282 = vmatmul.mubr.bf16.gmra.mrb[0].mxu0 %v177
    %v283 = vpop.f32.mrb[0].mxu0
    %v284 = vadd.f32 %v199, %v283
    %v285 = vpop.f32.mrb[0].mxu0
    %v286 = vpop.f32.mrb[0].mxu0
    %v287 = vpop.f32.mrb[0].mxu0
    %288 = vdwg.mxu0
    %289 = vst [vmem:[#allocation4] sm:$0x3] %v284
    // Predicated region
    $region30: #{forward.23} parent=1 // pred_check
      _
    $region31: #{forward.23} parent=1 // pred_check_branch
      %291 = sbr.rel (0) target = $region33
    $region32: #{forward.23} parent=1 // pred_region
      %s293 = ssub.s32 32, 32
      %294 = vsyncadd [#allocation3], %s293
      %s296 = sshll.u32 [#allocation2], 4
      %s297 = int_to_ptr.vmem [resolvable:$true] %s296
      %299 = dma.vmem_to_hbm [thread:$0]  %s297, 32, %s7, [#allocation3]
    $region33: #{forward.23} parent=1 // pred_fallthru
      _
    // Predicated region
    $region34: #{forward.23} parent=1 // pred_check
      _
    $region35: #{forward.23} parent=1 // pred_check_branch
      %301 = sbr.rel (0) target = $region37
    $region36: #{forward.23} parent=1 // pred_region
      %s303 = ssub.s32 32, 32
      %304 = vsyncadd [#allocation5], %s303
      %s306 = sshll.u32 [#allocation4], 4
      %s307 = int_to_ptr.vmem [resolvable:$true] %s306
      %309 = dma.vmem_to_hbm [thread:$0]  %s307, 32, %s8, [#allocation5]
    $region37: #{forward.23} parent=1 // pred_fallthru
      _
    // Predicated region
    $region38: #{forward.23} parent=1 // pred_check
      _
    $region39: #{forward.23} parent=1 // pred_check_branch
      %311 = sbr.rel (0) target = $region41
    $region40: #{forward.23} parent=1 // pred_region
      %312 = dma.done [#allocation3], 32
    $region41: #{forward.23} parent=1 // pred_fallthru
      _
    // Predicated region
    $region42: #{forward.23} parent=1 // pred_check
      _
    $region43: #{forward.23} parent=1 // pred_check_branch
      %314 = sbr.rel (0) target = $region45
    $region44: #{forward.23} parent=1 // pred_region
      %315 = dma.done [#allocation5], 32
    $region45: #{forward.23} parent=1 // pred_fallthru
      _
    %316 = vsyncpa [#allocation3], 1
    %317 = vsyncpa [#allocation5], 1

</llo_original>
